<compile_context>
chip_gen: v7x
topology: tpu7x:2x2x1
jax: 0.10.0
libtpu: 0.0.40
codegen_flags: <defaults>
</compile_context>

<pallas_src>
import math

import jax
import jax.numpy as jnp
from jax.experimental import pallas as pl
from jax.experimental.pallas import tpu as pltpu

FB_LAMBDA = 0.5
MU_F_BETA = 3.0


def _softplus(x):
  # numerically stable softplus built from ops that lower cleanly on TPU
  return jnp.maximum(x, 0.0) + jnp.log1p(jnp.exp(-jnp.abs(x)))


# --------------------------------------------------------------- fused kernel
def vae_kernel(x_ref, l_ref, eps_ref,
               w_ih_f_ref, w_hh_f_ref, b_ih_f_ref, b_hh_f_ref,
               w_ih_b_ref, w_hh_b_ref, b_ih_b_ref, b_hh_b_ref,
               w_head_f_ref, w_head_b_ref, b_head_ref,
               w_ih_d_ref, w_hh_d_ref, b_ih_d_ref, b_hh_d_ref,
               w_out_ref, b_out_ref,
               y_ref, kl_ref, fb_ref, muf_ref):
  S, B, E = x_ref.shape
  H = w_hh_f_ref.shape[0]
  G3 = 3 * H
  V = w_out_ref.shape[1]

  l = l_ref[...]                                   # (B, 1) int32
  x_flat = x_ref[...].reshape(S * B, E)            # (S*B, E)

  # ---- input projections hoisted out of the recurrences (one matmul each)
  def in_proj(w_ih_ref, b_ih_ref):
    gi = jnp.dot(x_flat, w_ih_ref[...], preferred_element_type=jnp.float32)
    return (gi + b_ih_ref[...]).reshape(S, B, G3)  # (S, B, 3H)

  gi_f = in_proj(w_ih_f_ref, b_ih_f_ref)
  gi_b = in_proj(w_ih_b_ref, b_ih_b_ref)
  gi_d = in_proj(w_ih_d_ref, b_ih_d_ref)

  w_hh_f = w_hh_f_ref[...]
  w_hh_b = w_hh_b_ref[...]
  w_hh_d = w_hh_d_ref[...]

  # hoist hidden-bias broadcasts (JAX does not CSE broadcast_in_dim in loops)
  bhh_f = jnp.broadcast_to(b_hh_f_ref[...], (B, G3))
  bhh_b = jnp.broadcast_to(b_hh_b_ref[...], (B, G3))
  bhh_d = jnp.broadcast_to(b_hh_d_ref[...], (B, G3))

  def gru_step(gi_t, h, w_hh, bhh):
    """PyTorch GRU cell, gate order [r, z, n], gates packed along lanes."""
    gh = jnp.dot(h, w_hh, preferred_element_type=jnp.float32) + bhh  # (B, 3H)
    r = jax.nn.sigmoid(gi_t[:, :H] + gh[:, :H])
    zg = jax.nn.sigmoid(gi_t[:, H:2 * H] + gh[:, H:2 * H])
    n = jnp.tanh(gi_t[:, 2 * H:] + r * gh[:, 2 * H:])
    return (1.0 - zg) * n + zg * h

  # ---- encoder: fwd / bwd recurrences fully unrolled and interleaved -------
  h_f = jnp.zeros((B, H), jnp.float32)
  h_b = jnp.zeros((B, H), jnp.float32)
  for i in range(S):                               # S is static -> full unroll
    tb = S - 1 - i
    hf_new = gru_step(gi_f[i], h_f, w_hh_f, bhh_f)
    hb_new = gru_step(gi_b[tb], h_b, w_hh_b, bhh_b)
    h_f = jnp.where(l > i, hf_new, h_f)            # packed seq: freeze at len
    h_b = jnp.where(l > tb, hb_new, h_b)           # packed seq: skip trailing pad

  # ---- mu / sigma heads, packed along lanes as [mu | pre_sigma] -------------
  ms = (jnp.dot(h_f, w_head_f_ref[...], preferred_element_type=jnp.float32)
        + jnp.dot(h_b, w_head_b_ref[...], preferred_element_type=jnp.float32)
        + b_head_ref[...])                         # (B, 2H)
  mu = ms[:, :H]
  sigma = _softplus(ms[:, H:])

  # ---- reparameterised sample + regularisation losses ----------------------
  z = mu + sigma * eps_ref[...]                    # q_z.rsample()

  kl_el = -jnp.log(sigma) + 0.5 * (sigma * sigma + mu * mu - 1.0)   # (B, H)
  kl_per_dim = jnp.sum(kl_el, axis=0, keepdims=True) * (1.0 / B)    # (1, H)
  kl_ref[...] = jnp.sum(kl_per_dim, axis=1, keepdims=True)          # kl_loss
  fb_ref[...] = jnp.sum(jnp.maximum(FB_LAMBDA - kl_per_dim, 0.0),
                        axis=1, keepdims=True)                      # fb_loss
  mu_sq = jnp.sum(jnp.sum(mu * mu, axis=0, keepdims=True),
                  axis=1, keepdims=True)                            # (1, 1)
  muf_ref[...] = jnp.maximum(MU_F_BETA - mu_sq * (1.0 / (2.0 * B)), 0.0)

  # ---- decoder GRU (initial hidden = z); hiddens kept in registers ---------
  h = z
  outs = []
  for t in range(S):
    h_new = gru_step(gi_d[t], h, w_hh_d, bhh_d)
    valid = l > t                                  # (B, 1) bool
    outs.append(jnp.where(valid, h_new, 0.0))      # pad_packed zeros
    h = jnp.where(valid, h_new, h)
  h_dec = jnp.concatenate(outs, axis=0)            # (S*B, H)

  # ---- decoder projection + log_softmax: one bulk matmul, full 128 lanes ---
  logits = (jnp.dot(h_dec, w_out_ref[...], preferred_element_type=jnp.float32)
            + b_out_ref[...])                      # (S*B, V)
  m = jnp.max(logits, axis=-1, keepdims=True)
  s = logits - m
  lse = jnp.log(jnp.sum(jnp.exp(s), axis=-1, keepdims=True))
  y_ref[...] = (s - lse).reshape(S, B, V)          # log_softmax


# ------------------------------------------------------------------- wrapper
def _vmem():
  return pl.BlockSpec(memory_space=pltpu.MemorySpace.VMEM)


@jax.jit
def sentence_vae_forward(params, x, l, eps):
  """Returns decoder log-probs (S, B, V) and (kl_loss, fb_loss, mu_loss)."""
  S, B, _ = x.shape
  V = params["w_out"].shape[1]
  l2d = l.reshape(-1, 1).astype(jnp.int32)
  y, kl, fb, muf = pl.pallas_call(
      vae_kernel,
      out_shape=(jax.ShapeDtypeStruct((S, B, V), jnp.float32),
                 jax.ShapeDtypeStruct((1, 1), jnp.float32),
                 jax.ShapeDtypeStruct((1, 1), jnp.float32),
                 jax.ShapeDtypeStruct((1, 1), jnp.float32)),
      in_specs=[_vmem()] * 20,
      out_specs=(_vmem(), _vmem(), _vmem(), _vmem()),
  )(x, l2d, eps,
    params["w_ih_f"], params["w_hh_f"], params["b_ih_f"], params["b_hh_f"],
    params["w_ih_b"], params["w_hh_b"], params["b_ih_b"], params["b_hh_b"],
    params["w_head_f"], params["w_head_b"], params["b_head"],
    params["w_ih_d"], params["w_hh_d"], params["b_ih_d"], params["b_hh_d"],
    params["w_out"], params["b_out"])
  return y, kl[0, 0], fb[0, 0], muf[0, 0]


# ------------------------------------------------------------ parameter init
def init_params(key, E, H, V):
  k = 1.0 / math.sqrt(H)
  keys = jax.random.split(key, 17)

  def u(kk, shape):
    return jax.random.uniform(kk, shape, jnp.float32, minval=-k, maxval=k)

  return {
      # encoder bidirectional GRU, gates packed along lanes [r | z | n]
      "w_ih_f": u(keys[0], (E, 3 * H)), "w_hh_f": u(keys[1], (H, 3 * H)),
      "b_ih_f": u(keys[2], (1, 3 * H)), "b_hh_f": u(keys[3], (1, 3 * H)),
      "w_ih_b": u(keys[4], (E, 3 * H)), "w_hh_b": u(keys[5], (H, 3 * H)),
      "b_ih_b": u(keys[6], (1, 3 * H)), "b_hh_b": u(keys[7], (1, 3 * H)),
      # mu / sigma heads: Linear(2H, H) x2, packed along lanes [mu | sigma],
      # split into the fwd-half and bwd-half of h_n
      "w_head_f": u(keys[8], (H, 2 * H)),
      "w_head_b": u(keys[9], (H, 2 * H)),
      "b_head": u(keys[10], (1, 2 * H)),
      # decoder RNNLM: GRU (gates packed) + output projection
      "w_ih_d": u(keys[11], (E, 3 * H)), "w_hh_d": u(keys[12], (H, 3 * H)),
      "b_ih_d": u(keys[13], (1, 3 * H)), "b_hh_d": u(keys[14], (1, 3 * H)),
      "w_out": u(keys[15], (H, V)), "b_out": u(keys[16], (1, V)),
  }


if __name__ == "__main__":
  # input_dim E, hidden_dim H, num_classes V
  E, H, V = 16, 32, 128
  S, B = 8, 8

  key = jax.random.PRNGKey(0)
  kp, kx, ke = jax.random.split(key, 3)
  params = init_params(kp, E, H, V)

  x = jax.random.normal(kx, (S, B, E), jnp.float32)          # S x B x E
  l = jnp.array([8, 5, 6, 8, 3, 7, 4, 2], dtype=jnp.int32)   # sentence lengths
  eps = jax.random.normal(ke, (B, H), jnp.float32)            # rsample noise

  y, kl_loss, fb_loss, mu_loss = sentence_vae_forward(params, x, l, eps)
  jax.block_until_ready((y, kl_loss, fb_loss, mu_loss))

  assert y.shape == (S, B, V)
  assert jnp.isfinite(y).all()
  assert jnp.isfinite(kl_loss) and jnp.isfinite(fb_loss) and jnp.isfinite(mu_loss)
  print("KERNEL_OK")
</pallas_src>

<mosaic_0001>
module attributes {stable_mosaic.version = 11 : i64} {
  func.func @vae_kernel(%arg0: memref<8x8x16xf32, #tpu.memory_space<vmem>>, %arg1: memref<8x1xi32, #tpu.memory_space<vmem>>, %arg2: memref<8x32xf32, #tpu.memory_space<vmem>>, %arg3: memref<16x96xf32, #tpu.memory_space<vmem>>, %arg4: memref<32x96xf32, #tpu.memory_space<vmem>>, %arg5: memref<1x96xf32, #tpu.memory_space<vmem>>, %arg6: memref<1x96xf32, #tpu.memory_space<vmem>>, %arg7: memref<16x96xf32, #tpu.memory_space<vmem>>, %arg8: memref<32x96xf32, #tpu.memory_space<vmem>>, %arg9: memref<1x96xf32, #tpu.memory_space<vmem>>, %arg10: memref<1x96xf32, #tpu.memory_space<vmem>>, %arg11: memref<32x64xf32, #tpu.memory_space<vmem>>, %arg12: memref<32x64xf32, #tpu.memory_space<vmem>>, %arg13: memref<1x64xf32, #tpu.memory_space<vmem>>, %arg14: memref<16x96xf32, #tpu.memory_space<vmem>>, %arg15: memref<32x96xf32, #tpu.memory_space<vmem>>, %arg16: memref<1x96xf32, #tpu.memory_space<vmem>>, %arg17: memref<1x96xf32, #tpu.memory_space<vmem>>, %arg18: memref<32x128xf32, #tpu.memory_space<vmem>>, %arg19: memref<1x128xf32, #tpu.memory_space<vmem>>, %arg20: memref<8x8x128xf32, #tpu.memory_space<vmem>>, %arg21: memref<1x1xf32, #tpu.memory_space<vmem>>, %arg22: memref<1x1xf32, #tpu.memory_space<vmem>>, %arg23: memref<1x1xf32, #tpu.memory_space<vmem>>) attributes {dimension_semantics = [], scalar_prefetch = 0 : i64, scratch_operands = 0 : i64, tpu.core_type = #tpu.core_type<tc>} {
    %c0 = arith.constant 0 : index
    %c0_0 = arith.constant 0 : index
    %0 = vector.load %arg1[%c0, %c0_0] : memref<8x1xi32, #tpu.memory_space<vmem>>, vector<8x1xi32>
    %c0_1 = arith.constant 0 : index
    %c0_2 = arith.constant 0 : index
    %c0_3 = arith.constant 0 : index
    %1 = vector.load %arg0[%c0_1, %c0_2, %c0_3] : memref<8x8x16xf32, #tpu.memory_space<vmem>>, vector<8x8x16xf32>
    %2 = vector.shape_cast %1 : vector<8x8x16xf32> to vector<64x16xf32>
    %c0_4 = arith.constant 0 : index
    %c0_5 = arith.constant 0 : index
    %3 = vector.load %arg3[%c0_4, %c0_5] : memref<16x96xf32, #tpu.memory_space<vmem>>, vector<16x96xf32>
    %cst = arith.constant dense<0.000000e+00> : vector<64x96xf32>
    %4 = tpu.matmul %2, %3, %cst {dimension_numbers = #tpu.dot_dimension_numbers<[1], [0], [0], [1], [0, 0, 1, 1], [], []>} : vector<64x16xf32>, vector<16x96xf32>, vector<64x96xf32> -> vector<64x96xf32>
    %c0_6 = arith.constant 0 : index
    %c0_7 = arith.constant 0 : index
    %5 = vector.load %arg5[%c0_6, %c0_7] : memref<1x96xf32, #tpu.memory_space<vmem>>, vector<1x96xf32>
    %6 = vector.broadcast %5 : vector<1x96xf32> to vector<64x96xf32>
    %7 = arith.addf %4, %6 : vector<64x96xf32>
    %8 = vector.shape_cast %7 : vector<64x96xf32> to vector<8x8x96xf32>
    %c0_8 = arith.constant 0 : index
    %c0_9 = arith.constant 0 : index
    %9 = vector.load %arg7[%c0_8, %c0_9] : memref<16x96xf32, #tpu.memory_space<vmem>>, vector<16x96xf32>
    %cst_10 = arith.constant dense<0.000000e+00> : vector<64x96xf32>
    %10 = tpu.matmul %2, %9, %cst_10 {dimension_numbers = #tpu.dot_dimension_numbers<[1], [0], [0], [1], [0, 0, 1, 1], [], []>} : vector<64x16xf32>, vector<16x96xf32>, vector<64x96xf32> -> vector<64x96xf32>
    %c0_11 = arith.constant 0 : index
    %c0_12 = arith.constant 0 : index
    %11 = vector.load %arg9[%c0_11, %c0_12] : memref<1x96xf32, #tpu.memory_space<vmem>>, vector<1x96xf32>
    %12 = vector.broadcast %11 : vector<1x96xf32> to vector<64x96xf32>
    %13 = arith.addf %10, %12 : vector<64x96xf32>
    %14 = vector.shape_cast %13 : vector<64x96xf32> to vector<8x8x96xf32>
    %c0_13 = arith.constant 0 : index
    %c0_14 = arith.constant 0 : index
    %15 = vector.load %arg14[%c0_13, %c0_14] : memref<16x96xf32, #tpu.memory_space<vmem>>, vector<16x96xf32>
    %cst_15 = arith.constant dense<0.000000e+00> : vector<64x96xf32>
    %16 = tpu.matmul %2, %15, %cst_15 {dimension_numbers = #tpu.dot_dimension_numbers<[1], [0], [0], [1], [0, 0, 1, 1], [], []>} : vector<64x16xf32>, vector<16x96xf32>, vector<64x96xf32> -> vector<64x96xf32>
    %c0_16 = arith.constant 0 : index
    %c0_17 = arith.constant 0 : index
    %17 = vector.load %arg16[%c0_16, %c0_17] : memref<1x96xf32, #tpu.memory_space<vmem>>, vector<1x96xf32>
    %18 = vector.broadcast %17 : vector<1x96xf32> to vector<64x96xf32>
    %19 = arith.addf %16, %18 : vector<64x96xf32>
    %20 = vector.shape_cast %19 : vector<64x96xf32> to vector<8x8x96xf32>
    %c0_18 = arith.constant 0 : index
    %c0_19 = arith.constant 0 : index
    %21 = vector.load %arg4[%c0_18, %c0_19] : memref<32x96xf32, #tpu.memory_space<vmem>>, vector<32x96xf32>
    %c0_20 = arith.constant 0 : index
    %c0_21 = arith.constant 0 : index
    %22 = vector.load %arg8[%c0_20, %c0_21] : memref<32x96xf32, #tpu.memory_space<vmem>>, vector<32x96xf32>
    %c0_22 = arith.constant 0 : index
    %c0_23 = arith.constant 0 : index
    %23 = vector.load %arg15[%c0_22, %c0_23] : memref<32x96xf32, #tpu.memory_space<vmem>>, vector<32x96xf32>
    %c0_24 = arith.constant 0 : index
    %c0_25 = arith.constant 0 : index
    %24 = vector.load %arg6[%c0_24, %c0_25] : memref<1x96xf32, #tpu.memory_space<vmem>>, vector<1x96xf32>
    %25 = vector.shape_cast %24 : vector<1x96xf32> to vector<1x96xf32>
    %26 = vector.broadcast %25 : vector<1x96xf32> to vector<8x96xf32>
    %c0_26 = arith.constant 0 : index
    %c0_27 = arith.constant 0 : index
    %27 = vector.load %arg10[%c0_26, %c0_27] : memref<1x96xf32, #tpu.memory_space<vmem>>, vector<1x96xf32>
    %28 = vector.shape_cast %27 : vector<1x96xf32> to vector<1x96xf32>
    %29 = vector.broadcast %28 : vector<1x96xf32> to vector<8x96xf32>
    %c0_28 = arith.constant 0 : index
    %c0_29 = arith.constant 0 : index
    %30 = vector.load %arg17[%c0_28, %c0_29] : memref<1x96xf32, #tpu.memory_space<vmem>>, vector<1x96xf32>
    %31 = vector.shape_cast %30 : vector<1x96xf32> to vector<1x96xf32>
    %32 = vector.broadcast %31 : vector<1x96xf32> to vector<8x96xf32>
    %cst_30 = arith.constant 0.000000e+00 : f32
    %33 = vector.broadcast %cst_30 : f32 to vector<8x32xf32>
    %cst_31 = arith.constant 0.000000e+00 : f32
    %34 = vector.broadcast %cst_31 : f32 to vector<8x32xf32>
    %35 = vector.extract_strided_slice %8 {offsets = [0, 0, 0], sizes = [1, 8, 96], strides = [1, 1, 1]} : vector<8x8x96xf32> to vector<1x8x96xf32>
    %36 = vector.shape_cast %35 : vector<1x8x96xf32> to vector<8x96xf32>
    %cst_32 = arith.constant dense<0.000000e+00> : vector<8x96xf32>
    %37 = tpu.matmul %33, %21, %cst_32 {dimension_numbers = #tpu.dot_dimension_numbers<[1], [0], [0], [1], [0, 0, 1, 1], [], []>} : vector<8x32xf32>, vector<32x96xf32>, vector<8x96xf32> -> vector<8x96xf32>
    %38 = arith.addf %37, %26 : vector<8x96xf32>
    %39 = vector.extract_strided_slice %36 {offsets = [0, 0], sizes = [8, 32], strides = [1, 1]} : vector<8x96xf32> to vector<8x32xf32>
    %40 = vector.extract_strided_slice %38 {offsets = [0, 0], sizes = [8, 32], strides = [1, 1]} : vector<8x96xf32> to vector<8x32xf32>
    %41 = arith.addf %39, %40 : vector<8x32xf32>
    %42 = arith.negf %41 : vector<8x32xf32>
    %43 = math.exp %42 : vector<8x32xf32>
    %cst_33 = arith.constant 1.000000e+00 : f32
    %44 = vector.broadcast %cst_33 : f32 to vector<8x32xf32>
    %45 = arith.addf %44, %43 : vector<8x32xf32>
    %46 = arith.divf %44, %45 : vector<8x32xf32>
    %47 = vector.extract_strided_slice %36 {offsets = [0, 32], sizes = [8, 32], strides = [1, 1]} : vector<8x96xf32> to vector<8x32xf32>
    %48 = vector.extract_strided_slice %38 {offsets = [0, 32], sizes = [8, 32], strides = [1, 1]} : vector<8x96xf32> to vector<8x32xf32>
    %49 = arith.addf %47, %48 : vector<8x32xf32>
    %50 = arith.negf %49 : vector<8x32xf32>
    %51 = math.exp %50 : vector<8x32xf32>
    %cst_34 = arith.constant 1.000000e+00 : f32
    %52 = vector.broadcast %cst_34 : f32 to vector<8x32xf32>
    %53 = arith.addf %52, %51 : vector<8x32xf32>
    %54 = arith.divf %52, %53 : vector<8x32xf32>
    %55 = vector.extract_strided_slice %36 {offsets = [0, 64], sizes = [8, 32], strides = [1, 1]} : vector<8x96xf32> to vector<8x32xf32>
    %56 = vector.extract_strided_slice %38 {offsets = [0, 64], sizes = [8, 32], strides = [1, 1]} : vector<8x96xf32> to vector<8x32xf32>
    %57 = arith.mulf %46, %56 : vector<8x32xf32>
    %58 = arith.addf %55, %57 : vector<8x32xf32>
    %59 = math.tanh %58 : vector<8x32xf32>
    %cst_35 = arith.constant 1.000000e+00 : f32
    %60 = vector.broadcast %cst_35 : f32 to vector<8x32xf32>
    %61 = arith.subf %60, %54 : vector<8x32xf32>
    %62 = arith.mulf %61, %59 : vector<8x32xf32>
    %63 = arith.mulf %54, %33 : vector<8x32xf32>
    %64 = arith.addf %62, %63 : vector<8x32xf32>
    %65 = vector.extract_strided_slice %14 {offsets = [7, 0, 0], sizes = [1, 8, 96], strides = [1, 1, 1]} : vector<8x8x96xf32> to vector<1x8x96xf32>
    %66 = vector.shape_cast %65 : vector<1x8x96xf32> to vector<8x96xf32>
    %cst_36 = arith.constant dense<0.000000e+00> : vector<8x96xf32>
    %67 = tpu.matmul %34, %22, %cst_36 {dimension_numbers = #tpu.dot_dimension_numbers<[1], [0], [0], [1], [0, 0, 1, 1], [], []>} : vector<8x32xf32>, vector<32x96xf32>, vector<8x96xf32> -> vector<8x96xf32>
    %68 = arith.addf %67, %29 : vector<8x96xf32>
    %69 = vector.extract_strided_slice %66 {offsets = [0, 0], sizes = [8, 32], strides = [1, 1]} : vector<8x96xf32> to vector<8x32xf32>
    %70 = vector.extract_strided_slice %68 {offsets = [0, 0], sizes = [8, 32], strides = [1, 1]} : vector<8x96xf32> to vector<8x32xf32>
    %71 = arith.addf %69, %70 : vector<8x32xf32>
    %72 = arith.negf %71 : vector<8x32xf32>
    %73 = math.exp %72 : vector<8x32xf32>
    %cst_37 = arith.constant 1.000000e+00 : f32
    %74 = vector.broadcast %cst_37 : f32 to vector<8x32xf32>
    %75 = arith.addf %74, %73 : vector<8x32xf32>
    %76 = arith.divf %74, %75 : vector<8x32xf32>
    %77 = vector.extract_strided_slice %66 {offsets = [0, 32], sizes = [8, 32], strides = [1, 1]} : vector<8x96xf32> to vector<8x32xf32>
    %78 = vector.extract_strided_slice %68 {offsets = [0, 32], sizes = [8, 32], strides = [1, 1]} : vector<8x96xf32> to vector<8x32xf32>
    %79 = arith.addf %77, %78 : vector<8x32xf32>
    %80 = arith.negf %79 : vector<8x32xf32>
    %81 = math.exp %80 : vector<8x32xf32>
    %cst_38 = arith.constant 1.000000e+00 : f32
    %82 = vector.broadcast %cst_38 : f32 to vector<8x32xf32>
    %83 = arith.addf %82, %81 : vector<8x32xf32>
    %84 = arith.divf %82, %83 : vector<8x32xf32>
    %85 = vector.extract_strided_slice %66 {offsets = [0, 64], sizes = [8, 32], strides = [1, 1]} : vector<8x96xf32> to vector<8x32xf32>
    %86 = vector.extract_strided_slice %68 {offsets = [0, 64], sizes = [8, 32], strides = [1, 1]} : vector<8x96xf32> to vector<8x32xf32>
    %87 = arith.mulf %76, %86 : vector<8x32xf32>
    %88 = arith.addf %85, %87 : vector<8x32xf32>
    %89 = math.tanh %88 : vector<8x32xf32>
    %cst_39 = arith.constant 1.000000e+00 : f32
    %90 = vector.broadcast %cst_39 : f32 to vector<8x32xf32>
    %91 = arith.subf %90, %84 : vector<8x32xf32>
    %92 = arith.mulf %91, %89 : vector<8x32xf32>
    %93 = arith.mulf %84, %34 : vector<8x32xf32>
    %94 = arith.addf %92, %93 : vector<8x32xf32>
    %c0_i32 = arith.constant 0 : i32
    %95 = vector.broadcast %c0_i32 : i32 to vector<8x1xi32>
    %96 = arith.cmpi sgt, %0, %95 : vector<8x1xi32>
    %97 = vector.shape_cast %96 : vector<8x1xi1> to vector<8x1xi1>
    %98 = vector.broadcast %97 : vector<8x1xi1> to vector<8x32xi1>
    %99 = arith.select %98, %64, %33 : vector<8x32xi1>, vector<8x32xf32>
    %c7_i32 = arith.constant 7 : i32
    %100 = vector.broadcast %c7_i32 : i32 to vector<8x1xi32>
    %101 = arith.cmpi sgt, %0, %100 : vector<8x1xi32>
    %102 = vector.shape_cast %101 : vector<8x1xi1> to vector<8x1xi1>
    %103 = vector.broadcast %102 : vector<8x1xi1> to vector<8x32xi1>
    %104 = arith.select %103, %94, %34 : vector<8x32xi1>, vector<8x32xf32>
    %105 = vector.extract_strided_slice %8 {offsets = [1, 0, 0], sizes = [1, 8, 96], strides = [1, 1, 1]} : vector<8x8x96xf32> to vector<1x8x96xf32>
    %106 = vector.shape_cast %105 : vector<1x8x96xf32> to vector<8x96xf32>
    %cst_40 = arith.constant dense<0.000000e+00> : vector<8x96xf32>
    %107 = tpu.matmul %99, %21, %cst_40 {dimension_numbers = #tpu.dot_dimension_numbers<[1], [0], [0], [1], [0, 0, 1, 1], [], []>} : vector<8x32xf32>, vector<32x96xf32>, vector<8x96xf32> -> vector<8x96xf32>
    %108 = arith.addf %107, %26 : vector<8x96xf32>
    %109 = vector.extract_strided_slice %106 {offsets = [0, 0], sizes = [8, 32], strides = [1, 1]} : vector<8x96xf32> to vector<8x32xf32>
    %110 = vector.extract_strided_slice %108 {offsets = [0, 0], sizes = [8, 32], strides = [1, 1]} : vector<8x96xf32> to vector<8x32xf32>
    %111 = arith.addf %109, %110 : vector<8x32xf32>
    %112 = arith.negf %111 : vector<8x32xf32>
    %113 = math.exp %112 : vector<8x32xf32>
    %cst_41 = arith.constant 1.000000e+00 : f32
    %114 = vector.broadcast %cst_41 : f32 to vector<8x32xf32>
    %115 = arith.addf %114, %113 : vector<8x32xf32>
    %116 = arith.divf %114, %115 : vector<8x32xf32>
    %117 = vector.extract_strided_slice %106 {offsets = [0, 32], sizes = [8, 32], strides = [1, 1]} : vector<8x96xf32> to vector<8x32xf32>
    %118 = vector.extract_strided_slice %108 {offsets = [0, 32], sizes = [8, 32], strides = [1, 1]} : vector<8x96xf32> to vector<8x32xf32>
    %119 = arith.addf %117, %118 : vector<8x32xf32>
    %120 = arith.negf %119 : vector<8x32xf32>
    %121 = math.exp %120 : vector<8x32xf32>
    %cst_42 = arith.constant 1.000000e+00 : f32
    %122 = vector.broadcast %cst_42 : f32 to vector<8x32xf32>
    %123 = arith.addf %122, %121 : vector<8x32xf32>
    %124 = arith.divf %122, %123 : vector<8x32xf32>
    %125 = vector.extract_strided_slice %106 {offsets = [0, 64], sizes = [8, 32], strides = [1, 1]} : vector<8x96xf32> to vector<8x32xf32>
    %126 = vector.extract_strided_slice %108 {offsets = [0, 64], sizes = [8, 32], strides = [1, 1]} : vector<8x96xf32> to vector<8x32xf32>
    %127 = arith.mulf %116, %126 : vector<8x32xf32>
    %128 = arith.addf %125, %127 : vector<8x32xf32>
    %129 = math.tanh %128 : vector<8x32xf32>
    %cst_43 = arith.constant 1.000000e+00 : f32
    %130 = vector.broadcast %cst_43 : f32 to vector<8x32xf32>
    %131 = arith.subf %130, %124 : vector<8x32xf32>
    %132 = arith.mulf %131, %129 : vector<8x32xf32>
    %133 = arith.mulf %124, %99 : vector<8x32xf32>
    %134 = arith.addf %132, %133 : vector<8x32xf32>
    %135 = vector.extract_strided_slice %14 {offsets = [6, 0, 0], sizes = [1, 8, 96], strides = [1, 1, 1]} : vector<8x8x96xf32> to vector<1x8x96xf32>
    %136 = vector.shape_cast %135 : vector<1x8x96xf32> to vector<8x96xf32>
    %cst_44 = arith.constant dense<0.000000e+00> : vector<8x96xf32>
    %137 = tpu.matmul %104, %22, %cst_44 {dimension_numbers = #tpu.dot_dimension_numbers<[1], [0], [0], [1], [0, 0, 1, 1], [], []>} : vector<8x32xf32>, vector<32x96xf32>, vector<8x96xf32> -> vector<8x96xf32>
    %138 = arith.addf %137, %29 : vector<8x96xf32>
    %139 = vector.extract_strided_slice %136 {offsets = [0, 0], sizes = [8, 32], strides = [1, 1]} : vector<8x96xf32> to vector<8x32xf32>
    %140 = vector.extract_strided_slice %138 {offsets = [0, 0], sizes = [8, 32], strides = [1, 1]} : vector<8x96xf32> to vector<8x32xf32>
    %141 = arith.addf %139, %140 : vector<8x32xf32>
    %142 = arith.negf %141 : vector<8x32xf32>
    %143 = math.exp %142 : vector<8x32xf32>
    %cst_45 = arith.constant 1.000000e+00 : f32
    %144 = vector.broadcast %cst_45 : f32 to vector<8x32xf32>
    %145 = arith.addf %144, %143 : vector<8x32xf32>
    %146 = arith.divf %144, %145 : vector<8x32xf32>
    %147 = vector.extract_strided_slice %136 {offsets = [0, 32], sizes = [8, 32], strides = [1, 1]} : vector<8x96xf32> to vector<8x32xf32>
    %148 = vector.extract_strided_slice %138 {offsets = [0, 32], sizes = [8, 32], strides = [1, 1]} : vector<8x96xf32> to vector<8x32xf32>
    %149 = arith.addf %147, %148 : vector<8x32xf32>
    %150 = arith.negf %149 : vector<8x32xf32>
    %151 = math.exp %150 : vector<8x32xf32>
    %cst_46 = arith.constant 1.000000e+00 : f32
    %152 = vector.broadcast %cst_46 : f32 to vector<8x32xf32>
    %153 = arith.addf %152, %151 : vector<8x32xf32>
    %154 = arith.divf %152, %153 : vector<8x32xf32>
    %155 = vector.extract_strided_slice %136 {offsets = [0, 64], sizes = [8, 32], strides = [1, 1]} : vector<8x96xf32> to vector<8x32xf32>
    %156 = vector.extract_strided_slice %138 {offsets = [0, 64], sizes = [8, 32], strides = [1, 1]} : vector<8x96xf32> to vector<8x32xf32>
    %157 = arith.mulf %146, %156 : vector<8x32xf32>
    %158 = arith.addf %155, %157 : vector<8x32xf32>
    %159 = math.tanh %158 : vector<8x32xf32>
    %cst_47 = arith.constant 1.000000e+00 : f32
    %160 = vector.broadcast %cst_47 : f32 to vector<8x32xf32>
    %161 = arith.subf %160, %154 : vector<8x32xf32>
    %162 = arith.mulf %161, %159 : vector<8x32xf32>
    %163 = arith.mulf %154, %104 : vector<8x32xf32>
    %164 = arith.addf %162, %163 : vector<8x32xf32>
    %c1_i32 = arith.constant 1 : i32
    %165 = vector.broadcast %c1_i32 : i32 to vector<8x1xi32>
    %166 = arith.cmpi sgt, %0, %165 : vector<8x1xi32>
    %167 = vector.shape_cast %166 : vector<8x1xi1> to vector<8x1xi1>
    %168 = vector.broadcast %167 : vector<8x1xi1> to vector<8x32xi1>
    %169 = arith.select %168, %134, %99 : vector<8x32xi1>, vector<8x32xf32>
    %c6_i32 = arith.constant 6 : i32
    %170 = vector.broadcast %c6_i32 : i32 to vector<8x1xi32>
    %171 = arith.cmpi sgt, %0, %170 : vector<8x1xi32>
    %172 = vector.shape_cast %171 : vector<8x1xi1> to vector<8x1xi1>
    %173 = vector.broadcast %172 : vector<8x1xi1> to vector<8x32xi1>
    %174 = arith.select %173, %164, %104 : vector<8x32xi1>, vector<8x32xf32>
    %175 = vector.extract_strided_slice %8 {offsets = [2, 0, 0], sizes = [1, 8, 96], strides = [1, 1, 1]} : vector<8x8x96xf32> to vector<1x8x96xf32>
    %176 = vector.shape_cast %175 : vector<1x8x96xf32> to vector<8x96xf32>
    %cst_48 = arith.constant dense<0.000000e+00> : vector<8x96xf32>
    %177 = tpu.matmul %169, %21, %cst_48 {dimension_numbers = #tpu.dot_dimension_numbers<[1], [0], [0], [1], [0, 0, 1, 1], [], []>} : vector<8x32xf32>, vector<32x96xf32>, vector<8x96xf32> -> vector<8x96xf32>
    %178 = arith.addf %177, %26 : vector<8x96xf32>
    %179 = vector.extract_strided_slice %176 {offsets = [0, 0], sizes = [8, 32], strides = [1, 1]} : vector<8x96xf32> to vector<8x32xf32>
    %180 = vector.extract_strided_slice %178 {offsets = [0, 0], sizes = [8, 32], strides = [1, 1]} : vector<8x96xf32> to vector<8x32xf32>
    %181 = arith.addf %179, %180 : vector<8x32xf32>
    %182 = arith.negf %181 : vector<8x32xf32>
    %183 = math.exp %182 : vector<8x32xf32>
    %cst_49 = arith.constant 1.000000e+00 : f32
    %184 = vector.broadcast %cst_49 : f32 to vector<8x32xf32>
    %185 = arith.addf %184, %183 : vector<8x32xf32>
    %186 = arith.divf %184, %185 : vector<8x32xf32>
    %187 = vector.extract_strided_slice %176 {offsets = [0, 32], sizes = [8, 32], strides = [1, 1]} : vector<8x96xf32> to vector<8x32xf32>
    %188 = vector.extract_strided_slice %178 {offsets = [0, 32], sizes = [8, 32], strides = [1, 1]} : vector<8x96xf32> to vector<8x32xf32>
    %189 = arith.addf %187, %188 : vector<8x32xf32>
    %190 = arith.negf %189 : vector<8x32xf32>
    %191 = math.exp %190 : vector<8x32xf32>
    %cst_50 = arith.constant 1.000000e+00 : f32
    %192 = vector.broadcast %cst_50 : f32 to vector<8x32xf32>
    %193 = arith.addf %192, %191 : vector<8x32xf32>
    %194 = arith.divf %192, %193 : vector<8x32xf32>
    %195 = vector.extract_strided_slice %176 {offsets = [0, 64], sizes = [8, 32], strides = [1, 1]} : vector<8x96xf32> to vector<8x32xf32>
    %196 = vector.extract_strided_slice %178 {offsets = [0, 64], sizes = [8, 32], strides = [1, 1]} : vector<8x96xf32> to vector<8x32xf32>
    %197 = arith.mulf %186, %196 : vector<8x32xf32>
    %198 = arith.addf %195, %197 : vector<8x32xf32>
    %199 = math.tanh %198 : vector<8x32xf32>
    %cst_51 = arith.constant 1.000000e+00 : f32
    %200 = vector.broadcast %cst_51 : f32 to vector<8x32xf32>
    %201 = arith.subf %200, %194 : vector<8x32xf32>
    %202 = arith.mulf %201, %199 : vector<8x32xf32>
    %203 = arith.mulf %194, %169 : vector<8x32xf32>
    %204 = arith.addf %202, %203 : vector<8x32xf32>
    %205 = vector.extract_strided_slice %14 {offsets = [5, 0, 0], sizes = [1, 8, 96], strides = [1, 1, 1]} : vector<8x8x96xf32> to vector<1x8x96xf32>
    %206 = vector.shape_cast %205 : vector<1x8x96xf32> to vector<8x96xf32>
    %cst_52 = arith.constant dense<0.000000e+00> : vector<8x96xf32>
    %207 = tpu.matmul %174, %22, %cst_52 {dimension_numbers = #tpu.dot_dimension_numbers<[1], [0], [0], [1], [0, 0, 1, 1], [], []>} : vector<8x32xf32>, vector<32x96xf32>, vector<8x96xf32> -> vector<8x96xf32>
    %208 = arith.addf %207, %29 : vector<8x96xf32>
    %209 = vector.extract_strided_slice %206 {offsets = [0, 0], sizes = [8, 32], strides = [1, 1]} : vector<8x96xf32> to vector<8x32xf32>
    %210 = vector.extract_strided_slice %208 {offsets = [0, 0], sizes = [8, 32], strides = [1, 1]} : vector<8x96xf32> to vector<8x32xf32>
    %211 = arith.addf %209, %210 : vector<8x32xf32>
    %212 = arith.negf %211 : vector<8x32xf32>
    %213 = math.exp %212 : vector<8x32xf32>
    %cst_53 = arith.constant 1.000000e+00 : f32
    %214 = vector.broadcast %cst_53 : f32 to vector<8x32xf32>
    %215 = arith.addf %214, %213 : vector<8x32xf32>
    %216 = arith.divf %214, %215 : vector<8x32xf32>
    %217 = vector.extract_strided_slice %206 {offsets = [0, 32], sizes = [8, 32], strides = [1, 1]} : vector<8x96xf32> to vector<8x32xf32>
    %218 = vector.extract_strided_slice %208 {offsets = [0, 32], sizes = [8, 32], strides = [1, 1]} : vector<8x96xf32> to vector<8x32xf32>
    %219 = arith.addf %217, %218 : vector<8x32xf32>
    %220 = arith.negf %219 : vector<8x32xf32>
    %221 = math.exp %220 : vector<8x32xf32>
    %cst_54 = arith.constant 1.000000e+00 : f32
    %222 = vector.broadcast %cst_54 : f32 to vector<8x32xf32>
    %223 = arith.addf %222, %221 : vector<8x32xf32>
    %224 = arith.divf %222, %223 : vector<8x32xf32>
    %225 = vector.extract_strided_slice %206 {offsets = [0, 64], sizes = [8, 32], strides = [1, 1]} : vector<8x96xf32> to vector<8x32xf32>
    %226 = vector.extract_strided_slice %208 {offsets = [0, 64], sizes = [8, 32], strides = [1, 1]} : vector<8x96xf32> to vector<8x32xf32>
    %227 = arith.mulf %216, %226 : vector<8x32xf32>
    %228 = arith.addf %225, %227 : vector<8x32xf32>
    %229 = math.tanh %228 : vector<8x32xf32>
    %cst_55 = arith.constant 1.000000e+00 : f32
    %230 = vector.broadcast %cst_55 : f32 to vector<8x32xf32>
    %231 = arith.subf %230, %224 : vector<8x32xf32>
    %232 = arith.mulf %231, %229 : vector<8x32xf32>
    %233 = arith.mulf %224, %174 : vector<8x32xf32>
    %234 = arith.addf %232, %233 : vector<8x32xf32>
    %c2_i32 = arith.constant 2 : i32
    %235 = vector.broadcast %c2_i32 : i32 to vector<8x1xi32>
    %236 = arith.cmpi sgt, %0, %235 : vector<8x1xi32>
    %237 = vector.shape_cast %236 : vector<8x1xi1> to vector<8x1xi1>
    %238 = vector.broadcast %237 : vector<8x1xi1> to vector<8x32xi1>
    %239 = arith.select %238, %204, %169 : vector<8x32xi1>, vector<8x32xf32>
    %c5_i32 = arith.constant 5 : i32
    %240 = vector.broadcast %c5_i32 : i32 to vector<8x1xi32>
    %241 = arith.cmpi sgt, %0, %240 : vector<8x1xi32>
    %242 = vector.shape_cast %241 : vector<8x1xi1> to vector<8x1xi1>
    %243 = vector.broadcast %242 : vector<8x1xi1> to vector<8x32xi1>
    %244 = arith.select %243, %234, %174 : vector<8x32xi1>, vector<8x32xf32>
    %245 = vector.extract_strided_slice %8 {offsets = [3, 0, 0], sizes = [1, 8, 96], strides = [1, 1, 1]} : vector<8x8x96xf32> to vector<1x8x96xf32>
    %246 = vector.shape_cast %245 : vector<1x8x96xf32> to vector<8x96xf32>
    %cst_56 = arith.constant dense<0.000000e+00> : vector<8x96xf32>
    %247 = tpu.matmul %239, %21, %cst_56 {dimension_numbers = #tpu.dot_dimension_numbers<[1], [0], [0], [1], [0, 0, 1, 1], [], []>} : vector<8x32xf32>, vector<32x96xf32>, vector<8x96xf32> -> vector<8x96xf32>
    %248 = arith.addf %247, %26 : vector<8x96xf32>
    %249 = vector.extract_strided_slice %246 {offsets = [0, 0], sizes = [8, 32], strides = [1, 1]} : vector<8x96xf32> to vector<8x32xf32>
    %250 = vector.extract_strided_slice %248 {offsets = [0, 0], sizes = [8, 32], strides = [1, 1]} : vector<8x96xf32> to vector<8x32xf32>
    %251 = arith.addf %249, %250 : vector<8x32xf32>
    %252 = arith.negf %251 : vector<8x32xf32>
    %253 = math.exp %252 : vector<8x32xf32>
    %cst_57 = arith.constant 1.000000e+00 : f32
    %254 = vector.broadcast %cst_57 : f32 to vector<8x32xf32>
    %255 = arith.addf %254, %253 : vector<8x32xf32>
    %256 = arith.divf %254, %255 : vector<8x32xf32>
    %257 = vector.extract_strided_slice %246 {offsets = [0, 32], sizes = [8, 32], strides = [1, 1]} : vector<8x96xf32> to vector<8x32xf32>
    %258 = vector.extract_strided_slice %248 {offsets = [0, 32], sizes = [8, 32], strides = [1, 1]} : vector<8x96xf32> to vector<8x32xf32>
    %259 = arith.addf %257, %258 : vector<8x32xf32>
    %260 = arith.negf %259 : vector<8x32xf32>
    %261 = math.exp %260 : vector<8x32xf32>
    %cst_58 = arith.constant 1.000000e+00 : f32
    %262 = vector.broadcast %cst_58 : f32 to vector<8x32xf32>
    %263 = arith.addf %262, %261 : vector<8x32xf32>
    %264 = arith.divf %262, %263 : vector<8x32xf32>
    %265 = vector.extract_strided_slice %246 {offsets = [0, 64], sizes = [8, 32], strides = [1, 1]} : vector<8x96xf32> to vector<8x32xf32>
    %266 = vector.extract_strided_slice %248 {offsets = [0, 64], sizes = [8, 32], strides = [1, 1]} : vector<8x96xf32> to vector<8x32xf32>
    %267 = arith.mulf %256, %266 : vector<8x32xf32>
    %268 = arith.addf %265, %267 : vector<8x32xf32>
    %269 = math.tanh %268 : vector<8x32xf32>
    %cst_59 = arith.constant 1.000000e+00 : f32
    %270 = vector.broadcast %cst_59 : f32 to vector<8x32xf32>
    %271 = arith.subf %270, %264 : vector<8x32xf32>
    %272 = arith.mulf %271, %269 : vector<8x32xf32>
    %273 = arith.mulf %264, %239 : vector<8x32xf32>
    %274 = arith.addf %272, %273 : vector<8x32xf32>
    %275 = vector.extract_strided_slice %14 {offsets = [4, 0, 0], sizes = [1, 8, 96], strides = [1, 1, 1]} : vector<8x8x96xf32> to vector<1x8x96xf32>
    %276 = vector.shape_cast %275 : vector<1x8x96xf32> to vector<8x96xf32>
    %cst_60 = arith.constant dense<0.000000e+00> : vector<8x96xf32>
    %277 = tpu.matmul %244, %22, %cst_60 {dimension_numbers = #tpu.dot_dimension_numbers<[1], [0], [0], [1], [0, 0, 1, 1], [], []>} : vector<8x32xf32>, vector<32x96xf32>, vector<8x96xf32> -> vector<8x96xf32>
    %278 = arith.addf %277, %29 : vector<8x96xf32>
    %279 = vector.extract_strided_slice %276 {offsets = [0, 0], sizes = [8, 32], strides = [1, 1]} : vector<8x96xf32> to vector<8x32xf32>
    %280 = vector.extract_strided_slice %278 {offsets = [0, 0], sizes = [8, 32], strides = [1, 1]} : vector<8x96xf32> to vector<8x32xf32>
    %281 = arith.addf %279, %280 : vector<8x32xf32>
    %282 = arith.negf %281 : vector<8x32xf32>
    %283 = math.exp %282 : vector<8x32xf32>
    %cst_61 = arith.constant 1.000000e+00 : f32
    %284 = vector.broadcast %cst_61 : f32 to vector<8x32xf32>
    %285 = arith.addf %284, %283 : vector<8x32xf32>
    %286 = arith.divf %284, %285 : vector<8x32xf32>
    %287 = vector.extract_strided_slice %276 {offsets = [0, 32], sizes = [8, 32], strides = [1, 1]} : vector<8x96xf32> to vector<8x32xf32>
    %288 = vector.extract_strided_slice %278 {offsets = [0, 32], sizes = [8, 32], strides = [1, 1]} : vector<8x96xf32> to vector<8x32xf32>
    %289 = arith.addf %287, %288 : vector<8x32xf32>
    %290 = arith.negf %289 : vector<8x32xf32>
    %291 = math.exp %290 : vector<8x32xf32>
    %cst_62 = arith.constant 1.000000e+00 : f32
    %292 = vector.broadcast %cst_62 : f32 to vector<8x32xf32>
    %293 = arith.addf %292, %291 : vector<8x32xf32>
    %294 = arith.divf %292, %293 : vector<8x32xf32>
    %295 = vector.extract_strided_slice %276 {offsets = [0, 64], sizes = [8, 32], strides = [1, 1]} : vector<8x96xf32> to vector<8x32xf32>
    %296 = vector.extract_strided_slice %278 {offsets = [0, 64], sizes = [8, 32], strides = [1, 1]} : vector<8x96xf32> to vector<8x32xf32>
    %297 = arith.mulf %286, %296 : vector<8x32xf32>
    %298 = arith.addf %295, %297 : vector<8x32xf32>
    %299 = math.tanh %298 : vector<8x32xf32>
    %cst_63 = arith.constant 1.000000e+00 : f32
    %300 = vector.broadcast %cst_63 : f32 to vector<8x32xf32>
    %301 = arith.subf %300, %294 : vector<8x32xf32>
    %302 = arith.mulf %301, %299 : vector<8x32xf32>
    %303 = arith.mulf %294, %244 : vector<8x32xf32>
    %304 = arith.addf %302, %303 : vector<8x32xf32>
    %c3_i32 = arith.constant 3 : i32
    %305 = vector.broadcast %c3_i32 : i32 to vector<8x1xi32>
    %306 = arith.cmpi sgt, %0, %305 : vector<8x1xi32>
    %307 = vector.shape_cast %306 : vector<8x1xi1> to vector<8x1xi1>
    %308 = vector.broadcast %307 : vector<8x1xi1> to vector<8x32xi1>
    %309 = arith.select %308, %274, %239 : vector<8x32xi1>, vector<8x32xf32>
    %c4_i32 = arith.constant 4 : i32
    %310 = vector.broadcast %c4_i32 : i32 to vector<8x1xi32>
    %311 = arith.cmpi sgt, %0, %310 : vector<8x1xi32>
    %312 = vector.shape_cast %311 : vector<8x1xi1> to vector<8x1xi1>
    %313 = vector.broadcast %312 : vector<8x1xi1> to vector<8x32xi1>
    %314 = arith.select %313, %304, %244 : vector<8x32xi1>, vector<8x32xf32>
    %315 = vector.extract_strided_slice %8 {offsets = [4, 0, 0], sizes = [1, 8, 96], strides = [1, 1, 1]} : vector<8x8x96xf32> to vector<1x8x96xf32>
    %316 = vector.shape_cast %315 : vector<1x8x96xf32> to vector<8x96xf32>
    %cst_64 = arith.constant dense<0.000000e+00> : vector<8x96xf32>
    %317 = tpu.matmul %309, %21, %cst_64 {dimension_numbers = #tpu.dot_dimension_numbers<[1], [0], [0], [1], [0, 0, 1, 1], [], []>} : vector<8x32xf32>, vector<32x96xf32>, vector<8x96xf32> -> vector<8x96xf32>
    %318 = arith.addf %317, %26 : vector<8x96xf32>
    %319 = vector.extract_strided_slice %316 {offsets = [0, 0], sizes = [8, 32], strides = [1, 1]} : vector<8x96xf32> to vector<8x32xf32>
    %320 = vector.extract_strided_slice %318 {offsets = [0, 0], sizes = [8, 32], strides = [1, 1]} : vector<8x96xf32> to vector<8x32xf32>
    %321 = arith.addf %319, %320 : vector<8x32xf32>
    %322 = arith.negf %321 : vector<8x32xf32>
    %323 = math.exp %322 : vector<8x32xf32>
    %cst_65 = arith.constant 1.000000e+00 : f32
    %324 = vector.broadcast %cst_65 : f32 to vector<8x32xf32>
    %325 = arith.addf %324, %323 : vector<8x32xf32>
    %326 = arith.divf %324, %325 : vector<8x32xf32>
    %327 = vector.extract_strided_slice %316 {offsets = [0, 32], sizes = [8, 32], strides = [1, 1]} : vector<8x96xf32> to vector<8x32xf32>
    %328 = vector.extract_strided_slice %318 {offsets = [0, 32], sizes = [8, 32], strides = [1, 1]} : vector<8x96xf32> to vector<8x32xf32>
    %329 = arith.addf %327, %328 : vector<8x32xf32>
    %330 = arith.negf %329 : vector<8x32xf32>
    %331 = math.exp %330 : vector<8x32xf32>
    %cst_66 = arith.constant 1.000000e+00 : f32
    %332 = vector.broadcast %cst_66 : f32 to vector<8x32xf32>
    %333 = arith.addf %332, %331 : vector<8x32xf32>
    %334 = arith.divf %332, %333 : vector<8x32xf32>
    %335 = vector.extract_strided_slice %316 {offsets = [0, 64], sizes = [8, 32], strides = [1, 1]} : vector<8x96xf32> to vector<8x32xf32>
    %336 = vector.extract_strided_slice %318 {offsets = [0, 64], sizes = [8, 32], strides = [1, 1]} : vector<8x96xf32> to vector<8x32xf32>
    %337 = arith.mulf %326, %336 : vector<8x32xf32>
    %338 = arith.addf %335, %337 : vector<8x32xf32>
    %339 = math.tanh %338 : vector<8x32xf32>
    %cst_67 = arith.constant 1.000000e+00 : f32
    %340 = vector.broadcast %cst_67 : f32 to vector<8x32xf32>
    %341 = arith.subf %340, %334 : vector<8x32xf32>
    %342 = arith.mulf %341, %339 : vector<8x32xf32>
    %343 = arith.mulf %334, %309 : vector<8x32xf32>
    %344 = arith.addf %342, %343 : vector<8x32xf32>
    %345 = vector.extract_strided_slice %14 {offsets = [3, 0, 0], sizes = [1, 8, 96], strides = [1, 1, 1]} : vector<8x8x96xf32> to vector<1x8x96xf32>
    %346 = vector.shape_cast %345 : vector<1x8x96xf32> to vector<8x96xf32>
    %cst_68 = arith.constant dense<0.000000e+00> : vector<8x96xf32>
    %347 = tpu.matmul %314, %22, %cst_68 {dimension_numbers = #tpu.dot_dimension_numbers<[1], [0], [0], [1], [0, 0, 1, 1], [], []>} : vector<8x32xf32>, vector<32x96xf32>, vector<8x96xf32> -> vector<8x96xf32>
    %348 = arith.addf %347, %29 : vector<8x96xf32>
    %349 = vector.extract_strided_slice %346 {offsets = [0, 0], sizes = [8, 32], strides = [1, 1]} : vector<8x96xf32> to vector<8x32xf32>
    %350 = vector.extract_strided_slice %348 {offsets = [0, 0], sizes = [8, 32], strides = [1, 1]} : vector<8x96xf32> to vector<8x32xf32>
    %351 = arith.addf %349, %350 : vector<8x32xf32>
    %352 = arith.negf %351 : vector<8x32xf32>
    %353 = math.exp %352 : vector<8x32xf32>
    %cst_69 = arith.constant 1.000000e+00 : f32
    %354 = vector.broadcast %cst_69 : f32 to vector<8x32xf32>
    %355 = arith.addf %354, %353 : vector<8x32xf32>
    %356 = arith.divf %354, %355 : vector<8x32xf32>
    %357 = vector.extract_strided_slice %346 {offsets = [0, 32], sizes = [8, 32], strides = [1, 1]} : vector<8x96xf32> to vector<8x32xf32>
    %358 = vector.extract_strided_slice %348 {offsets = [0, 32], sizes = [8, 32], strides = [1, 1]} : vector<8x96xf32> to vector<8x32xf32>
    %359 = arith.addf %357, %358 : vector<8x32xf32>
    %360 = arith.negf %359 : vector<8x32xf32>
    %361 = math.exp %360 : vector<8x32xf32>
    %cst_70 = arith.constant 1.000000e+00 : f32
    %362 = vector.broadcast %cst_70 : f32 to vector<8x32xf32>
    %363 = arith.addf %362, %361 : vector<8x32xf32>
    %364 = arith.divf %362, %363 : vector<8x32xf32>
    %365 = vector.extract_strided_slice %346 {offsets = [0, 64], sizes = [8, 32], strides = [1, 1]} : vector<8x96xf32> to vector<8x32xf32>
    %366 = vector.extract_strided_slice %348 {offsets = [0, 64], sizes = [8, 32], strides = [1, 1]} : vector<8x96xf32> to vector<8x32xf32>
    %367 = arith.mulf %356, %366 : vector<8x32xf32>
    %368 = arith.addf %365, %367 : vector<8x32xf32>
    %369 = math.tanh %368 : vector<8x32xf32>
    %cst_71 = arith.constant 1.000000e+00 : f32
    %370 = vector.broadcast %cst_71 : f32 to vector<8x32xf32>
    %371 = arith.subf %370, %364 : vector<8x32xf32>
    %372 = arith.mulf %371, %369 : vector<8x32xf32>
    %373 = arith.mulf %364, %314 : vector<8x32xf32>
    %374 = arith.addf %372, %373 : vector<8x32xf32>
    %c4_i32_72 = arith.constant 4 : i32
    %375 = vector.broadcast %c4_i32_72 : i32 to vector<8x1xi32>
    %376 = arith.cmpi sgt, %0, %375 : vector<8x1xi32>
    %377 = vector.shape_cast %376 : vector<8x1xi1> to vector<8x1xi1>
    %378 = vector.broadcast %377 : vector<8x1xi1> to vector<8x32xi1>
    %379 = arith.select %378, %344, %309 : vector<8x32xi1>, vector<8x32xf32>
    %c3_i32_73 = arith.constant 3 : i32
    %380 = vector.broadcast %c3_i32_73 : i32 to vector<8x1xi32>
    %381 = arith.cmpi sgt, %0, %380 : vector<8x1xi32>
    %382 = vector.shape_cast %381 : vector<8x1xi1> to vector<8x1xi1>
    %383 = vector.broadcast %382 : vector<8x1xi1> to vector<8x32xi1>
    %384 = arith.select %383, %374, %314 : vector<8x32xi1>, vector<8x32xf32>
    %385 = vector.extract_strided_slice %8 {offsets = [5, 0, 0], sizes = [1, 8, 96], strides = [1, 1, 1]} : vector<8x8x96xf32> to vector<1x8x96xf32>
    %386 = vector.shape_cast %385 : vector<1x8x96xf32> to vector<8x96xf32>
    %cst_74 = arith.constant dense<0.000000e+00> : vector<8x96xf32>
    %387 = tpu.matmul %379, %21, %cst_74 {dimension_numbers = #tpu.dot_dimension_numbers<[1], [0], [0], [1], [0, 0, 1, 1], [], []>} : vector<8x32xf32>, vector<32x96xf32>, vector<8x96xf32> -> vector<8x96xf32>
    %388 = arith.addf %387, %26 : vector<8x96xf32>
    %389 = vector.extract_strided_slice %386 {offsets = [0, 0], sizes = [8, 32], strides = [1, 1]} : vector<8x96xf32> to vector<8x32xf32>
    %390 = vector.extract_strided_slice %388 {offsets = [0, 0], sizes = [8, 32], strides = [1, 1]} : vector<8x96xf32> to vector<8x32xf32>
    %391 = arith.addf %389, %390 : vector<8x32xf32>
    %392 = arith.negf %391 : vector<8x32xf32>
    %393 = math.exp %392 : vector<8x32xf32>
    %cst_75 = arith.constant 1.000000e+00 : f32
    %394 = vector.broadcast %cst_75 : f32 to vector<8x32xf32>
    %395 = arith.addf %394, %393 : vector<8x32xf32>
    %396 = arith.divf %394, %395 : vector<8x32xf32>
    %397 = vector.extract_strided_slice %386 {offsets = [0, 32], sizes = [8, 32], strides = [1, 1]} : vector<8x96xf32> to vector<8x32xf32>
    %398 = vector.extract_strided_slice %388 {offsets = [0, 32], sizes = [8, 32], strides = [1, 1]} : vector<8x96xf32> to vector<8x32xf32>
    %399 = arith.addf %397, %398 : vector<8x32xf32>
    %400 = arith.negf %399 : vector<8x32xf32>
    %401 = math.exp %400 : vector<8x32xf32>
    %cst_76 = arith.constant 1.000000e+00 : f32
    %402 = vector.broadcast %cst_76 : f32 to vector<8x32xf32>
    %403 = arith.addf %402, %401 : vector<8x32xf32>
    %404 = arith.divf %402, %403 : vector<8x32xf32>
    %405 = vector.extract_strided_slice %386 {offsets = [0, 64], sizes = [8, 32], strides = [1, 1]} : vector<8x96xf32> to vector<8x32xf32>
    %406 = vector.extract_strided_slice %388 {offsets = [0, 64], sizes = [8, 32], strides = [1, 1]} : vector<8x96xf32> to vector<8x32xf32>
    %407 = arith.mulf %396, %406 : vector<8x32xf32>
    %408 = arith.addf %405, %407 : vector<8x32xf32>
    %409 = math.tanh %408 : vector<8x32xf32>
    %cst_77 = arith.constant 1.000000e+00 : f32
    %410 = vector.broadcast %cst_77 : f32 to vector<8x32xf32>
    %411 = arith.subf %410, %404 : vector<8x32xf32>
    %412 = arith.mulf %411, %409 : vector<8x32xf32>
    %413 = arith.mulf %404, %379 : vector<8x32xf32>
    %414 = arith.addf %412, %413 : vector<8x32xf32>
    %415 = vector.extract_strided_slice %14 {offsets = [2, 0, 0], sizes = [1, 8, 96], strides = [1, 1, 1]} : vector<8x8x96xf32> to vector<1x8x96xf32>
    %416 = vector.shape_cast %415 : vector<1x8x96xf32> to vector<8x96xf32>
    %cst_78 = arith.constant dense<0.000000e+00> : vector<8x96xf32>
    %417 = tpu.matmul %384, %22, %cst_78 {dimension_numbers = #tpu.dot_dimension_numbers<[1], [0], [0], [1], [0, 0, 1, 1], [], []>} : vector<8x32xf32>, vector<32x96xf32>, vector<8x96xf32> -> vector<8x96xf32>
    %418 = arith.addf %417, %29 : vector<8x96xf32>
    %419 = vector.extract_strided_slice %416 {offsets = [0, 0], sizes = [8, 32], strides = [1, 1]} : vector<8x96xf32> to vector<8x32xf32>
    %420 = vector.extract_strided_slice %418 {offsets = [0, 0], sizes = [8, 32], strides = [1, 1]} : vector<8x96xf32> to vector<8x32xf32>
    %421 = arith.addf %419, %420 : vector<8x32xf32>
    %422 = arith.negf %421 : vector<8x32xf32>
    %423 = math.exp %422 : vector<8x32xf32>
    %cst_79 = arith.constant 1.000000e+00 : f32
    %424 = vector.broadcast %cst_79 : f32 to vector<8x32xf32>
    %425 = arith.addf %424, %423 : vector<8x32xf32>
    %426 = arith.divf %424, %425 : vector<8x32xf32>
    %427 = vector.extract_strided_slice %416 {offsets = [0, 32], sizes = [8, 32], strides = [1, 1]} : vector<8x96xf32> to vector<8x32xf32>
    %428 = vector.extract_strided_slice %418 {offsets = [0, 32], sizes = [8, 32], strides = [1, 1]} : vector<8x96xf32> to vector<8x32xf32>
    %429 = arith.addf %427, %428 : vector<8x32xf32>
    %430 = arith.negf %429 : vector<8x32xf32>
    %431 = math.exp %430 : vector<8x32xf32>
    %cst_80 = arith.constant 1.000000e+00 : f32
    %432 = vector.broadcast %cst_80 : f32 to vector<8x32xf32>
    %433 = arith.addf %432, %431 : vector<8x32xf32>
    %434 = arith.divf %432, %433 : vector<8x32xf32>
    %435 = vector.extract_strided_slice %416 {offsets = [0, 64], sizes = [8, 32], strides = [1, 1]} : vector<8x96xf32> to vector<8x32xf32>
    %436 = vector.extract_strided_slice %418 {offsets = [0, 64], sizes = [8, 32], strides = [1, 1]} : vector<8x96xf32> to vector<8x32xf32>
    %437 = arith.mulf %426, %436 : vector<8x32xf32>
    %438 = arith.addf %435, %437 : vector<8x32xf32>
    %439 = math.tanh %438 : vector<8x32xf32>
    %cst_81 = arith.constant 1.000000e+00 : f32
    %440 = vector.broadcast %cst_81 : f32 to vector<8x32xf32>
    %441 = arith.subf %440, %434 : vector<8x32xf32>
    %442 = arith.mulf %441, %439 : vector<8x32xf32>
    %443 = arith.mulf %434, %384 : vector<8x32xf32>
    %444 = arith.addf %442, %443 : vector<8x32xf32>
    %c5_i32_82 = arith.constant 5 : i32
    %445 = vector.broadcast %c5_i32_82 : i32 to vector<8x1xi32>
    %446 = arith.cmpi sgt, %0, %445 : vector<8x1xi32>
    %447 = vector.shape_cast %446 : vector<8x1xi1> to vector<8x1xi1>
    %448 = vector.broadcast %447 : vector<8x1xi1> to vector<8x32xi1>
    %449 = arith.select %448, %414, %379 : vector<8x32xi1>, vector<8x32xf32>
    %c2_i32_83 = arith.constant 2 : i32
    %450 = vector.broadcast %c2_i32_83 : i32 to vector<8x1xi32>
    %451 = arith.cmpi sgt, %0, %450 : vector<8x1xi32>
    %452 = vector.shape_cast %451 : vector<8x1xi1> to vector<8x1xi1>
    %453 = vector.broadcast %452 : vector<8x1xi1> to vector<8x32xi1>
    %454 = arith.select %453, %444, %384 : vector<8x32xi1>, vector<8x32xf32>
    %455 = vector.extract_strided_slice %8 {offsets = [6, 0, 0], sizes = [1, 8, 96], strides = [1, 1, 1]} : vector<8x8x96xf32> to vector<1x8x96xf32>
    %456 = vector.shape_cast %455 : vector<1x8x96xf32> to vector<8x96xf32>
    %cst_84 = arith.constant dense<0.000000e+00> : vector<8x96xf32>
    %457 = tpu.matmul %449, %21, %cst_84 {dimension_numbers = #tpu.dot_dimension_numbers<[1], [0], [0], [1], [0, 0, 1, 1], [], []>} : vector<8x32xf32>, vector<32x96xf32>, vector<8x96xf32> -> vector<8x96xf32>
    %458 = arith.addf %457, %26 : vector<8x96xf32>
    %459 = vector.extract_strided_slice %456 {offsets = [0, 0], sizes = [8, 32], strides = [1, 1]} : vector<8x96xf32> to vector<8x32xf32>
    %460 = vector.extract_strided_slice %458 {offsets = [0, 0], sizes = [8, 32], strides = [1, 1]} : vector<8x96xf32> to vector<8x32xf32>
    %461 = arith.addf %459, %460 : vector<8x32xf32>
    %462 = arith.negf %461 : vector<8x32xf32>
    %463 = math.exp %462 : vector<8x32xf32>
    %cst_85 = arith.constant 1.000000e+00 : f32
    %464 = vector.broadcast %cst_85 : f32 to vector<8x32xf32>
    %465 = arith.addf %464, %463 : vector<8x32xf32>
    %466 = arith.divf %464, %465 : vector<8x32xf32>
    %467 = vector.extract_strided_slice %456 {offsets = [0, 32], sizes = [8, 32], strides = [1, 1]} : vector<8x96xf32> to vector<8x32xf32>
    %468 = vector.extract_strided_slice %458 {offsets = [0, 32], sizes = [8, 32], strides = [1, 1]} : vector<8x96xf32> to vector<8x32xf32>
    %469 = arith.addf %467, %468 : vector<8x32xf32>
    %470 = arith.negf %469 : vector<8x32xf32>
    %471 = math.exp %470 : vector<8x32xf32>
    %cst_86 = arith.constant 1.000000e+00 : f32
    %472 = vector.broadcast %cst_86 : f32 to vector<8x32xf32>
    %473 = arith.addf %472, %471 : vector<8x32xf32>
    %474 = arith.divf %472, %473 : vector<8x32xf32>
    %475 = vector.extract_strided_slice %456 {offsets = [0, 64], sizes = [8, 32], strides = [1, 1]} : vector<8x96xf32> to vector<8x32xf32>
    %476 = vector.extract_strided_slice %458 {offsets = [0, 64], sizes = [8, 32], strides = [1, 1]} : vector<8x96xf32> to vector<8x32xf32>
    %477 = arith.mulf %466, %476 : vector<8x32xf32>
    %478 = arith.addf %475, %477 : vector<8x32xf32>
    %479 = math.tanh %478 : vector<8x32xf32>
    %cst_87 = arith.constant 1.000000e+00 : f32
    %480 = vector.broadcast %cst_87 : f32 to vector<8x32xf32>
    %481 = arith.subf %480, %474 : vector<8x32xf32>
    %482 = arith.mulf %481, %479 : vector<8x32xf32>
    %483 = arith.mulf %474, %449 : vector<8x32xf32>
    %484 = arith.addf %482, %483 : vector<8x32xf32>
    %485 = vector.extract_strided_slice %14 {offsets = [1, 0, 0], sizes = [1, 8, 96], strides = [1, 1, 1]} : vector<8x8x96xf32> to vector<1x8x96xf32>
    %486 = vector.shape_cast %485 : vector<1x8x96xf32> to vector<8x96xf32>
    %cst_88 = arith.constant dense<0.000000e+00> : vector<8x96xf32>
    %487 = tpu.matmul %454, %22, %cst_88 {dimension_numbers = #tpu.dot_dimension_numbers<[1], [0], [0], [1], [0, 0, 1, 1], [], []>} : vector<8x32xf32>, vector<32x96xf32>, vector<8x96xf32> -> vector<8x96xf32>
    %488 = arith.addf %487, %29 : vector<8x96xf32>
    %489 = vector.extract_strided_slice %486 {offsets = [0, 0], sizes = [8, 32], strides = [1, 1]} : vector<8x96xf32> to vector<8x32xf32>
    %490 = vector.extract_strided_slice %488 {offsets = [0, 0], sizes = [8, 32], strides = [1, 1]} : vector<8x96xf32> to vector<8x32xf32>
    %491 = arith.addf %489, %490 : vector<8x32xf32>
    %492 = arith.negf %491 : vector<8x32xf32>
    %493 = math.exp %492 : vector<8x32xf32>
    %cst_89 = arith.constant 1.000000e+00 : f32
    %494 = vector.broadcast %cst_89 : f32 to vector<8x32xf32>
    %495 = arith.addf %494, %493 : vector<8x32xf32>
    %496 = arith.divf %494, %495 : vector<8x32xf32>
    %497 = vector.extract_strided_slice %486 {offsets = [0, 32], sizes = [8, 32], strides = [1, 1]} : vector<8x96xf32> to vector<8x32xf32>
    %498 = vector.extract_strided_slice %488 {offsets = [0, 32], sizes = [8, 32], strides = [1, 1]} : vector<8x96xf32> to vector<8x32xf32>
    %499 = arith.addf %497, %498 : vector<8x32xf32>
    %500 = arith.negf %499 : vector<8x32xf32>
    %501 = math.exp %500 : vector<8x32xf32>
    %cst_90 = arith.constant 1.000000e+00 : f32
    %502 = vector.broadcast %cst_90 : f32 to vector<8x32xf32>
    %503 = arith.addf %502, %501 : vector<8x32xf32>
    %504 = arith.divf %502, %503 : vector<8x32xf32>
    %505 = vector.extract_strided_slice %486 {offsets = [0, 64], sizes = [8, 32], strides = [1, 1]} : vector<8x96xf32> to vector<8x32xf32>
    %506 = vector.extract_strided_slice %488 {offsets = [0, 64], sizes = [8, 32], strides = [1, 1]} : vector<8x96xf32> to vector<8x32xf32>
    %507 = arith.mulf %496, %506 : vector<8x32xf32>
    %508 = arith.addf %505, %507 : vector<8x32xf32>
    %509 = math.tanh %508 : vector<8x32xf32>
    %cst_91 = arith.constant 1.000000e+00 : f32
    %510 = vector.broadcast %cst_91 : f32 to vector<8x32xf32>
    %511 = arith.subf %510, %504 : vector<8x32xf32>
    %512 = arith.mulf %511, %509 : vector<8x32xf32>
    %513 = arith.mulf %504, %454 : vector<8x32xf32>
    %514 = arith.addf %512, %513 : vector<8x32xf32>
    %c6_i32_92 = arith.constant 6 : i32
    %515 = vector.broadcast %c6_i32_92 : i32 to vector<8x1xi32>
    %516 = arith.cmpi sgt, %0, %515 : vector<8x1xi32>
    %517 = vector.shape_cast %516 : vector<8x1xi1> to vector<8x1xi1>
    %518 = vector.broadcast %517 : vector<8x1xi1> to vector<8x32xi1>
    %519 = arith.select %518, %484, %449 : vector<8x32xi1>, vector<8x32xf32>
    %c1_i32_93 = arith.constant 1 : i32
    %520 = vector.broadcast %c1_i32_93 : i32 to vector<8x1xi32>
    %521 = arith.cmpi sgt, %0, %520 : vector<8x1xi32>
    %522 = vector.shape_cast %521 : vector<8x1xi1> to vector<8x1xi1>
    %523 = vector.broadcast %522 : vector<8x1xi1> to vector<8x32xi1>
    %524 = arith.select %523, %514, %454 : vector<8x32xi1>, vector<8x32xf32>
    %525 = vector.extract_strided_slice %8 {offsets = [7, 0, 0], sizes = [1, 8, 96], strides = [1, 1, 1]} : vector<8x8x96xf32> to vector<1x8x96xf32>
    %526 = vector.shape_cast %525 : vector<1x8x96xf32> to vector<8x96xf32>
    %cst_94 = arith.constant dense<0.000000e+00> : vector<8x96xf32>
    %527 = tpu.matmul %519, %21, %cst_94 {dimension_numbers = #tpu.dot_dimension_numbers<[1], [0], [0], [1], [0, 0, 1, 1], [], []>} : vector<8x32xf32>, vector<32x96xf32>, vector<8x96xf32> -> vector<8x96xf32>
    %528 = arith.addf %527, %26 : vector<8x96xf32>
    %529 = vector.extract_strided_slice %526 {offsets = [0, 0], sizes = [8, 32], strides = [1, 1]} : vector<8x96xf32> to vector<8x32xf32>
    %530 = vector.extract_strided_slice %528 {offsets = [0, 0], sizes = [8, 32], strides = [1, 1]} : vector<8x96xf32> to vector<8x32xf32>
    %531 = arith.addf %529, %530 : vector<8x32xf32>
    %532 = arith.negf %531 : vector<8x32xf32>
    %533 = math.exp %532 : vector<8x32xf32>
    %cst_95 = arith.constant 1.000000e+00 : f32
    %534 = vector.broadcast %cst_95 : f32 to vector<8x32xf32>
    %535 = arith.addf %534, %533 : vector<8x32xf32>
    %536 = arith.divf %534, %535 : vector<8x32xf32>
    %537 = vector.extract_strided_slice %526 {offsets = [0, 32], sizes = [8, 32], strides = [1, 1]} : vector<8x96xf32> to vector<8x32xf32>
    %538 = vector.extract_strided_slice %528 {offsets = [0, 32], sizes = [8, 32], strides = [1, 1]} : vector<8x96xf32> to vector<8x32xf32>
    %539 = arith.addf %537, %538 : vector<8x32xf32>
    %540 = arith.negf %539 : vector<8x32xf32>
    %541 = math.exp %540 : vector<8x32xf32>
    %cst_96 = arith.constant 1.000000e+00 : f32
    %542 = vector.broadcast %cst_96 : f32 to vector<8x32xf32>
    %543 = arith.addf %542, %541 : vector<8x32xf32>
    %544 = arith.divf %542, %543 : vector<8x32xf32>
    %545 = vector.extract_strided_slice %526 {offsets = [0, 64], sizes = [8, 32], strides = [1, 1]} : vector<8x96xf32> to vector<8x32xf32>
    %546 = vector.extract_strided_slice %528 {offsets = [0, 64], sizes = [8, 32], strides = [1, 1]} : vector<8x96xf32> to vector<8x32xf32>
    %547 = arith.mulf %536, %546 : vector<8x32xf32>
    %548 = arith.addf %545, %547 : vector<8x32xf32>
    %549 = math.tanh %548 : vector<8x32xf32>
    %cst_97 = arith.constant 1.000000e+00 : f32
    %550 = vector.broadcast %cst_97 : f32 to vector<8x32xf32>
    %551 = arith.subf %550, %544 : vector<8x32xf32>
    %552 = arith.mulf %551, %549 : vector<8x32xf32>
    %553 = arith.mulf %544, %519 : vector<8x32xf32>
    %554 = arith.addf %552, %553 : vector<8x32xf32>
    %555 = vector.extract_strided_slice %14 {offsets = [0, 0, 0], sizes = [1, 8, 96], strides = [1, 1, 1]} : vector<8x8x96xf32> to vector<1x8x96xf32>
    %556 = vector.shape_cast %555 : vector<1x8x96xf32> to vector<8x96xf32>
    %cst_98 = arith.constant dense<0.000000e+00> : vector<8x96xf32>
    %557 = tpu.matmul %524, %22, %cst_98 {dimension_numbers = #tpu.dot_dimension_numbers<[1], [0], [0], [1], [0, 0, 1, 1], [], []>} : vector<8x32xf32>, vector<32x96xf32>, vector<8x96xf32> -> vector<8x96xf32>
    %558 = arith.addf %557, %29 : vector<8x96xf32>
    %559 = vector.extract_strided_slice %556 {offsets = [0, 0], sizes = [8, 32], strides = [1, 1]} : vector<8x96xf32> to vector<8x32xf32>
    %560 = vector.extract_strided_slice %558 {offsets = [0, 0], sizes = [8, 32], strides = [1, 1]} : vector<8x96xf32> to vector<8x32xf32>
    %561 = arith.addf %559, %560 : vector<8x32xf32>
    %562 = arith.negf %561 : vector<8x32xf32>
    %563 = math.exp %562 : vector<8x32xf32>
    %cst_99 = arith.constant 1.000000e+00 : f32
    %564 = vector.broadcast %cst_99 : f32 to vector<8x32xf32>
    %565 = arith.addf %564, %563 : vector<8x32xf32>
    %566 = arith.divf %564, %565 : vector<8x32xf32>
    %567 = vector.extract_strided_slice %556 {offsets = [0, 32], sizes = [8, 32], strides = [1, 1]} : vector<8x96xf32> to vector<8x32xf32>
    %568 = vector.extract_strided_slice %558 {offsets = [0, 32], sizes = [8, 32], strides = [1, 1]} : vector<8x96xf32> to vector<8x32xf32>
    %569 = arith.addf %567, %568 : vector<8x32xf32>
    %570 = arith.negf %569 : vector<8x32xf32>
    %571 = math.exp %570 : vector<8x32xf32>
    %cst_100 = arith.constant 1.000000e+00 : f32
    %572 = vector.broadcast %cst_100 : f32 to vector<8x32xf32>
    %573 = arith.addf %572, %571 : vector<8x32xf32>
    %574 = arith.divf %572, %573 : vector<8x32xf32>
    %575 = vector.extract_strided_slice %556 {offsets = [0, 64], sizes = [8, 32], strides = [1, 1]} : vector<8x96xf32> to vector<8x32xf32>
    %576 = vector.extract_strided_slice %558 {offsets = [0, 64], sizes = [8, 32], strides = [1, 1]} : vector<8x96xf32> to vector<8x32xf32>
    %577 = arith.mulf %566, %576 : vector<8x32xf32>
    %578 = arith.addf %575, %577 : vector<8x32xf32>
    %579 = math.tanh %578 : vector<8x32xf32>
    %cst_101 = arith.constant 1.000000e+00 : f32
    %580 = vector.broadcast %cst_101 : f32 to vector<8x32xf32>
    %581 = arith.subf %580, %574 : vector<8x32xf32>
    %582 = arith.mulf %581, %579 : vector<8x32xf32>
    %583 = arith.mulf %574, %524 : vector<8x32xf32>
    %584 = arith.addf %582, %583 : vector<8x32xf32>
    %c7_i32_102 = arith.constant 7 : i32
    %585 = vector.broadcast %c7_i32_102 : i32 to vector<8x1xi32>
    %586 = arith.cmpi sgt, %0, %585 : vector<8x1xi32>
    %587 = vector.shape_cast %586 : vector<8x1xi1> to vector<8x1xi1>
    %588 = vector.broadcast %587 : vector<8x1xi1> to vector<8x32xi1>
    %589 = arith.select %588, %554, %519 : vector<8x32xi1>, vector<8x32xf32>
    %c0_i32_103 = arith.constant 0 : i32
    %590 = vector.broadcast %c0_i32_103 : i32 to vector<8x1xi32>
    %591 = arith.cmpi sgt, %0, %590 : vector<8x1xi32>
    %592 = vector.shape_cast %591 : vector<8x1xi1> to vector<8x1xi1>
    %593 = vector.broadcast %592 : vector<8x1xi1> to vector<8x32xi1>
    %594 = arith.select %593, %584, %524 : vector<8x32xi1>, vector<8x32xf32>
    %c0_104 = arith.constant 0 : index
    %c0_105 = arith.constant 0 : index
    %595 = vector.load %arg11[%c0_104, %c0_105] : memref<32x64xf32, #tpu.memory_space<vmem>>, vector<32x64xf32>
    %cst_106 = arith.constant dense<0.000000e+00> : vector<8x64xf32>
    %596 = tpu.matmul %589, %595, %cst_106 {dimension_numbers = #tpu.dot_dimension_numbers<[1], [0], [0], [1], [0, 0, 1, 1], [], []>} : vector<8x32xf32>, vector<32x64xf32>, vector<8x64xf32> -> vector<8x64xf32>
    %c0_107 = arith.constant 0 : index
    %c0_108 = arith.constant 0 : index
    %597 = vector.load %arg12[%c0_107, %c0_108] : memref<32x64xf32, #tpu.memory_space<vmem>>, vector<32x64xf32>
    %cst_109 = arith.constant dense<0.000000e+00> : vector<8x64xf32>
    %598 = tpu.matmul %594, %597, %cst_109 {dimension_numbers = #tpu.dot_dimension_numbers<[1], [0], [0], [1], [0, 0, 1, 1], [], []>} : vector<8x32xf32>, vector<32x64xf32>, vector<8x64xf32> -> vector<8x64xf32>
    %599 = arith.addf %596, %598 : vector<8x64xf32>
    %c0_110 = arith.constant 0 : index
    %c0_111 = arith.constant 0 : index
    %600 = vector.load %arg13[%c0_110, %c0_111] : memref<1x64xf32, #tpu.memory_space<vmem>>, vector<1x64xf32>
    %601 = vector.broadcast %600 : vector<1x64xf32> to vector<8x64xf32>
    %602 = arith.addf %599, %601 : vector<8x64xf32>
    %603 = vector.extract_strided_slice %602 {offsets = [0, 0], sizes = [8, 32], strides = [1, 1]} : vector<8x64xf32> to vector<8x32xf32>
    %604 = vector.extract_strided_slice %602 {offsets = [0, 32], sizes = [8, 32], strides = [1, 1]} : vector<8x64xf32> to vector<8x32xf32>
    %cst_112 = arith.constant 0.000000e+00 : f32
    %605 = vector.broadcast %cst_112 : f32 to vector<8x32xf32>
    %606 = arith.maximumf %604, %605 : vector<8x32xf32>
    %607 = math.absf %604 : vector<8x32xf32>
    %cst_113 = arith.constant 0.000000e+00 : f32
    %608 = vector.broadcast %cst_113 : f32 to vector<8x32xf32>
    %609 = arith.subf %608, %607 : vector<8x32xf32>
    %610 = math.exp %609 : vector<8x32xf32>
    %611 = math.log1p %610 : vector<8x32xf32>
    %612 = arith.addf %606, %611 : vector<8x32xf32>
    %c0_114 = arith.constant 0 : index
    %c0_115 = arith.constant 0 : index
    %613 = vector.load %arg2[%c0_114, %c0_115] : memref<8x32xf32, #tpu.memory_space<vmem>>, vector<8x32xf32>
    %614 = arith.mulf %612, %613 : vector<8x32xf32>
    %615 = arith.addf %603, %614 : vector<8x32xf32>
    %616 = math.log %612 : vector<8x32xf32>
    %cst_116 = arith.constant 0.000000e+00 : f32
    %617 = vector.broadcast %cst_116 : f32 to vector<8x32xf32>
    %618 = arith.subf %617, %616 : vector<8x32xf32>
    %619 = arith.mulf %612, %612 : vector<8x32xf32>
    %620 = arith.mulf %603, %603 : vector<8x32xf32>
    %621 = arith.addf %619, %620 : vector<8x32xf32>
    %cst_117 = arith.constant 1.000000e+00 : f32
    %622 = vector.broadcast %cst_117 : f32 to vector<8x32xf32>
    %623 = arith.subf %621, %622 : vector<8x32xf32>
    %cst_118 = arith.constant 5.000000e-01 : f32
    %624 = vector.broadcast %cst_118 : f32 to vector<8x32xf32>
    %625 = arith.mulf %624, %623 : vector<8x32xf32>
    %626 = arith.addf %618, %625 : vector<8x32xf32>
    %cst_119 = arith.constant dense<0.000000e+00> : vector<32xf32>
    %627 = vector.multi_reduction <add>, %626, %cst_119 [0] : vector<8x32xf32> to vector<32xf32>
    %628 = vector.shape_cast %627 : vector<32xf32> to vector<1x32xf32>
    %cst_120 = arith.constant 1.250000e-01 : f32
    %629 = vector.broadcast %cst_120 : f32 to vector<1x32xf32>
    %630 = arith.mulf %628, %629 : vector<1x32xf32>
    %cst_121 = arith.constant dense<0.000000e+00> : vector<1xf32>
    %631 = vector.multi_reduction <add>, %630, %cst_121 [1] : vector<1x32xf32> to vector<1xf32>
    %632 = vector.shape_cast %631 : vector<1xf32> to vector<1x1xf32>
    %c0_122 = arith.constant 0 : index
    %c0_123 = arith.constant 0 : index
    %633 = vector.load %arg21[%c0_122, %c0_123] : memref<1x1xf32, #tpu.memory_space<vmem>>, vector<1x1xf32>
    tpu.vector_store %arg21[%c0_122, %c0_123], %632 {strides = array<i32>} : memref<1x1xf32, #tpu.memory_space<vmem>>, vector<1x1xf32>,
    %cst_124 = arith.constant 5.000000e-01 : f32
    %634 = vector.broadcast %cst_124 : f32 to vector<1x32xf32>
    %635 = arith.subf %634, %630 : vector<1x32xf32>
    %cst_125 = arith.constant 0.000000e+00 : f32
    %636 = vector.broadcast %cst_125 : f32 to vector<1x32xf32>
    %637 = arith.maximumf %635, %636 : vector<1x32xf32>
    %cst_126 = arith.constant dense<0.000000e+00> : vector<1xf32>
    %638 = vector.multi_reduction <add>, %637, %cst_126 [1] : vector<1x32xf32> to vector<1xf32>
    %639 = vector.shape_cast %638 : vector<1xf32> to vector<1x1xf32>
    %c0_127 = arith.constant 0 : index
    %c0_128 = arith.constant 0 : index
    %640 = vector.load %arg22[%c0_127, %c0_128] : memref<1x1xf32, #tpu.memory_space<vmem>>, vector<1x1xf32>
    tpu.vector_store %arg22[%c0_127, %c0_128], %639 {strides = array<i32>} : memref<1x1xf32, #tpu.memory_space<vmem>>, vector<1x1xf32>,
    %641 = arith.mulf %603, %603 : vector<8x32xf32>
    %cst_129 = arith.constant dense<0.000000e+00> : vector<32xf32>
    %642 = vector.multi_reduction <add>, %641, %cst_129 [0] : vector<8x32xf32> to vector<32xf32>
    %643 = vector.shape_cast %642 : vector<32xf32> to vector<1x32xf32>
    %cst_130 = arith.constant dense<0.000000e+00> : vector<1xf32>
    %644 = vector.multi_reduction <add>, %643, %cst_130 [1] : vector<1x32xf32> to vector<1xf32>
    %645 = vector.shape_cast %644 : vector<1xf32> to vector<1x1xf32>
    %cst_131 = arith.constant 6.250000e-02 : f32
    %646 = vector.broadcast %cst_131 : f32 to vector<1x1xf32>
    %647 = arith.mulf %645, %646 : vector<1x1xf32>
    %cst_132 = arith.constant 3.000000e+00 : f32
    %648 = vector.broadcast %cst_132 : f32 to vector<1x1xf32>
    %649 = arith.subf %648, %647 : vector<1x1xf32>
    %cst_133 = arith.constant 0.000000e+00 : f32
    %650 = vector.broadcast %cst_133 : f32 to vector<1x1xf32>
    %651 = arith.maximumf %649, %650 : vector<1x1xf32>
    %c0_134 = arith.constant 0 : index
    %c0_135 = arith.constant 0 : index
    %652 = vector.load %arg23[%c0_134, %c0_135] : memref<1x1xf32, #tpu.memory_space<vmem>>, vector<1x1xf32>
    tpu.vector_store %arg23[%c0_134, %c0_135], %651 {strides = array<i32>} : memref<1x1xf32, #tpu.memory_space<vmem>>, vector<1x1xf32>,
    %653 = vector.extract_strided_slice %20 {offsets = [0, 0, 0], sizes = [1, 8, 96], strides = [1, 1, 1]} : vector<8x8x96xf32> to vector<1x8x96xf32>
    %654 = vector.shape_cast %653 : vector<1x8x96xf32> to vector<8x96xf32>
    %cst_136 = arith.constant dense<0.000000e+00> : vector<8x96xf32>
    %655 = tpu.matmul %615, %23, %cst_136 {dimension_numbers = #tpu.dot_dimension_numbers<[1], [0], [0], [1], [0, 0, 1, 1], [], []>} : vector<8x32xf32>, vector<32x96xf32>, vector<8x96xf32> -> vector<8x96xf32>
    %656 = arith.addf %655, %32 : vector<8x96xf32>
    %657 = vector.extract_strided_slice %654 {offsets = [0, 0], sizes = [8, 32], strides = [1, 1]} : vector<8x96xf32> to vector<8x32xf32>
    %658 = vector.extract_strided_slice %656 {offsets = [0, 0], sizes = [8, 32], strides = [1, 1]} : vector<8x96xf32> to vector<8x32xf32>
    %659 = arith.addf %657, %658 : vector<8x32xf32>
    %660 = arith.negf %659 : vector<8x32xf32>
    %661 = math.exp %660 : vector<8x32xf32>
    %cst_137 = arith.constant 1.000000e+00 : f32
    %662 = vector.broadcast %cst_137 : f32 to vector<8x32xf32>
    %663 = arith.addf %662, %661 : vector<8x32xf32>
    %664 = arith.divf %662, %663 : vector<8x32xf32>
    %665 = vector.extract_strided_slice %654 {offsets = [0, 32], sizes = [8, 32], strides = [1, 1]} : vector<8x96xf32> to vector<8x32xf32>
    %666 = vector.extract_strided_slice %656 {offsets = [0, 32], sizes = [8, 32], strides = [1, 1]} : vector<8x96xf32> to vector<8x32xf32>
    %667 = arith.addf %665, %666 : vector<8x32xf32>
    %668 = arith.negf %667 : vector<8x32xf32>
    %669 = math.exp %668 : vector<8x32xf32>
    %cst_138 = arith.constant 1.000000e+00 : f32
    %670 = vector.broadcast %cst_138 : f32 to vector<8x32xf32>
    %671 = arith.addf %670, %669 : vector<8x32xf32>
    %672 = arith.divf %670, %671 : vector<8x32xf32>
    %673 = vector.extract_strided_slice %654 {offsets = [0, 64], sizes = [8, 32], strides = [1, 1]} : vector<8x96xf32> to vector<8x32xf32>
    %674 = vector.extract_strided_slice %656 {offsets = [0, 64], sizes = [8, 32], strides = [1, 1]} : vector<8x96xf32> to vector<8x32xf32>
    %675 = arith.mulf %664, %674 : vector<8x32xf32>
    %676 = arith.addf %673, %675 : vector<8x32xf32>
    %677 = math.tanh %676 : vector<8x32xf32>
    %cst_139 = arith.constant 1.000000e+00 : f32
    %678 = vector.broadcast %cst_139 : f32 to vector<8x32xf32>
    %679 = arith.subf %678, %672 : vector<8x32xf32>
    %680 = arith.mulf %679, %677 : vector<8x32xf32>
    %681 = arith.mulf %672, %615 : vector<8x32xf32>
    %682 = arith.addf %680, %681 : vector<8x32xf32>
    %c0_i32_140 = arith.constant 0 : i32
    %683 = vector.broadcast %c0_i32_140 : i32 to vector<8x1xi32>
    %684 = arith.cmpi sgt, %0, %683 : vector<8x1xi32>
    %cst_141 = arith.constant 0.000000e+00 : f32
    %685 = vector.shape_cast %684 : vector<8x1xi1> to vector<8x1xi1>
    %686 = vector.broadcast %685 : vector<8x1xi1> to vector<8x32xi1>
    %687 = vector.broadcast %cst_141 : f32 to vector<8x32xf32>
    %688 = arith.select %686, %682, %687 : vector<8x32xi1>, vector<8x32xf32>
    %689 = vector.shape_cast %684 : vector<8x1xi1> to vector<8x1xi1>
    %690 = vector.broadcast %689 : vector<8x1xi1> to vector<8x32xi1>
    %691 = arith.select %690, %682, %615 : vector<8x32xi1>, vector<8x32xf32>
    %692 = vector.extract_strided_slice %20 {offsets = [1, 0, 0], sizes = [1, 8, 96], strides = [1, 1, 1]} : vector<8x8x96xf32> to vector<1x8x96xf32>
    %693 = vector.shape_cast %692 : vector<1x8x96xf32> to vector<8x96xf32>
    %cst_142 = arith.constant dense<0.000000e+00> : vector<8x96xf32>
    %694 = tpu.matmul %691, %23, %cst_142 {dimension_numbers = #tpu.dot_dimension_numbers<[1], [0], [0], [1], [0, 0, 1, 1], [], []>} : vector<8x32xf32>, vector<32x96xf32>, vector<8x96xf32> -> vector<8x96xf32>
    %695 = arith.addf %694, %32 : vector<8x96xf32>
    %696 = vector.extract_strided_slice %693 {offsets = [0, 0], sizes = [8, 32], strides = [1, 1]} : vector<8x96xf32> to vector<8x32xf32>
    %697 = vector.extract_strided_slice %695 {offsets = [0, 0], sizes = [8, 32], strides = [1, 1]} : vector<8x96xf32> to vector<8x32xf32>
    %698 = arith.addf %696, %697 : vector<8x32xf32>
    %699 = arith.negf %698 : vector<8x32xf32>
    %700 = math.exp %699 : vector<8x32xf32>
    %cst_143 = arith.constant 1.000000e+00 : f32
    %701 = vector.broadcast %cst_143 : f32 to vector<8x32xf32>
    %702 = arith.addf %701, %700 : vector<8x32xf32>
    %703 = arith.divf %701, %702 : vector<8x32xf32>
    %704 = vector.extract_strided_slice %693 {offsets = [0, 32], sizes = [8, 32], strides = [1, 1]} : vector<8x96xf32> to vector<8x32xf32>
    %705 = vector.extract_strided_slice %695 {offsets = [0, 32], sizes = [8, 32], strides = [1, 1]} : vector<8x96xf32> to vector<8x32xf32>
    %706 = arith.addf %704, %705 : vector<8x32xf32>
    %707 = arith.negf %706 : vector<8x32xf32>
    %708 = math.exp %707 : vector<8x32xf32>
    %cst_144 = arith.constant 1.000000e+00 : f32
    %709 = vector.broadcast %cst_144 : f32 to vector<8x32xf32>
    %710 = arith.addf %709, %708 : vector<8x32xf32>
    %711 = arith.divf %709, %710 : vector<8x32xf32>
    %712 = vector.extract_strided_slice %693 {offsets = [0, 64], sizes = [8, 32], strides = [1, 1]} : vector<8x96xf32> to vector<8x32xf32>
    %713 = vector.extract_strided_slice %695 {offsets = [0, 64], sizes = [8, 32], strides = [1, 1]} : vector<8x96xf32> to vector<8x32xf32>
    %714 = arith.mulf %703, %713 : vector<8x32xf32>
    %715 = arith.addf %712, %714 : vector<8x32xf32>
    %716 = math.tanh %715 : vector<8x32xf32>
    %cst_145 = arith.constant 1.000000e+00 : f32
    %717 = vector.broadcast %cst_145 : f32 to vector<8x32xf32>
    %718 = arith.subf %717, %711 : vector<8x32xf32>
    %719 = arith.mulf %718, %716 : vector<8x32xf32>
    %720 = arith.mulf %711, %691 : vector<8x32xf32>
    %721 = arith.addf %719, %720 : vector<8x32xf32>
    %c1_i32_146 = arith.constant 1 : i32
    %722 = vector.broadcast %c1_i32_146 : i32 to vector<8x1xi32>
    %723 = arith.cmpi sgt, %0, %722 : vector<8x1xi32>
    %cst_147 = arith.constant 0.000000e+00 : f32
    %724 = vector.shape_cast %723 : vector<8x1xi1> to vector<8x1xi1>
    %725 = vector.broadcast %724 : vector<8x1xi1> to vector<8x32xi1>
    %726 = vector.broadcast %cst_147 : f32 to vector<8x32xf32>
    %727 = arith.select %725, %721, %726 : vector<8x32xi1>, vector<8x32xf32>
    %728 = vector.shape_cast %723 : vector<8x1xi1> to vector<8x1xi1>
    %729 = vector.broadcast %728 : vector<8x1xi1> to vector<8x32xi1>
    %730 = arith.select %729, %721, %691 : vector<8x32xi1>, vector<8x32xf32>
    %731 = vector.extract_strided_slice %20 {offsets = [2, 0, 0], sizes = [1, 8, 96], strides = [1, 1, 1]} : vector<8x8x96xf32> to vector<1x8x96xf32>
    %732 = vector.shape_cast %731 : vector<1x8x96xf32> to vector<8x96xf32>
    %cst_148 = arith.constant dense<0.000000e+00> : vector<8x96xf32>
    %733 = tpu.matmul %730, %23, %cst_148 {dimension_numbers = #tpu.dot_dimension_numbers<[1], [0], [0], [1], [0, 0, 1, 1], [], []>} : vector<8x32xf32>, vector<32x96xf32>, vector<8x96xf32> -> vector<8x96xf32>
    %734 = arith.addf %733, %32 : vector<8x96xf32>
    %735 = vector.extract_strided_slice %732 {offsets = [0, 0], sizes = [8, 32], strides = [1, 1]} : vector<8x96xf32> to vector<8x32xf32>
    %736 = vector.extract_strided_slice %734 {offsets = [0, 0], sizes = [8, 32], strides = [1, 1]} : vector<8x96xf32> to vector<8x32xf32>
    %737 = arith.addf %735, %736 : vector<8x32xf32>
    %738 = arith.negf %737 : vector<8x32xf32>
    %739 = math.exp %738 : vector<8x32xf32>
    %cst_149 = arith.constant 1.000000e+00 : f32
    %740 = vector.broadcast %cst_149 : f32 to vector<8x32xf32>
    %741 = arith.addf %740, %739 : vector<8x32xf32>
    %742 = arith.divf %740, %741 : vector<8x32xf32>
    %743 = vector.extract_strided_slice %732 {offsets = [0, 32], sizes = [8, 32], strides = [1, 1]} : vector<8x96xf32> to vector<8x32xf32>
    %744 = vector.extract_strided_slice %734 {offsets = [0, 32], sizes = [8, 32], strides = [1, 1]} : vector<8x96xf32> to vector<8x32xf32>
    %745 = arith.addf %743, %744 : vector<8x32xf32>
    %746 = arith.negf %745 : vector<8x32xf32>
    %747 = math.exp %746 : vector<8x32xf32>
    %cst_150 = arith.constant 1.000000e+00 : f32
    %748 = vector.broadcast %cst_150 : f32 to vector<8x32xf32>
    %749 = arith.addf %748, %747 : vector<8x32xf32>
    %750 = arith.divf %748, %749 : vector<8x32xf32>
    %751 = vector.extract_strided_slice %732 {offsets = [0, 64], sizes = [8, 32], strides = [1, 1]} : vector<8x96xf32> to vector<8x32xf32>
    %752 = vector.extract_strided_slice %734 {offsets = [0, 64], sizes = [8, 32], strides = [1, 1]} : vector<8x96xf32> to vector<8x32xf32>
    %753 = arith.mulf %742, %752 : vector<8x32xf32>
    %754 = arith.addf %751, %753 : vector<8x32xf32>
    %755 = math.tanh %754 : vector<8x32xf32>
    %cst_151 = arith.constant 1.000000e+00 : f32
    %756 = vector.broadcast %cst_151 : f32 to vector<8x32xf32>
    %757 = arith.subf %756, %750 : vector<8x32xf32>
    %758 = arith.mulf %757, %755 : vector<8x32xf32>
    %759 = arith.mulf %750, %730 : vector<8x32xf32>
    %760 = arith.addf %758, %759 : vector<8x32xf32>
    %c2_i32_152 = arith.constant 2 : i32
    %761 = vector.broadcast %c2_i32_152 : i32 to vector<8x1xi32>
    %762 = arith.cmpi sgt, %0, %761 : vector<8x1xi32>
    %cst_153 = arith.constant 0.000000e+00 : f32
    %763 = vector.shape_cast %762 : vector<8x1xi1> to vector<8x1xi1>
    %764 = vector.broadcast %763 : vector<8x1xi1> to vector<8x32xi1>
    %765 = vector.broadcast %cst_153 : f32 to vector<8x32xf32>
    %766 = arith.select %764, %760, %765 : vector<8x32xi1>, vector<8x32xf32>
    %767 = vector.shape_cast %762 : vector<8x1xi1> to vector<8x1xi1>
    %768 = vector.broadcast %767 : vector<8x1xi1> to vector<8x32xi1>
    %769 = arith.select %768, %760, %730 : vector<8x32xi1>, vector<8x32xf32>
    %770 = vector.extract_strided_slice %20 {offsets = [3, 0, 0], sizes = [1, 8, 96], strides = [1, 1, 1]} : vector<8x8x96xf32> to vector<1x8x96xf32>
    %771 = vector.shape_cast %770 : vector<1x8x96xf32> to vector<8x96xf32>
    %cst_154 = arith.constant dense<0.000000e+00> : vector<8x96xf32>
    %772 = tpu.matmul %769, %23, %cst_154 {dimension_numbers = #tpu.dot_dimension_numbers<[1], [0], [0], [1], [0, 0, 1, 1], [], []>} : vector<8x32xf32>, vector<32x96xf32>, vector<8x96xf32> -> vector<8x96xf32>
    %773 = arith.addf %772, %32 : vector<8x96xf32>
    %774 = vector.extract_strided_slice %771 {offsets = [0, 0], sizes = [8, 32], strides = [1, 1]} : vector<8x96xf32> to vector<8x32xf32>
    %775 = vector.extract_strided_slice %773 {offsets = [0, 0], sizes = [8, 32], strides = [1, 1]} : vector<8x96xf32> to vector<8x32xf32>
    %776 = arith.addf %774, %775 : vector<8x32xf32>
    %777 = arith.negf %776 : vector<8x32xf32>
    %778 = math.exp %777 : vector<8x32xf32>
    %cst_155 = arith.constant 1.000000e+00 : f32
    %779 = vector.broadcast %cst_155 : f32 to vector<8x32xf32>
    %780 = arith.addf %779, %778 : vector<8x32xf32>
    %781 = arith.divf %779, %780 : vector<8x32xf32>
    %782 = vector.extract_strided_slice %771 {offsets = [0, 32], sizes = [8, 32], strides = [1, 1]} : vector<8x96xf32> to vector<8x32xf32>
    %783 = vector.extract_strided_slice %773 {offsets = [0, 32], sizes = [8, 32], strides = [1, 1]} : vector<8x96xf32> to vector<8x32xf32>
    %784 = arith.addf %782, %783 : vector<8x32xf32>
    %785 = arith.negf %784 : vector<8x32xf32>
    %786 = math.exp %785 : vector<8x32xf32>
    %cst_156 = arith.constant 1.000000e+00 : f32
    %787 = vector.broadcast %cst_156 : f32 to vector<8x32xf32>
    %788 = arith.addf %787, %786 : vector<8x32xf32>
    %789 = arith.divf %787, %788 : vector<8x32xf32>
    %790 = vector.extract_strided_slice %771 {offsets = [0, 64], sizes = [8, 32], strides = [1, 1]} : vector<8x96xf32> to vector<8x32xf32>
    %791 = vector.extract_strided_slice %773 {offsets = [0, 64], sizes = [8, 32], strides = [1, 1]} : vector<8x96xf32> to vector<8x32xf32>
    %792 = arith.mulf %781, %791 : vector<8x32xf32>
    %793 = arith.addf %790, %792 : vector<8x32xf32>
    %794 = math.tanh %793 : vector<8x32xf32>
    %cst_157 = arith.constant 1.000000e+00 : f32
    %795 = vector.broadcast %cst_157 : f32 to vector<8x32xf32>
    %796 = arith.subf %795, %789 : vector<8x32xf32>
    %797 = arith.mulf %796, %794 : vector<8x32xf32>
    %798 = arith.mulf %789, %769 : vector<8x32xf32>
    %799 = arith.addf %797, %798 : vector<8x32xf32>
    %c3_i32_158 = arith.constant 3 : i32
    %800 = vector.broadcast %c3_i32_158 : i32 to vector<8x1xi32>
    %801 = arith.cmpi sgt, %0, %800 : vector<8x1xi32>
    %cst_159 = arith.constant 0.000000e+00 : f32
    %802 = vector.shape_cast %801 : vector<8x1xi1> to vector<8x1xi1>
    %803 = vector.broadcast %802 : vector<8x1xi1> to vector<8x32xi1>
    %804 = vector.broadcast %cst_159 : f32 to vector<8x32xf32>
    %805 = arith.select %803, %799, %804 : vector<8x32xi1>, vector<8x32xf32>
    %806 = vector.shape_cast %801 : vector<8x1xi1> to vector<8x1xi1>
    %807 = vector.broadcast %806 : vector<8x1xi1> to vector<8x32xi1>
    %808 = arith.select %807, %799, %769 : vector<8x32xi1>, vector<8x32xf32>
    %809 = vector.extract_strided_slice %20 {offsets = [4, 0, 0], sizes = [1, 8, 96], strides = [1, 1, 1]} : vector<8x8x96xf32> to vector<1x8x96xf32>
    %810 = vector.shape_cast %809 : vector<1x8x96xf32> to vector<8x96xf32>
    %cst_160 = arith.constant dense<0.000000e+00> : vector<8x96xf32>
    %811 = tpu.matmul %808, %23, %cst_160 {dimension_numbers = #tpu.dot_dimension_numbers<[1], [0], [0], [1], [0, 0, 1, 1], [], []>} : vector<8x32xf32>, vector<32x96xf32>, vector<8x96xf32> -> vector<8x96xf32>
    %812 = arith.addf %811, %32 : vector<8x96xf32>
    %813 = vector.extract_strided_slice %810 {offsets = [0, 0], sizes = [8, 32], strides = [1, 1]} : vector<8x96xf32> to vector<8x32xf32>
    %814 = vector.extract_strided_slice %812 {offsets = [0, 0], sizes = [8, 32], strides = [1, 1]} : vector<8x96xf32> to vector<8x32xf32>
    %815 = arith.addf %813, %814 : vector<8x32xf32>
    %816 = arith.negf %815 : vector<8x32xf32>
    %817 = math.exp %816 : vector<8x32xf32>
    %cst_161 = arith.constant 1.000000e+00 : f32
    %818 = vector.broadcast %cst_161 : f32 to vector<8x32xf32>
    %819 = arith.addf %818, %817 : vector<8x32xf32>
    %820 = arith.divf %818, %819 : vector<8x32xf32>
    %821 = vector.extract_strided_slice %810 {offsets = [0, 32], sizes = [8, 32], strides = [1, 1]} : vector<8x96xf32> to vector<8x32xf32>
    %822 = vector.extract_strided_slice %812 {offsets = [0, 32], sizes = [8, 32], strides = [1, 1]} : vector<8x96xf32> to vector<8x32xf32>
    %823 = arith.addf %821, %822 : vector<8x32xf32>
    %824 = arith.negf %823 : vector<8x32xf32>
    %825 = math.exp %824 : vector<8x32xf32>
    %cst_162 = arith.constant 1.000000e+00 : f32
    %826 = vector.broadcast %cst_162 : f32 to vector<8x32xf32>
    %827 = arith.addf %826, %825 : vector<8x32xf32>
    %828 = arith.divf %826, %827 : vector<8x32xf32>
    %829 = vector.extract_strided_slice %810 {offsets = [0, 64], sizes = [8, 32], strides = [1, 1]} : vector<8x96xf32> to vector<8x32xf32>
    %830 = vector.extract_strided_slice %812 {offsets = [0, 64], sizes = [8, 32], strides = [1, 1]} : vector<8x96xf32> to vector<8x32xf32>
    %831 = arith.mulf %820, %830 : vector<8x32xf32>
    %832 = arith.addf %829, %831 : vector<8x32xf32>
    %833 = math.tanh %832 : vector<8x32xf32>
    %cst_163 = arith.constant 1.000000e+00 : f32
    %834 = vector.broadcast %cst_163 : f32 to vector<8x32xf32>
    %835 = arith.subf %834, %828 : vector<8x32xf32>
    %836 = arith.mulf %835, %833 : vector<8x32xf32>
    %837 = arith.mulf %828, %808 : vector<8x32xf32>
    %838 = arith.addf %836, %837 : vector<8x32xf32>
    %c4_i32_164 = arith.constant 4 : i32
    %839 = vector.broadcast %c4_i32_164 : i32 to vector<8x1xi32>
    %840 = arith.cmpi sgt, %0, %839 : vector<8x1xi32>
    %cst_165 = arith.constant 0.000000e+00 : f32
    %841 = vector.shape_cast %840 : vector<8x1xi1> to vector<8x1xi1>
    %842 = vector.broadcast %841 : vector<8x1xi1> to vector<8x32xi1>
    %843 = vector.broadcast %cst_165 : f32 to vector<8x32xf32>
    %844 = arith.select %842, %838, %843 : vector<8x32xi1>, vector<8x32xf32>
    %845 = vector.shape_cast %840 : vector<8x1xi1> to vector<8x1xi1>
    %846 = vector.broadcast %845 : vector<8x1xi1> to vector<8x32xi1>
    %847 = arith.select %846, %838, %808 : vector<8x32xi1>, vector<8x32xf32>
    %848 = vector.extract_strided_slice %20 {offsets = [5, 0, 0], sizes = [1, 8, 96], strides = [1, 1, 1]} : vector<8x8x96xf32> to vector<1x8x96xf32>
    %849 = vector.shape_cast %848 : vector<1x8x96xf32> to vector<8x96xf32>
    %cst_166 = arith.constant dense<0.000000e+00> : vector<8x96xf32>
    %850 = tpu.matmul %847, %23, %cst_166 {dimension_numbers = #tpu.dot_dimension_numbers<[1], [0], [0], [1], [0, 0, 1, 1], [], []>} : vector<8x32xf32>, vector<32x96xf32>, vector<8x96xf32> -> vector<8x96xf32>
    %851 = arith.addf %850, %32 : vector<8x96xf32>
    %852 = vector.extract_strided_slice %849 {offsets = [0, 0], sizes = [8, 32], strides = [1, 1]} : vector<8x96xf32> to vector<8x32xf32>
    %853 = vector.extract_strided_slice %851 {offsets = [0, 0], sizes = [8, 32], strides = [1, 1]} : vector<8x96xf32> to vector<8x32xf32>
    %854 = arith.addf %852, %853 : vector<8x32xf32>
    %855 = arith.negf %854 : vector<8x32xf32>
    %856 = math.exp %855 : vector<8x32xf32>
    %cst_167 = arith.constant 1.000000e+00 : f32
    %857 = vector.broadcast %cst_167 : f32 to vector<8x32xf32>
    %858 = arith.addf %857, %856 : vector<8x32xf32>
    %859 = arith.divf %857, %858 : vector<8x32xf32>
    %860 = vector.extract_strided_slice %849 {offsets = [0, 32], sizes = [8, 32], strides = [1, 1]} : vector<8x96xf32> to vector<8x32xf32>
    %861 = vector.extract_strided_slice %851 {offsets = [0, 32], sizes = [8, 32], strides = [1, 1]} : vector<8x96xf32> to vector<8x32xf32>
    %862 = arith.addf %860, %861 : vector<8x32xf32>
    %863 = arith.negf %862 : vector<8x32xf32>
    %864 = math.exp %863 : vector<8x32xf32>
    %cst_168 = arith.constant 1.000000e+00 : f32
    %865 = vector.broadcast %cst_168 : f32 to vector<8x32xf32>
    %866 = arith.addf %865, %864 : vector<8x32xf32>
    %867 = arith.divf %865, %866 : vector<8x32xf32>
    %868 = vector.extract_strided_slice %849 {offsets = [0, 64], sizes = [8, 32], strides = [1, 1]} : vector<8x96xf32> to vector<8x32xf32>
    %869 = vector.extract_strided_slice %851 {offsets = [0, 64], sizes = [8, 32], strides = [1, 1]} : vector<8x96xf32> to vector<8x32xf32>
    %870 = arith.mulf %859, %869 : vector<8x32xf32>
    %871 = arith.addf %868, %870 : vector<8x32xf32>
    %872 = math.tanh %871 : vector<8x32xf32>
    %cst_169 = arith.constant 1.000000e+00 : f32
    %873 = vector.broadcast %cst_169 : f32 to vector<8x32xf32>
    %874 = arith.subf %873, %867 : vector<8x32xf32>
    %875 = arith.mulf %874, %872 : vector<8x32xf32>
    %876 = arith.mulf %867, %847 : vector<8x32xf32>
    %877 = arith.addf %875, %876 : vector<8x32xf32>
    %c5_i32_170 = arith.constant 5 : i32
    %878 = vector.broadcast %c5_i32_170 : i32 to vector<8x1xi32>
    %879 = arith.cmpi sgt, %0, %878 : vector<8x1xi32>
    %cst_171 = arith.constant 0.000000e+00 : f32
    %880 = vector.shape_cast %879 : vector<8x1xi1> to vector<8x1xi1>
    %881 = vector.broadcast %880 : vector<8x1xi1> to vector<8x32xi1>
    %882 = vector.broadcast %cst_171 : f32 to vector<8x32xf32>
    %883 = arith.select %881, %877, %882 : vector<8x32xi1>, vector<8x32xf32>
    %884 = vector.shape_cast %879 : vector<8x1xi1> to vector<8x1xi1>
    %885 = vector.broadcast %884 : vector<8x1xi1> to vector<8x32xi1>
    %886 = arith.select %885, %877, %847 : vector<8x32xi1>, vector<8x32xf32>
    %887 = vector.extract_strided_slice %20 {offsets = [6, 0, 0], sizes = [1, 8, 96], strides = [1, 1, 1]} : vector<8x8x96xf32> to vector<1x8x96xf32>
    %888 = vector.shape_cast %887 : vector<1x8x96xf32> to vector<8x96xf32>
    %cst_172 = arith.constant dense<0.000000e+00> : vector<8x96xf32>
    %889 = tpu.matmul %886, %23, %cst_172 {dimension_numbers = #tpu.dot_dimension_numbers<[1], [0], [0], [1], [0, 0, 1, 1], [], []>} : vector<8x32xf32>, vector<32x96xf32>, vector<8x96xf32> -> vector<8x96xf32>
    %890 = arith.addf %889, %32 : vector<8x96xf32>
    %891 = vector.extract_strided_slice %888 {offsets = [0, 0], sizes = [8, 32], strides = [1, 1]} : vector<8x96xf32> to vector<8x32xf32>
    %892 = vector.extract_strided_slice %890 {offsets = [0, 0], sizes = [8, 32], strides = [1, 1]} : vector<8x96xf32> to vector<8x32xf32>
    %893 = arith.addf %891, %892 : vector<8x32xf32>
    %894 = arith.negf %893 : vector<8x32xf32>
    %895 = math.exp %894 : vector<8x32xf32>
    %cst_173 = arith.constant 1.000000e+00 : f32
    %896 = vector.broadcast %cst_173 : f32 to vector<8x32xf32>
    %897 = arith.addf %896, %895 : vector<8x32xf32>
    %898 = arith.divf %896, %897 : vector<8x32xf32>
    %899 = vector.extract_strided_slice %888 {offsets = [0, 32], sizes = [8, 32], strides = [1, 1]} : vector<8x96xf32> to vector<8x32xf32>
    %900 = vector.extract_strided_slice %890 {offsets = [0, 32], sizes = [8, 32], strides = [1, 1]} : vector<8x96xf32> to vector<8x32xf32>
    %901 = arith.addf %899, %900 : vector<8x32xf32>
    %902 = arith.negf %901 : vector<8x32xf32>
    %903 = math.exp %902 : vector<8x32xf32>
    %cst_174 = arith.constant 1.000000e+00 : f32
    %904 = vector.broadcast %cst_174 : f32 to vector<8x32xf32>
    %905 = arith.addf %904, %903 : vector<8x32xf32>
    %906 = arith.divf %904, %905 : vector<8x32xf32>
    %907 = vector.extract_strided_slice %888 {offsets = [0, 64], sizes = [8, 32], strides = [1, 1]} : vector<8x96xf32> to vector<8x32xf32>
    %908 = vector.extract_strided_slice %890 {offsets = [0, 64], sizes = [8, 32], strides = [1, 1]} : vector<8x96xf32> to vector<8x32xf32>
    %909 = arith.mulf %898, %908 : vector<8x32xf32>
    %910 = arith.addf %907, %909 : vector<8x32xf32>
    %911 = math.tanh %910 : vector<8x32xf32>
    %cst_175 = arith.constant 1.000000e+00 : f32
    %912 = vector.broadcast %cst_175 : f32 to vector<8x32xf32>
    %913 = arith.subf %912, %906 : vector<8x32xf32>
    %914 = arith.mulf %913, %911 : vector<8x32xf32>
    %915 = arith.mulf %906, %886 : vector<8x32xf32>
    %916 = arith.addf %914, %915 : vector<8x32xf32>
    %c6_i32_176 = arith.constant 6 : i32
    %917 = vector.broadcast %c6_i32_176 : i32 to vector<8x1xi32>
    %918 = arith.cmpi sgt, %0, %917 : vector<8x1xi32>
    %cst_177 = arith.constant 0.000000e+00 : f32
    %919 = vector.shape_cast %918 : vector<8x1xi1> to vector<8x1xi1>
    %920 = vector.broadcast %919 : vector<8x1xi1> to vector<8x32xi1>
    %921 = vector.broadcast %cst_177 : f32 to vector<8x32xf32>
    %922 = arith.select %920, %916, %921 : vector<8x32xi1>, vector<8x32xf32>
    %923 = vector.shape_cast %918 : vector<8x1xi1> to vector<8x1xi1>
    %924 = vector.broadcast %923 : vector<8x1xi1> to vector<8x32xi1>
    %925 = arith.select %924, %916, %886 : vector<8x32xi1>, vector<8x32xf32>
    %926 = vector.extract_strided_slice %20 {offsets = [7, 0, 0], sizes = [1, 8, 96], strides = [1, 1, 1]} : vector<8x8x96xf32> to vector<1x8x96xf32>
    %927 = vector.shape_cast %926 : vector<1x8x96xf32> to vector<8x96xf32>
    %cst_178 = arith.constant dense<0.000000e+00> : vector<8x96xf32>
    %928 = tpu.matmul %925, %23, %cst_178 {dimension_numbers = #tpu.dot_dimension_numbers<[1], [0], [0], [1], [0, 0, 1, 1], [], []>} : vector<8x32xf32>, vector<32x96xf32>, vector<8x96xf32> -> vector<8x96xf32>
    %929 = arith.addf %928, %32 : vector<8x96xf32>
    %930 = vector.extract_strided_slice %927 {offsets = [0, 0], sizes = [8, 32], strides = [1, 1]} : vector<8x96xf32> to vector<8x32xf32>
    %931 = vector.extract_strided_slice %929 {offsets = [0, 0], sizes = [8, 32], strides = [1, 1]} : vector<8x96xf32> to vector<8x32xf32>
    %932 = arith.addf %930, %931 : vector<8x32xf32>
    %933 = arith.negf %932 : vector<8x32xf32>
    %934 = math.exp %933 : vector<8x32xf32>
    %cst_179 = arith.constant 1.000000e+00 : f32
    %935 = vector.broadcast %cst_179 : f32 to vector<8x32xf32>
    %936 = arith.addf %935, %934 : vector<8x32xf32>
    %937 = arith.divf %935, %936 : vector<8x32xf32>
    %938 = vector.extract_strided_slice %927 {offsets = [0, 32], sizes = [8, 32], strides = [1, 1]} : vector<8x96xf32> to vector<8x32xf32>
    %939 = vector.extract_strided_slice %929 {offsets = [0, 32], sizes = [8, 32], strides = [1, 1]} : vector<8x96xf32> to vector<8x32xf32>
    %940 = arith.addf %938, %939 : vector<8x32xf32>
    %941 = arith.negf %940 : vector<8x32xf32>
    %942 = math.exp %941 : vector<8x32xf32>
    %cst_180 = arith.constant 1.000000e+00 : f32
    %943 = vector.broadcast %cst_180 : f32 to vector<8x32xf32>
    %944 = arith.addf %943, %942 : vector<8x32xf32>
    %945 = arith.divf %943, %944 : vector<8x32xf32>
    %946 = vector.extract_strided_slice %927 {offsets = [0, 64], sizes = [8, 32], strides = [1, 1]} : vector<8x96xf32> to vector<8x32xf32>
    %947 = vector.extract_strided_slice %929 {offsets = [0, 64], sizes = [8, 32], strides = [1, 1]} : vector<8x96xf32> to vector<8x32xf32>
    %948 = arith.mulf %937, %947 : vector<8x32xf32>
    %949 = arith.addf %946, %948 : vector<8x32xf32>
    %950 = math.tanh %949 : vector<8x32xf32>
    %cst_181 = arith.constant 1.000000e+00 : f32
    %951 = vector.broadcast %cst_181 : f32 to vector<8x32xf32>
    %952 = arith.subf %951, %945 : vector<8x32xf32>
    %953 = arith.mulf %952, %950 : vector<8x32xf32>
    %954 = arith.mulf %945, %925 : vector<8x32xf32>
    %955 = arith.addf %953, %954 : vector<8x32xf32>
    %c7_i32_182 = arith.constant 7 : i32
    %956 = vector.broadcast %c7_i32_182 : i32 to vector<8x1xi32>
    %957 = arith.cmpi sgt, %0, %956 : vector<8x1xi32>
    %cst_183 = arith.constant 0.000000e+00 : f32
    %958 = vector.shape_cast %957 : vector<8x1xi1> to vector<8x1xi1>
    %959 = vector.broadcast %958 : vector<8x1xi1> to vector<8x32xi1>
    %960 = vector.broadcast %cst_183 : f32 to vector<8x32xf32>
    %961 = arith.select %959, %955, %960 : vector<8x32xi1>, vector<8x32xf32>
    %962 = tpu.concatenate %688, %727, %766, %805, %844, %883, %922, %961 in 0 : vector<8x32xf32>, vector<8x32xf32>, vector<8x32xf32>, vector<8x32xf32>, vector<8x32xf32>, vector<8x32xf32>, vector<8x32xf32>, vector<8x32xf32> -> vector<64x32xf32>
    %c0_184 = arith.constant 0 : index
    %c0_185 = arith.constant 0 : index
    %963 = vector.load %arg18[%c0_184, %c0_185] : memref<32x128xf32, #tpu.memory_space<vmem>>, vector<32x128xf32>
    %cst_186 = arith.constant dense<0.000000e+00> : vector<64x128xf32>
    %964 = tpu.matmul %962, %963, %cst_186 {dimension_numbers = #tpu.dot_dimension_numbers<[1], [0], [0], [1], [0, 0, 1, 1], [], []>} : vector<64x32xf32>, vector<32x128xf32>, vector<64x128xf32> -> vector<64x128xf32>
    %c0_187 = arith.constant 0 : index
    %c0_188 = arith.constant 0 : index
    %965 = vector.load %arg19[%c0_187, %c0_188] : memref<1x128xf32, #tpu.memory_space<vmem>>, vector<1x128xf32>
    %966 = vector.broadcast %965 : vector<1x128xf32> to vector<64x128xf32>
    %967 = arith.addf %964, %966 : vector<64x128xf32>
    %cst_189 = arith.constant dense<0xFF800000> : vector<64xf32>
    %968 = vector.multi_reduction <maximumf>, %967, %cst_189 [1] : vector<64x128xf32> to vector<64xf32>
    %969 = vector.shape_cast %968 : vector<64xf32> to vector<64x1xf32>
    %970 = vector.broadcast %969 : vector<64x1xf32> to vector<64x128xf32>
    %971 = arith.subf %967, %970 : vector<64x128xf32>
    %972 = math.exp %971 : vector<64x128xf32>
    %cst_190 = arith.constant dense<0.000000e+00> : vector<64xf32>
    %973 = vector.multi_reduction <add>, %972, %cst_190 [1] : vector<64x128xf32> to vector<64xf32>
    %974 = vector.shape_cast %973 : vector<64xf32> to vector<64x1xf32>
    %975 = math.log %974 : vector<64x1xf32>
    %976 = vector.broadcast %975 : vector<64x1xf32> to vector<64x128xf32>
    %977 = arith.subf %971, %976 : vector<64x128xf32>
    %978 = vector.shape_cast %977 : vector<64x128xf32> to vector<8x8x128xf32>
    %c0_191 = arith.constant 0 : index
    %c0_192 = arith.constant 0 : index
    %c0_193 = arith.constant 0 : index
    %979 = vector.load %arg20[%c0_191, %c0_192, %c0_193] : memref<8x8x128xf32, #tpu.memory_space<vmem>>, vector<8x8x128xf32>
    tpu.vector_store %arg20[%c0_191, %c0_192, %c0_193], %978 {strides = array<i32>} : memref<8x8x128xf32, #tpu.memory_space<vmem>>, vector<8x8x128xf32>,
    return
  }
}

</mosaic_0001>

<llo_original>
// kernel: sentence_vae_forward.1
$region0: #{sentence_vae_forward.1}
  #allocation0 [shape = 'u32[]', space=smem, size = 0x4, offset = 0x4, fixed_abs, tag = 'smem constant byte address 0x4 - core index']
  #allocation1 [shape = 'u32[144,128]{1,0:T(1,128)}', space=vmem, size = 0x12000, scoped, tag = 'internal scratch']
  %s0 = inlined_call_operand.vmem [shape: f32[8,8,16], index: 0, kind: input, shape index: {}]
  %s1 = inlined_call_operand.vmem [shape: s32[8,1], index: 1, kind: input, shape index: {}]
  %s2 = inlined_call_operand.vmem [shape: f32[8,32], index: 2, kind: input, shape index: {}]
  %s3 = inlined_call_operand.hbm [shape: f32[16,96], index: 3, kind: input, shape index: {}]
  %s4 = inlined_call_operand.hbm [shape: f32[32,96], index: 4, kind: input, shape index: {}]
  %s5 = inlined_call_operand.vmem [shape: f32[1,96], index: 5, kind: input, shape index: {}]
  %s6 = inlined_call_operand.vmem [shape: f32[1,96], index: 6, kind: input, shape index: {}]
  %s7 = inlined_call_operand.hbm [shape: f32[16,96], index: 7, kind: input, shape index: {}]
  %s8 = inlined_call_operand.hbm [shape: f32[32,96], index: 8, kind: input, shape index: {}]
  %s9 = inlined_call_operand.vmem [shape: f32[1,96], index: 9, kind: input, shape index: {}]
  %s10 = inlined_call_operand.vmem [shape: f32[1,96], index: 10, kind: input, shape index: {}]
  %s11 = inlined_call_operand.hbm [shape: f32[32,64], index: 11, kind: input, shape index: {}]
  %s12 = inlined_call_operand.hbm [shape: f32[32,64], index: 12, kind: input, shape index: {}]
  %s13 = inlined_call_operand.vmem [shape: f32[1,64], index: 13, kind: input, shape index: {}]
  %s14 = inlined_call_operand.hbm [shape: f32[16,96], index: 14, kind: input, shape index: {}]
  %s15 = inlined_call_operand.hbm [shape: f32[32,96], index: 15, kind: input, shape index: {}]
  %s16 = inlined_call_operand.hbm [shape: f32[1,96], index: 16, kind: input, shape index: {}]
  %s17 = inlined_call_operand.hbm [shape: f32[1,96], index: 17, kind: input, shape index: {}]
  %s18 = inlined_call_operand.hbm [shape: f32[32,128], index: 18, kind: input, shape index: {}]
  %s19 = inlined_call_operand.hbm [shape: f32[1,128], index: 19, kind: input, shape index: {}]
  %s20 = inlined_call_operand.hbm [shape: f32[8,8,128], index: 20, kind: output, shape index: {0}]
  %s21 = inlined_call_operand.hbm [shape: f32[1,1], index: 21, kind: output, shape index: {1}]
  %s22 = inlined_call_operand.hbm [shape: f32[1,1], index: 22, kind: output, shape index: {2}]
  %s23 = inlined_call_operand.hbm [shape: f32[1,1], index: 23, kind: output, shape index: {3}]
  %24 = xla_tuple %s20, %s21, %s22, %s23
  %s25 = sld [smem:[#allocation0]]
  $region162: #{sentence_vae_forward.1} parent=0
    _
  %s27 = ssub.s32 1, %s25
  %s28 = scalar_select 0, %s27, %s25
  $region1: #{sentence_vae_forward.1} parent=0
    #allocation2 [shape = 'u8[8192]{0}', space=vmem, size = 0x2000, scoped, tag = 'input window, operand 3, single buffered']
    #allocation3 [shape = 's32[1]{0}', space=sflag, size = 0x4, scoped, tag = 'scoped memory for sentence_vae_forward.1']
    #allocation4 [shape = 's32[1]{0}', space=sflag, size = 0x4, scoped, tag = 'scoped memory for sentence_vae_forward.1']
    #allocation5 [shape = 'u8[16384]{0}', space=vmem, size = 0x4000, scoped, tag = 'input window, operand 4, single buffered']
    #allocation6 [shape = 's32[1]{0}', space=sflag, size = 0x4, scoped, tag = 'scoped memory for sentence_vae_forward.1']
    #allocation7 [shape = 'u8[8192]{0}', space=vmem, size = 0x2000, scoped, tag = 'input window, operand 7, single buffered']
    #allocation8 [shape = 'u8[16384]{0}', space=vmem, size = 0x4000, scoped, tag = 'input window, operand 8, single buffered']
    #allocation9 [shape = 's32[1]{0}', space=sflag, size = 0x4, scoped, tag = 'scoped memory for sentence_vae_forward.1']
    #allocation10 [shape = 'u8[16384]{0}', space=vmem, size = 0x4000, scoped, tag = 'input window, operand 11, single buffered']
    #allocation11 [shape = 'u8[16384]{0}', space=vmem, size = 0x4000, scoped, tag = 'input window, operand 12, single buffered']
    #allocation12 [shape = 's32[1]{0}', space=sflag, size = 0x4, scoped, tag = 'scoped memory for sentence_vae_forward.1']
    #allocation13 [shape = 'u8[8192]{0}', space=vmem, size = 0x2000, scoped, tag = 'input window, operand 14, single buffered']
    #allocation14 [shape = 'u8[16384]{0}', space=vmem, size = 0x4000, scoped, tag = 'input window, operand 15, single buffered']
    #allocation15 [shape = 's32[1]{0}', space=sflag, size = 0x4, scoped, tag = 'scoped memory for sentence_vae_forward.1']
    #allocation16 [shape = 'u8[512]{0}', space=vmem, size = 0x400, scoped, tag = 'input window, operand 16, single buffered']
    #allocation17 [shape = 'u8[512]{0}', space=vmem, size = 0x400, scoped, tag = 'input window, operand 17, single buffered']
    #allocation18 [shape = 's32[1]{0}', space=sflag, size = 0x4, scoped, tag = 'scoped memory for sentence_vae_forward.1']
    #allocation19 [shape = 'u8[16384]{0}', space=vmem, size = 0x4000, scoped, tag = 'input window, operand 18, single buffered']
    #allocation20 [shape = 'u8[512]{0}', space=vmem, size = 0x400, scoped, tag = 'input window, operand 19, single buffered']
    #allocation21 [shape = 's32[1]{0}', space=sflag, size = 0x4, scoped, tag = 'scoped memory for sentence_vae_forward.1']
    #allocation22 [shape = 'u8[32768]{0}', space=vmem, size = 0x8000, scoped, tag = 'output window, operand 0, single buffered']
    #allocation23 [shape = 'u8[512]{0}', space=vmem, size = 0x400, scoped, tag = 'output window, operand 1, single buffered']
    #allocation24 [shape = 's32[1]{0}', space=sflag, size = 0x4, scoped, tag = 'scoped memory for sentence_vae_forward.1']
    #allocation25 [shape = 'u8[512]{0}', space=vmem, size = 0x400, scoped, tag = 'output window, operand 2, single buffered']
    #allocation26 [shape = 'u8[512]{0}', space=vmem, size = 0x400, scoped, tag = 'output window, operand 3, single buffered']
    #allocation27 [shape = 's32[1]{0}', space=sflag, size = 0x4, scoped, tag = 'scoped memory for sentence_vae_forward.1']
    %29 = vsyncpa [#allocation3], 0
    %30 = vsyncpa [#allocation6], 0
    %31 = vsyncpa [#allocation9], 0
    %32 = vsyncpa [#allocation12], 0
    %33 = vsyncpa [#allocation15], 0
    %34 = vsyncpa [#allocation18], 0
    %35 = vsyncpa [#allocation21], 0
    %36 = vsyncpa [#allocation4], 0
    %37 = vsyncpa [#allocation24], 0
    %38 = vsyncpa [#allocation27], 0
    // Predicated region
    $region2: #{sentence_vae_forward.1} parent=1 // pred_check
      _
    $region3: #{sentence_vae_forward.1} parent=1 // pred_check_branch
      %40 = sbr.rel (0) target = $region5
    $region4: #{sentence_vae_forward.1} parent=1 // pred_region
      _
    $region5: #{sentence_vae_forward.1} parent=1 // pred_fallthru
      _
    // Predicated region
    $region6: #{sentence_vae_forward.1} parent=1 // pred_check
      _
    $region7: #{sentence_vae_forward.1} parent=1 // pred_check_branch
      %42 = sbr.rel (0) target = $region9
    $region8: #{sentence_vae_forward.1} parent=1 // pred_region
      _
    $region9: #{sentence_vae_forward.1} parent=1 // pred_fallthru
      _
    // Predicated region
    $region10: #{sentence_vae_forward.1} parent=1 // pred_check
      _
    $region11: #{sentence_vae_forward.1} parent=1 // pred_check_branch
      %44 = sbr.rel (0) target = $region13
    $region12: #{sentence_vae_forward.1} parent=1 // pred_region
      _
    $region13: #{sentence_vae_forward.1} parent=1 // pred_fallthru
      _
    // Predicated region
    $region14: #{sentence_vae_forward.1} parent=1 // pred_check
      _
    $region15: #{sentence_vae_forward.1} parent=1 // pred_check_branch
      %46 = sbr.rel (0) target = $region17
    $region16: #{sentence_vae_forward.1} parent=1 // pred_region
      %s48 = ssub.s32 256, 256
      %49 = vsyncadd [#allocation3], %s48
      %s50 = sshll.u32 [#allocation2], 4
      %s51 = int_to_ptr.vmem [resolvable:$true] %s50
      %56 = dma.hbm_to_vmem [thread:$0]  %s3, 256, %s51, [#allocation3], 128, 128, 8
    $region17: #{sentence_vae_forward.1} parent=1 // pred_fallthru
      _
    // Predicated region
    $region18: #{sentence_vae_forward.1} parent=1 // pred_check
      _
    $region19: #{sentence_vae_forward.1} parent=1 // pred_check_branch
      %58 = sbr.rel (0) target = $region21
    $region20: #{sentence_vae_forward.1} parent=1 // pred_region
      %s60 = ssub.s32 512, 512
      %61 = vsyncadd [#allocation6], %s60
      %s62 = sshll.u32 [#allocation5], 4
      %s63 = int_to_ptr.vmem [resolvable:$true] %s62
      %68 = dma.hbm_to_vmem [thread:$0]  %s4, 512, %s63, [#allocation6], 128, 128, 8
    $region21: #{sentence_vae_forward.1} parent=1 // pred_fallthru
      _
    // Predicated region
    $region22: #{sentence_vae_forward.1} parent=1 // pred_check
      _
    $region23: #{sentence_vae_forward.1} parent=1 // pred_check_branch
      %70 = sbr.rel (0) target = $region25
    $region24: #{sentence_vae_forward.1} parent=1 // pred_region
      _
    $region25: #{sentence_vae_forward.1} parent=1 // pred_fallthru
      _
    // Predicated region
    $region26: #{sentence_vae_forward.1} parent=1 // pred_check
      _
    $region27: #{sentence_vae_forward.1} parent=1 // pred_check_branch
      %72 = sbr.rel (0) target = $region29
    $region28: #{sentence_vae_forward.1} parent=1 // pred_region
      _
    $region29: #{sentence_vae_forward.1} parent=1 // pred_fallthru
      _
    // Predicated region
    $region30: #{sentence_vae_forward.1} parent=1 // pred_check
      _
    $region31: #{sentence_vae_forward.1} parent=1 // pred_check_branch
      %74 = sbr.rel (0) target = $region33
    $region32: #{sentence_vae_forward.1} parent=1 // pred_region
      %s76 = ssub.s32 256, 256
      %77 = vsyncadd [#allocation6], %s76
      %s78 = sshll.u32 [#allocation7], 4
      %s79 = int_to_ptr.vmem [resolvable:$true] %s78
      %84 = dma.hbm_to_vmem [thread:$0]  %s7, 256, %s79, [#allocation6], 128, 128, 8
    $region33: #{sentence_vae_forward.1} parent=1 // pred_fallthru
      _
    // Predicated region
    $region34: #{sentence_vae_forward.1} parent=1 // pred_check
      _
    $region35: #{sentence_vae_forward.1} parent=1 // pred_check_branch
      %86 = sbr.rel (0) target = $region37
    $region36: #{sentence_vae_forward.1} parent=1 // pred_region
      %s88 = ssub.s32 512, 512
      %89 = vsyncadd [#allocation9], %s88
      %s90 = sshll.u32 [#allocation8], 4
      %s91 = int_to_ptr.vmem [resolvable:$true] %s90
      %96 = dma.hbm_to_vmem [thread:$0]  %s8, 512, %s91, [#allocation9], 128, 128, 8
    $region37: #{sentence_vae_forward.1} parent=1 // pred_fallthru
      _
    // Predicated region
    $region38: #{sentence_vae_forward.1} parent=1 // pred_check
      _
    $region39: #{sentence_vae_forward.1} parent=1 // pred_check_branch
      %98 = sbr.rel (0) target = $region41
    $region40: #{sentence_vae_forward.1} parent=1 // pred_region
      _
    $region41: #{sentence_vae_forward.1} parent=1 // pred_fallthru
      _
    // Predicated region
    $region42: #{sentence_vae_forward.1} parent=1 // pred_check
      _
    $region43: #{sentence_vae_forward.1} parent=1 // pred_check_branch
      %100 = sbr.rel (0) target = $region45
    $region44: #{sentence_vae_forward.1} parent=1 // pred_region
      _
    $region45: #{sentence_vae_forward.1} parent=1 // pred_fallthru
      _
    // Predicated region
    $region46: #{sentence_vae_forward.1} parent=1 // pred_check
      _
    $region47: #{sentence_vae_forward.1} parent=1 // pred_check_branch
      %102 = sbr.rel (0) target = $region49
    $region48: #{sentence_vae_forward.1} parent=1 // pred_region
      %s104 = ssub.s32 512, 512
      %105 = vsyncadd [#allocation9], %s104
      %s106 = sshll.u32 [#allocation10], 4
      %s107 = int_to_ptr.vmem [resolvable:$true] %s106
      %112 = dma.hbm_to_vmem [thread:$0]  %s11, 512, %s107, [#allocation9], 128, 128, 8
    $region49: #{sentence_vae_forward.1} parent=1 // pred_fallthru
      _
    // Predicated region
    $region50: #{sentence_vae_forward.1} parent=1 // pred_check
      _
    $region51: #{sentence_vae_forward.1} parent=1 // pred_check_branch
      %114 = sbr.rel (0) target = $region53
    $region52: #{sentence_vae_forward.1} parent=1 // pred_region
      %s116 = ssub.s32 512, 512
      %117 = vsyncadd [#allocation12], %s116
      %s118 = sshll.u32 [#allocation11], 4
      %s119 = int_to_ptr.vmem [resolvable:$true] %s118
      %124 = dma.hbm_to_vmem [thread:$0]  %s12, 512, %s119, [#allocation12], 128, 128, 8
    $region53: #{sentence_vae_forward.1} parent=1 // pred_fallthru
      _
    // Predicated region
    $region54: #{sentence_vae_forward.1} parent=1 // pred_check
      _
    $region55: #{sentence_vae_forward.1} parent=1 // pred_check_branch
      %126 = sbr.rel (0) target = $region57
    $region56: #{sentence_vae_forward.1} parent=1 // pred_region
      _
    $region57: #{sentence_vae_forward.1} parent=1 // pred_fallthru
      _
    // Predicated region
    $region58: #{sentence_vae_forward.1} parent=1 // pred_check
      _
    $region59: #{sentence_vae_forward.1} parent=1 // pred_check_branch
      %128 = sbr.rel (0) target = $region61
    $region60: #{sentence_vae_forward.1} parent=1 // pred_region
      %s130 = ssub.s32 256, 256
      %131 = vsyncadd [#allocation12], %s130
      %s132 = sshll.u32 [#allocation13], 4
      %s133 = int_to_ptr.vmem [resolvable:$true] %s132
      %138 = dma.hbm_to_vmem [thread:$0]  %s14, 256, %s133, [#allocation12], 128, 128, 8
    $region61: #{sentence_vae_forward.1} parent=1 // pred_fallthru
      _
    // Predicated region
    $region62: #{sentence_vae_forward.1} parent=1 // pred_check
      _
    $region63: #{sentence_vae_forward.1} parent=1 // pred_check_branch
      %140 = sbr.rel (0) target = $region65
    $region64: #{sentence_vae_forward.1} parent=1 // pred_region
      %s142 = ssub.s32 512, 512
      %143 = vsyncadd [#allocation15], %s142
      %s144 = sshll.u32 [#allocation14], 4
      %s145 = int_to_ptr.vmem [resolvable:$true] %s144
      %150 = dma.hbm_to_vmem [thread:$0]  %s15, 512, %s145, [#allocation15], 128, 128, 8
    $region65: #{sentence_vae_forward.1} parent=1 // pred_fallthru
      _
    // Predicated region
    $region66: #{sentence_vae_forward.1} parent=1 // pred_check
      _
    $region67: #{sentence_vae_forward.1} parent=1 // pred_check_branch
      %152 = sbr.rel (0) target = $region69
    $region68: #{sentence_vae_forward.1} parent=1 // pred_region
      %s154 = ssub.s32 16, 16
      %155 = vsyncadd [#allocation15], %s154
      %s157 = sshll.u32 [#allocation16], 4
      %s158 = int_to_ptr.vmem [resolvable:$true] %s157
      %160 = dma.hbm_to_vmem [thread:$0]  %s16, 16, %s158, [#allocation15]
    $region69: #{sentence_vae_forward.1} parent=1 // pred_fallthru
      _
    // Predicated region
    $region70: #{sentence_vae_forward.1} parent=1 // pred_check
      _
    $region71: #{sentence_vae_forward.1} parent=1 // pred_check_branch
      %162 = sbr.rel (0) target = $region73
    $region72: #{sentence_vae_forward.1} parent=1 // pred_region
      %s164 = ssub.s32 16, 16
      %165 = vsyncadd [#allocation18], %s164
      %s167 = sshll.u32 [#allocation17], 4
      %s168 = int_to_ptr.vmem [resolvable:$true] %s167
      %170 = dma.hbm_to_vmem [thread:$0]  %s17, 16, %s168, [#allocation18]
    $region73: #{sentence_vae_forward.1} parent=1 // pred_fallthru
      _
    // Predicated region
    $region74: #{sentence_vae_forward.1} parent=1 // pred_check
      _
    $region75: #{sentence_vae_forward.1} parent=1 // pred_check_branch
      %172 = sbr.rel (0) target = $region77
    $region76: #{sentence_vae_forward.1} parent=1 // pred_region
      %s174 = ssub.s32 512, 512
      %175 = vsyncadd [#allocation18], %s174
      %s176 = sshll.u32 [#allocation19], 4
      %s177 = int_to_ptr.vmem [resolvable:$true] %s176
      %182 = dma.hbm_to_vmem [thread:$0]  %s18, 512, %s177, [#allocation18], 128, 128, 8
    $region77: #{sentence_vae_forward.1} parent=1 // pred_fallthru
      _
    // Predicated region
    $region78: #{sentence_vae_forward.1} parent=1 // pred_check
      _
    $region79: #{sentence_vae_forward.1} parent=1 // pred_check_branch
      %184 = sbr.rel (0) target = $region81
    $region80: #{sentence_vae_forward.1} parent=1 // pred_region
      %s186 = ssub.s32 16, 16
      %187 = vsyncadd [#allocation21], %s186
      %s189 = sshll.u32 [#allocation20], 4
      %s190 = int_to_ptr.vmem [resolvable:$true] %s189
      %192 = dma.hbm_to_vmem [thread:$0]  %s19, 16, %s190, [#allocation21]
    $region81: #{sentence_vae_forward.1} parent=1 // pred_fallthru
      _
    // Predicated region
    $region82: #{sentence_vae_forward.1} parent=1 // pred_check
      _
    $region83: #{sentence_vae_forward.1} parent=1 // pred_check_branch
      %194 = sbr.rel (0) target = $region85
    $region84: #{sentence_vae_forward.1} parent=1 // pred_region
      %195 = dma.done [#allocation3], 256
    $region85: #{sentence_vae_forward.1} parent=1 // pred_fallthru
      _
    // Predicated region
    $region86: #{sentence_vae_forward.1} parent=1 // pred_check
      _
    $region87: #{sentence_vae_forward.1} parent=1 // pred_check_branch
      %197 = sbr.rel (0) target = $region89
    $region88: #{sentence_vae_forward.1} parent=1 // pred_region
      %198 = dma.done [#allocation6], 512
    $region89: #{sentence_vae_forward.1} parent=1 // pred_fallthru
      _
    // Predicated region
    $region90: #{sentence_vae_forward.1} parent=1 // pred_check
      _
    $region91: #{sentence_vae_forward.1} parent=1 // pred_check_branch
      %200 = sbr.rel (0) target = $region93
    $region92: #{sentence_vae_forward.1} parent=1 // pred_region
      %201 = dma.done [#allocation6], 256
    $region93: #{sentence_vae_forward.1} parent=1 // pred_fallthru
      _
    // Predicated region
    $region94: #{sentence_vae_forward.1} parent=1 // pred_check
      _
    $region95: #{sentence_vae_forward.1} parent=1 // pred_check_branch
      %203 = sbr.rel (0) target = $region97
    $region96: #{sentence_vae_forward.1} parent=1 // pred_region
      %204 = dma.done [#allocation9], 512
    $region97: #{sentence_vae_forward.1} parent=1 // pred_fallthru
      _
    // Predicated region
    $region98: #{sentence_vae_forward.1} parent=1 // pred_check
      _
    $region99: #{sentence_vae_forward.1} parent=1 // pred_check_branch
      %206 = sbr.rel (0) target = $region101
    $region100: #{sentence_vae_forward.1} parent=1 // pred_region
      %207 = dma.done [#allocation9], 512
    $region101: #{sentence_vae_forward.1} parent=1 // pred_fallthru
      _
    // Predicated region
    $region102: #{sentence_vae_forward.1} parent=1 // pred_check
      _
    $region103: #{sentence_vae_forward.1} parent=1 // pred_check_branch
      %209 = sbr.rel (0) target = $region105
    $region104: #{sentence_vae_forward.1} parent=1 // pred_region
      %210 = dma.done [#allocation12], 512
    $region105: #{sentence_vae_forward.1} parent=1 // pred_fallthru
      _
    // Predicated region
    $region106: #{sentence_vae_forward.1} parent=1 // pred_check
      _
    $region107: #{sentence_vae_forward.1} parent=1 // pred_check_branch
      %212 = sbr.rel (0) target = $region109
    $region108: #{sentence_vae_forward.1} parent=1 // pred_region
      %213 = dma.done [#allocation12], 256
    $region109: #{sentence_vae_forward.1} parent=1 // pred_fallthru
      _
    // Predicated region
    $region110: #{sentence_vae_forward.1} parent=1 // pred_check
      _
    $region111: #{sentence_vae_forward.1} parent=1 // pred_check_branch
      %215 = sbr.rel (0) target = $region113
    $region112: #{sentence_vae_forward.1} parent=1 // pred_region
      %216 = dma.done [#allocation15], 512
    $region113: #{sentence_vae_forward.1} parent=1 // pred_fallthru
      _
    // Predicated region
    $region114: #{sentence_vae_forward.1} parent=1 // pred_check
      _
    $region115: #{sentence_vae_forward.1} parent=1 // pred_check_branch
      %218 = sbr.rel (0) target = $region117
    $region116: #{sentence_vae_forward.1} parent=1 // pred_region
      %219 = dma.done [#allocation15], 16
    $region117: #{sentence_vae_forward.1} parent=1 // pred_fallthru
      _
    // Predicated region
    $region118: #{sentence_vae_forward.1} parent=1 // pred_check
      _
    $region119: #{sentence_vae_forward.1} parent=1 // pred_check_branch
      %221 = sbr.rel (0) target = $region121
    $region120: #{sentence_vae_forward.1} parent=1 // pred_region
      %222 = dma.done [#allocation18], 16
    $region121: #{sentence_vae_forward.1} parent=1 // pred_fallthru
      _
    // Predicated region
    $region122: #{sentence_vae_forward.1} parent=1 // pred_check
      _
    $region123: #{sentence_vae_forward.1} parent=1 // pred_check_branch
      %224 = sbr.rel (0) target = $region125
    $region124: #{sentence_vae_forward.1} parent=1 // pred_region
      %225 = dma.done [#allocation18], 512
    $region125: #{sentence_vae_forward.1} parent=1 // pred_fallthru
      _
    // Predicated region
    $region126: #{sentence_vae_forward.1} parent=1 // pred_check
      _
    $region127: #{sentence_vae_forward.1} parent=1 // pred_check_branch
      %227 = sbr.rel (0) target = $region129
    $region128: #{sentence_vae_forward.1} parent=1 // pred_region
      %228 = dma.done [#allocation21], 16
    $region129: #{sentence_vae_forward.1} parent=1 // pred_fallthru
      _
    %v229 = vld [vmem:[%s1] sm:$0xff]
    %v230 = vld [vmem:[%s0] sm:$0xff]
    %v231 = vld [vmem:[%s0 + $0x8] sm:$0xff]
    %v232 = vld [vmem:[%s0 + $0x10] sm:$0xff]
    %v233 = vld [vmem:[%s0 + $0x18] sm:$0xff]
    %v234 = vld [vmem:[%s0 + $0x20] sm:$0xff]
    %v235 = vld [vmem:[%s0 + $0x28] sm:$0xff]
    %v236 = vld [vmem:[%s0 + $0x30] sm:$0xff]
    %v237 = vld [vmem:[%s0 + $0x38] sm:$0xff]
    %v238 = vld [vmem:[#allocation2] sm:$0xff]
    %v239 = vld [vmem:[#allocation2 + $0x8] sm:$0xff]
    %v240 = vld [vmem:[%s5] sm:$0x1]
    %v242 = vlaneseq
    %v243 = vshrl.u32 %v242, 7
    %v244 = vsub.s32 0, %v243
    %v245 = vrot.slane %v240, %v244
    %vm247 = vcmask 130048
    %v249 = vsel %vm247, %v230, 0
    %v252 = vsel %vm247, %v231, 0
    %v255 = vsel %vm247, %v232, 0
    %v258 = vsel %vm247, %v233, 0
    %v261 = vsel %vm247, %v234, 0
    %v264 = vsel %vm247, %v235, 0
    %v267 = vsel %vm247, %v236, 0
    %v270 = vsel %vm247, %v237, 0
    %272 = vmatprep.subr.mxu0 0.0
    %273 = vmatpush1.msra.mxu0 %v238
    %274 = vmatprep.subr.mxu0 0.0
    %275 = vmatpush1.msra.mxu0 %v239
    %276 = vmatprep.subr.mxu0 0.0
    %277 = vmatpush1.msra.mxu0 0.0
    %278 = vmatprep.subr.mxu0 0.0
    %279 = vmatpush1.msra.mxu0 0.0
    %280 = vmatprep.subr.mxu0 0.0
    %281 = vmatpush1.msra.mxu0 0.0
    %282 = vmatprep.subr.mxu0 0.0
    %283 = vmatpush1.msra.mxu0 0.0
    %284 = vmatprep.subr.mxu0 0.0
    %285 = vmatpush1.msra.mxu0 0.0
    %286 = vmatprep.subr.mxu0 0.0
    %287 = vmatpush1.msra.mxu0 0.0
    %288 = vmatprep.subr.mxu0 0.0
    %289 = vmatpush1.msra.mxu0 0.0
    %290 = vmatprep.subr.mxu0 0.0
    %291 = vmatpush1.msra.mxu0 0.0
    %292 = vmatprep.subr.mxu0 0.0
    %293 = vmatpush1.msra.mxu0 0.0
    %294 = vmatprep.subr.mxu0 0.0
    %295 = vmatpush1.msra.mxu0 0.0
    %296 = vmatprep.subr.mxu0 0.0
    %297 = vmatpush1.msra.mxu0 0.0
    %298 = vmatprep.subr.mxu0 0.0
    %299 = vmatpush1.msra.mxu0 0.0
    %300 = vmatprep.subr.mxu0 0.0
    %301 = vmatpush1.msra.mxu0 0.0
    %302 = vmatprep.subr.mxu0 0.0
    %303 = vmatpush1.msra.mxu0 0.0
    %304 = vmatprep.subr.mxu0 0.0
    %305 = vmatpush1.msra.mxu0 0.0
    %306 = vmatprep.subr.mxu0 0.0
    %307 = vmatpush1.msra.mxu0 0.0
    %308 = vmatprep.subr.mxu0 0.0
    %309 = vmatpush1.msra.mxu0 0.0
    %310 = vmatprep.subr.mxu0 0.0
    %311 = vmatpush1.msra.mxu0 0.0
    %312 = vmatprep.subr.mxu0 0.0
    %313 = vmatpush1.msra.mxu0 0.0
    %314 = vmatprep.subr.mxu0 0.0
    %315 = vmatpush1.msra.mxu0 0.0
    %316 = vmatprep.subr.mxu0 0.0
    %317 = vmatpush1.msra.mxu0 0.0
    %318 = vmatprep.subr.mxu0 0.0
    %319 = vmatpush1.msra.mxu0 0.0
    %320 = vmatprep.subr.mxu0 0.0
    %321 = vmatpush1.msra.mxu0 0.0
    %322 = vmatprep.subr.mxu0 0.0
    %323 = vmatpush1.msra.mxu0 0.0
    %324 = vmatprep.subr.mxu0 0.0
    %325 = vmatpush1.msra.mxu0 0.0
    %326 = vmatprep.subr.mxu0 0.0
    %327 = vmatpush1.msra.mxu0 0.0
    %328 = vmatprep.subr.mxu0 0.0
    %329 = vmatpush1.msra.mxu0 0.0
    %330 = vmatprep.subr.mxu0 0.0
    %331 = vmatpush1.msra.mxu0 0.0
    %332 = vmatprep.subr.mxu0 0.0
    %333 = vmatpush1.msra.mxu0 0.0
    %334 = vmatprep.subr.mxu0 0.0
    %335 = vmatpush1.msra.mxu0 0.0
    %336 = vmatprep.mubr.f32.mxu0 0.0
    %337 = vmatmul.mubr.f32.gmra.mrb[0].mxu0 %v249
    %v338 = vpop.f32.mrb[0].mxu0
    %v339 = vadd.f32 %v245, %v338
    %v340 = vpop.f32.mrb[0].mxu0
    %341 = vmatprep.mubr.f32.mxu0 0.0
    %342 = vmatmul.mubr.f32.gmra.mrb[0].mxu0 %v252
    %v343 = vpop.f32.mrb[0].mxu0
    %v344 = vadd.f32 %v245, %v343
    %v345 = vpop.f32.mrb[0].mxu0
    %346 = vmatprep.mubr.f32.mxu0 0.0
    %347 = vmatmul.mubr.f32.gmra.mrb[0].mxu0 %v255
    %v348 = vpop.f32.mrb[0].mxu0
    %v349 = vadd.f32 %v245, %v348
    %v350 = vpop.f32.mrb[0].mxu0
    %351 = vmatprep.mubr.f32.mxu0 0.0
    %352 = vmatmul.mubr.f32.gmra.mrb[0].mxu0 %v258
    %v353 = vpop.f32.mrb[0].mxu0
    %v354 = vadd.f32 %v245, %v353
    %v355 = vpop.f32.mrb[0].mxu0
    %356 = vmatprep.mubr.f32.mxu0 0.0
    %357 = vmatmul.mubr.f32.gmra.mrb[0].mxu0 %v261
    %v358 = vpop.f32.mrb[0].mxu0
    %v359 = vadd.f32 %v245, %v358
    %v360 = vpop.f32.mrb[0].mxu0
    %361 = vmatprep.mubr.f32.mxu0 0.0
    %362 = vmatmul.mubr.f32.gmra.mrb[0].mxu0 %v264
    %v363 = vpop.f32.mrb[0].mxu0
    %v364 = vadd.f32 %v245, %v363
    %v365 = vpop.f32.mrb[0].mxu0
    %366 = vmatprep.mubr.f32.mxu0 0.0
    %367 = vmatmul.mubr.f32.gmra.mrb[0].mxu0 %v267
    %v368 = vpop.f32.mrb[0].mxu0
    %v369 = vadd.f32 %v245, %v368
    %v370 = vpop.f32.mrb[0].mxu0
    %371 = vmatprep.mubr.f32.mxu0 0.0
    %372 = vmatmul.mubr.f32.gmra.mrb[0].mxu0 %v270
    %v373 = vpop.f32.mrb[0].mxu0
    %v374 = vadd.f32 %v245, %v373
    %v375 = vpop.f32.mrb[0].mxu0
    %376 = vdwg.mxu0
    %v377 = vld [vmem:[#allocation7] sm:$0xff]
    %v378 = vld [vmem:[#allocation7 + $0x8] sm:$0xff]
    %v379 = vld [vmem:[%s9] sm:$0x1]
    %v381 = vlaneseq
    %v382 = vshrl.u32 %v381, 7
    %v383 = vsub.s32 0, %v382
    %v384 = vrot.slane %v379, %v383
    %386 = vmatprep.subr.mxu0 0.0
    %387 = vmatpush1.msra.mxu0 %v377
    %388 = vmatprep.subr.mxu0 0.0
    %389 = vmatpush1.msra.mxu0 %v378
    %390 = vmatprep.subr.mxu0 0.0
    %391 = vmatpush1.msra.mxu0 0.0
    %392 = vmatprep.subr.mxu0 0.0
    %393 = vmatpush1.msra.mxu0 0.0
    %394 = vmatprep.subr.mxu0 0.0
    %395 = vmatpush1.msra.mxu0 0.0
    %396 = vmatprep.subr.mxu0 0.0
    %397 = vmatpush1.msra.mxu0 0.0
    %398 = vmatprep.subr.mxu0 0.0
    %399 = vmatpush1.msra.mxu0 0.0
    %400 = vmatprep.subr.mxu0 0.0
    %401 = vmatpush1.msra.mxu0 0.0
    %402 = vmatprep.subr.mxu0 0.0
    %403 = vmatpush1.msra.mxu0 0.0
    %404 = vmatprep.subr.mxu0 0.0
    %405 = vmatpush1.msra.mxu0 0.0
    %406 = vmatprep.subr.mxu0 0.0
    %407 = vmatpush1.msra.mxu0 0.0
    %408 = vmatprep.subr.mxu0 0.0
    %409 = vmatpush1.msra.mxu0 0.0
    %410 = vmatprep.subr.mxu0 0.0
    %411 = vmatpush1.msra.mxu0 0.0
    %412 = vmatprep.subr.mxu0 0.0
    %413 = vmatpush1.msra.mxu0 0.0
    %414 = vmatprep.subr.mxu0 0.0
    %415 = vmatpush1.msra.mxu0 0.0
    %416 = vmatprep.subr.mxu0 0.0
    %417 = vmatpush1.msra.mxu0 0.0
    %418 = vmatprep.subr.mxu0 0.0
    %419 = vmatpush1.msra.mxu0 0.0
    %420 = vmatprep.subr.mxu0 0.0
    %421 = vmatpush1.msra.mxu0 0.0
    %422 = vmatprep.subr.mxu0 0.0
    %423 = vmatpush1.msra.mxu0 0.0
    %424 = vmatprep.subr.mxu0 0.0
    %425 = vmatpush1.msra.mxu0 0.0
    %426 = vmatprep.subr.mxu0 0.0
    %427 = vmatpush1.msra.mxu0 0.0
    %428 = vmatprep.subr.mxu0 0.0
    %429 = vmatpush1.msra.mxu0 0.0
    %430 = vmatprep.subr.mxu0 0.0
    %431 = vmatpush1.msra.mxu0 0.0
    %432 = vmatprep.subr.mxu0 0.0
    %433 = vmatpush1.msra.mxu0 0.0
    %434 = vmatprep.subr.mxu0 0.0
    %435 = vmatpush1.msra.mxu0 0.0
    %436 = vmatprep.subr.mxu0 0.0
    %437 = vmatpush1.msra.mxu0 0.0
    %438 = vmatprep.subr.mxu0 0.0
    %439 = vmatpush1.msra.mxu0 0.0
    %440 = vmatprep.subr.mxu0 0.0
    %441 = vmatpush1.msra.mxu0 0.0
    %442 = vmatprep.subr.mxu0 0.0
    %443 = vmatpush1.msra.mxu0 0.0
    %444 = vmatprep.subr.mxu0 0.0
    %445 = vmatpush1.msra.mxu0 0.0
    %446 = vmatprep.subr.mxu0 0.0
    %447 = vmatpush1.msra.mxu0 0.0
    %448 = vmatprep.subr.mxu0 0.0
    %449 = vmatpush1.msra.mxu0 0.0
    %450 = vmatprep.mubr.f32.mxu0 0.0
    %451 = vmatmul.mubr.f32.gmra.mrb[0].mxu0 %v249
    %v452 = vpop.f32.mrb[0].mxu0
    %v453 = vadd.f32 %v384, %v452
    %v454 = vpop.f32.mrb[0].mxu0
    %455 = vmatprep.mubr.f32.mxu0 0.0
    %456 = vmatmul.mubr.f32.gmra.mrb[0].mxu0 %v252
    %v457 = vpop.f32.mrb[0].mxu0
    %v458 = vadd.f32 %v384, %v457
    %v459 = vpop.f32.mrb[0].mxu0
    %460 = vmatprep.mubr.f32.mxu0 0.0
    %461 = vmatmul.mubr.f32.gmra.mrb[0].mxu0 %v255
    %v462 = vpop.f32.mrb[0].mxu0
    %v463 = vadd.f32 %v384, %v462
    %v464 = vpop.f32.mrb[0].mxu0
    %465 = vmatprep.mubr.f32.mxu0 0.0
    %466 = vmatmul.mubr.f32.gmra.mrb[0].mxu0 %v258
    %v467 = vpop.f32.mrb[0].mxu0
    %v468 = vadd.f32 %v384, %v467
    %v469 = vpop.f32.mrb[0].mxu0
    %470 = vmatprep.mubr.f32.mxu0 0.0
    %471 = vmatmul.mubr.f32.gmra.mrb[0].mxu0 %v261
    %v472 = vpop.f32.mrb[0].mxu0
    %v473 = vadd.f32 %v384, %v472
    %v474 = vpop.f32.mrb[0].mxu0
    %475 = vmatprep.mubr.f32.mxu0 0.0
    %476 = vmatmul.mubr.f32.gmra.mrb[0].mxu0 %v264
    %v477 = vpop.f32.mrb[0].mxu0
    %v478 = vadd.f32 %v384, %v477
    %v479 = vpop.f32.mrb[0].mxu0
    %480 = vmatprep.mubr.f32.mxu0 0.0
    %481 = vmatmul.mubr.f32.gmra.mrb[0].mxu0 %v267
    %v482 = vpop.f32.mrb[0].mxu0
    %v483 = vadd.f32 %v384, %v482
    %v484 = vpop.f32.mrb[0].mxu0
    %485 = vmatprep.mubr.f32.mxu0 0.0
    %486 = vmatmul.mubr.f32.gmra.mrb[0].mxu0 %v270
    %v487 = vpop.f32.mrb[0].mxu0
    %v488 = vadd.f32 %v384, %v487
    %v489 = vpop.f32.mrb[0].mxu0
    %490 = vdwg.mxu0
    %v491 = vld [vmem:[#allocation13] sm:$0xff]
    %v492 = vld [vmem:[#allocation13 + $0x8] sm:$0xff]
    %v493 = vld [vmem:[#allocation16] sm:$0x1]
    %v495 = vlaneseq
    %v496 = vshrl.u32 %v495, 7
    %v497 = vsub.s32 0, %v496
    %v498 = vrot.slane %v493, %v497
    %500 = vmatprep.subr.mxu0 0.0
    %501 = vmatpush1.msra.mxu0 %v491
    %502 = vmatprep.subr.mxu0 0.0
    %503 = vmatpush1.msra.mxu0 %v492
    %504 = vmatprep.subr.mxu0 0.0
    %505 = vmatpush1.msra.mxu0 0.0
    %506 = vmatprep.subr.mxu0 0.0
    %507 = vmatpush1.msra.mxu0 0.0
    %508 = vmatprep.subr.mxu0 0.0
    %509 = vmatpush1.msra.mxu0 0.0
    %510 = vmatprep.subr.mxu0 0.0
    %511 = vmatpush1.msra.mxu0 0.0
    %512 = vmatprep.subr.mxu0 0.0
    %513 = vmatpush1.msra.mxu0 0.0
    %514 = vmatprep.subr.mxu0 0.0
    %515 = vmatpush1.msra.mxu0 0.0
    %516 = vmatprep.subr.mxu0 0.0
    %517 = vmatpush1.msra.mxu0 0.0
    %518 = vmatprep.subr.mxu0 0.0
    %519 = vmatpush1.msra.mxu0 0.0
    %520 = vmatprep.subr.mxu0 0.0
    %521 = vmatpush1.msra.mxu0 0.0
    %522 = vmatprep.subr.mxu0 0.0
    %523 = vmatpush1.msra.mxu0 0.0
    %524 = vmatprep.subr.mxu0 0.0
    %525 = vmatpush1.msra.mxu0 0.0
    %526 = vmatprep.subr.mxu0 0.0
    %527 = vmatpush1.msra.mxu0 0.0
    %528 = vmatprep.subr.mxu0 0.0
    %529 = vmatpush1.msra.mxu0 0.0
    %530 = vmatprep.subr.mxu0 0.0
    %531 = vmatpush1.msra.mxu0 0.0
    %532 = vmatprep.subr.mxu0 0.0
    %533 = vmatpush1.msra.mxu0 0.0
    %534 = vmatprep.subr.mxu0 0.0
    %535 = vmatpush1.msra.mxu0 0.0
    %536 = vmatprep.subr.mxu0 0.0
    %537 = vmatpush1.msra.mxu0 0.0
    %538 = vmatprep.subr.mxu0 0.0
    %539 = vmatpush1.msra.mxu0 0.0
    %540 = vmatprep.subr.mxu0 0.0
    %541 = vmatpush1.msra.mxu0 0.0
    %542 = vmatprep.subr.mxu0 0.0
    %543 = vmatpush1.msra.mxu0 0.0
    %544 = vmatprep.subr.mxu0 0.0
    %545 = vmatpush1.msra.mxu0 0.0
    %546 = vmatprep.subr.mxu0 0.0
    %547 = vmatpush1.msra.mxu0 0.0
    %548 = vmatprep.subr.mxu0 0.0
    %549 = vmatpush1.msra.mxu0 0.0
    %550 = vmatprep.subr.mxu0 0.0
    %551 = vmatpush1.msra.mxu0 0.0
    %552 = vmatprep.subr.mxu0 0.0
    %553 = vmatpush1.msra.mxu0 0.0
    %554 = vmatprep.subr.mxu0 0.0
    %555 = vmatpush1.msra.mxu0 0.0
    %556 = vmatprep.subr.mxu0 0.0
    %557 = vmatpush1.msra.mxu0 0.0
    %558 = vmatprep.subr.mxu0 0.0
    %559 = vmatpush1.msra.mxu0 0.0
    %560 = vmatprep.subr.mxu0 0.0
    %561 = vmatpush1.msra.mxu0 0.0
    %562 = vmatprep.subr.mxu0 0.0
    %563 = vmatpush1.msra.mxu0 0.0
    %564 = vmatprep.mubr.f32.mxu0 0.0
    %565 = vmatmul.mubr.f32.gmra.mrb[0].mxu0 %v249
    %v566 = vpop.f32.mrb[0].mxu0
    %v567 = vadd.f32 %v498, %v566
    %v568 = vpop.f32.mrb[0].mxu0
    %569 = vmatprep.mubr.f32.mxu0 0.0
    %570 = vmatmul.mubr.f32.gmra.mrb[0].mxu0 %v252
    %v571 = vpop.f32.mrb[0].mxu0
    %v572 = vadd.f32 %v498, %v571
    %v573 = vpop.f32.mrb[0].mxu0
    %574 = vmatprep.mubr.f32.mxu0 0.0
    %575 = vmatmul.mubr.f32.gmra.mrb[0].mxu0 %v255
    %v576 = vpop.f32.mrb[0].mxu0
    %v577 = vadd.f32 %v498, %v576
    %v578 = vpop.f32.mrb[0].mxu0
    %579 = vmatprep.mubr.f32.mxu0 0.0
    %580 = vmatmul.mubr.f32.gmra.mrb[0].mxu0 %v258
    %v581 = vpop.f32.mrb[0].mxu0
    %v582 = vadd.f32 %v498, %v581
    %v583 = vpop.f32.mrb[0].mxu0
    %584 = vmatprep.mubr.f32.mxu0 0.0
    %585 = vmatmul.mubr.f32.gmra.mrb[0].mxu0 %v261
    %v586 = vpop.f32.mrb[0].mxu0
    %v587 = vadd.f32 %v498, %v586
    %v588 = vpop.f32.mrb[0].mxu0
    %589 = vmatprep.mubr.f32.mxu0 0.0
    %590 = vmatmul.mubr.f32.gmra.mrb[0].mxu0 %v264
    %v591 = vpop.f32.mrb[0].mxu0
    %v592 = vadd.f32 %v498, %v591
    %v593 = vpop.f32.mrb[0].mxu0
    %594 = vmatprep.mubr.f32.mxu0 0.0
    %595 = vmatmul.mubr.f32.gmra.mrb[0].mxu0 %v267
    %v596 = vpop.f32.mrb[0].mxu0
    %v597 = vadd.f32 %v498, %v596
    %v598 = vpop.f32.mrb[0].mxu0
    %599 = vmatprep.mubr.f32.mxu0 0.0
    %600 = vmatmul.mubr.f32.gmra.mrb[0].mxu0 %v270
    %v601 = vpop.f32.mrb[0].mxu0
    %v602 = vadd.f32 %v498, %v601
    %v603 = vpop.f32.mrb[0].mxu0
    %604 = vdwg.mxu0
    %v605 = vld [vmem:[#allocation5] sm:$0xff]
    %v606 = vld [vmem:[#allocation5 + $0x8] sm:$0xff]
    %v607 = vld [vmem:[#allocation5 + $0x10] sm:$0xff]
    %v608 = vld [vmem:[#allocation5 + $0x18] sm:$0xff]
    %v609 = vld [vmem:[#allocation8] sm:$0xff]
    %v610 = vld [vmem:[#allocation8 + $0x8] sm:$0xff]
    %v611 = vld [vmem:[#allocation8 + $0x10] sm:$0xff]
    %v612 = vld [vmem:[#allocation8 + $0x18] sm:$0xff]
    %v613 = vld [vmem:[#allocation14] sm:$0xff]
    %v614 = vld [vmem:[#allocation14 + $0x8] sm:$0xff]
    %v615 = vld [vmem:[#allocation14 + $0x10] sm:$0xff]
    %v616 = vld [vmem:[#allocation14 + $0x18] sm:$0xff]
    %v617 = vld [vmem:[%s6] sm:$0x1]
    %v619 = vlaneseq
    %v620 = vshrl.u32 %v619, 7
    %v621 = vsub.s32 0, %v620
    %v622 = vrot.slane %v617, %v621
    %v624 = vld [vmem:[%s10] sm:$0x1]
    %v626 = vlaneseq
    %v627 = vshrl.u32 %v626, 7
    %v628 = vsub.s32 0, %v627
    %v629 = vrot.slane %v624, %v628
    %v631 = vld [vmem:[#allocation17] sm:$0x1]
    %v633 = vlaneseq
    %v634 = vshrl.u32 %v633, 7
    %v635 = vsub.s32 0, %v634
    %v636 = vrot.slane %v631, %v635
    %vm638 = vcmask 261120
    %v640 = vsel %vm638, 0.0, 0
    %642 = vmatprep.subr.mxu0 0.0
    %643 = vmatpush1.msra.mxu0 %v605
    %644 = vmatprep.subr.mxu0 0.0
    %645 = vmatpush1.msra.mxu0 %v606
    %646 = vmatprep.subr.mxu0 0.0
    %647 = vmatpush1.msra.mxu0 %v607
    %648 = vmatprep.subr.mxu0 0.0
    %649 = vmatpush1.msra.mxu0 %v608
    %650 = vmatprep.subr.mxu0 0.0
    %651 = vmatpush1.msra.mxu0 0.0
    %652 = vmatprep.subr.mxu0 0.0
    %653 = vmatpush1.msra.mxu0 0.0
    %654 = vmatprep.subr.mxu0 0.0
    %655 = vmatpush1.msra.mxu0 0.0
    %656 = vmatprep.subr.mxu0 0.0
    %657 = vmatpush1.msra.mxu0 0.0
    %658 = vmatprep.subr.mxu0 0.0
    %659 = vmatpush1.msra.mxu0 0.0
    %660 = vmatprep.subr.mxu0 0.0
    %661 = vmatpush1.msra.mxu0 0.0
    %662 = vmatprep.subr.mxu0 0.0
    %663 = vmatpush1.msra.mxu0 0.0
    %664 = vmatprep.subr.mxu0 0.0
    %665 = vmatpush1.msra.mxu0 0.0
    %666 = vmatprep.subr.mxu0 0.0
    %667 = vmatpush1.msra.mxu0 0.0
    %668 = vmatprep.subr.mxu0 0.0
    %669 = vmatpush1.msra.mxu0 0.0
    %670 = vmatprep.subr.mxu0 0.0
    %671 = vmatpush1.msra.mxu0 0.0
    %672 = vmatprep.subr.mxu0 0.0
    %673 = vmatpush1.msra.mxu0 0.0
    %674 = vmatprep.subr.mxu0 0.0
    %675 = vmatpush1.msra.mxu0 0.0
    %676 = vmatprep.subr.mxu0 0.0
    %677 = vmatpush1.msra.mxu0 0.0
    %678 = vmatprep.subr.mxu0 0.0
    %679 = vmatpush1.msra.mxu0 0.0
    %680 = vmatprep.subr.mxu0 0.0
    %681 = vmatpush1.msra.mxu0 0.0
    %682 = vmatprep.subr.mxu0 0.0
    %683 = vmatpush1.msra.mxu0 0.0
    %684 = vmatprep.subr.mxu0 0.0
    %685 = vmatpush1.msra.mxu0 0.0
    %686 = vmatprep.subr.mxu0 0.0
    %687 = vmatpush1.msra.mxu0 0.0
    %688 = vmatprep.subr.mxu0 0.0
    %689 = vmatpush1.msra.mxu0 0.0
    %690 = vmatprep.subr.mxu0 0.0
    %691 = vmatpush1.msra.mxu0 0.0
    %692 = vmatprep.subr.mxu0 0.0
    %693 = vmatpush1.msra.mxu0 0.0
    %694 = vmatprep.subr.mxu0 0.0
    %695 = vmatpush1.msra.mxu0 0.0
    %696 = vmatprep.subr.mxu0 0.0
    %697 = vmatpush1.msra.mxu0 0.0
    %698 = vmatprep.subr.mxu0 0.0
    %699 = vmatpush1.msra.mxu0 0.0
    %700 = vmatprep.subr.mxu0 0.0
    %701 = vmatpush1.msra.mxu0 0.0
    %702 = vmatprep.subr.mxu0 0.0
    %703 = vmatpush1.msra.mxu0 0.0
    %704 = vmatprep.subr.mxu0 0.0
    %705 = vmatpush1.msra.mxu0 0.0
    %706 = vmatprep.mubr.f32.mxu0 0.0
    %707 = vmatmul.mubr.f32.gmra.mrb[0].mxu0 %v640
    %v708 = vpop.f32.mrb[0].mxu0
    %v709 = vadd.f32 %v622, %v708
    %v710 = vpop.f32.mrb[0].mxu0
    %711 = vdwg.mxu0
    %v712 = vadd.f32 %v339, %v709
    %v713 = vxor.u32 %v712, 2147483648
    %v714 = vmul.f32 %v713, 1.442695
    %v715 = vpow.pop %v714
    %v716 = vadd.f32 %v715, 1.0
    %v717 = vrcp.pop %v716
    %v718 = vmul.f32 1.0, %v717
    %720 = vrot.lane.b32.xlu0 %v709, 64
    %v721 = vpop.permute.xlu0 %720
    %v723 = vmul.f32 %v718, %v721
    %725 = vrot.lane.b32.xlu0 %v723, 64
    %v726 = vpop.permute.xlu0 %725
    %v728 = vadd.f32 %v339, %v726
    %v729 = vtanh.pop %v728
    %v730 = vsub.f32 1.0, %v718
    %732 = vrot.lane.b32.xlu0 %v729, 96
    %v733 = vpop.permute.xlu0 %732
    %v735 = vmul.f32 %v730, %v733
    %v736 = vmul.f32 %v718, 0.0
    %v737 = vadd.f32 %v735, %v736
    %738 = vmatprep.subr.mxu0 0.0
    %739 = vmatpush1.msra.mxu0 %v609
    %740 = vmatprep.subr.mxu0 0.0
    %741 = vmatpush1.msra.mxu0 %v610
    %742 = vmatprep.subr.mxu0 0.0
    %743 = vmatpush1.msra.mxu0 %v611
    %744 = vmatprep.subr.mxu0 0.0
    %745 = vmatpush1.msra.mxu0 %v612
    %746 = vmatprep.subr.mxu0 0.0
    %747 = vmatpush1.msra.mxu0 0.0
    %748 = vmatprep.subr.mxu0 0.0
    %749 = vmatpush1.msra.mxu0 0.0
    %750 = vmatprep.subr.mxu0 0.0
    %751 = vmatpush1.msra.mxu0 0.0
    %752 = vmatprep.subr.mxu0 0.0
    %753 = vmatpush1.msra.mxu0 0.0
    %754 = vmatprep.subr.mxu0 0.0
    %755 = vmatpush1.msra.mxu0 0.0
    %756 = vmatprep.subr.mxu0 0.0
    %757 = vmatpush1.msra.mxu0 0.0
    %758 = vmatprep.subr.mxu0 0.0
    %759 = vmatpush1.msra.mxu0 0.0
    %760 = vmatprep.subr.mxu0 0.0
    %761 = vmatpush1.msra.mxu0 0.0
    %762 = vmatprep.subr.mxu0 0.0
    %763 = vmatpush1.msra.mxu0 0.0
    %764 = vmatprep.subr.mxu0 0.0
    %765 = vmatpush1.msra.mxu0 0.0
    %766 = vmatprep.subr.mxu0 0.0
    %767 = vmatpush1.msra.mxu0 0.0
    %768 = vmatprep.subr.mxu0 0.0
    %769 = vmatpush1.msra.mxu0 0.0
    %770 = vmatprep.subr.mxu0 0.0
    %771 = vmatpush1.msra.mxu0 0.0
    %772 = vmatprep.subr.mxu0 0.0
    %773 = vmatpush1.msra.mxu0 0.0
    %774 = vmatprep.subr.mxu0 0.0
    %775 = vmatpush1.msra.mxu0 0.0
    %776 = vmatprep.subr.mxu0 0.0
    %777 = vmatpush1.msra.mxu0 0.0
    %778 = vmatprep.subr.mxu0 0.0
    %779 = vmatpush1.msra.mxu0 0.0
    %780 = vmatprep.subr.mxu0 0.0
    %781 = vmatpush1.msra.mxu0 0.0
    %782 = vmatprep.subr.mxu0 0.0
    %783 = vmatpush1.msra.mxu0 0.0
    %784 = vmatprep.subr.mxu0 0.0
    %785 = vmatpush1.msra.mxu0 0.0
    %786 = vmatprep.subr.mxu0 0.0
    %787 = vmatpush1.msra.mxu0 0.0
    %788 = vmatprep.subr.mxu0 0.0
    %789 = vmatpush1.msra.mxu0 0.0
    %790 = vmatprep.subr.mxu0 0.0
    %791 = vmatpush1.msra.mxu0 0.0
    %792 = vmatprep.subr.mxu0 0.0
    %793 = vmatpush1.msra.mxu0 0.0
    %794 = vmatprep.subr.mxu0 0.0
    %795 = vmatpush1.msra.mxu0 0.0
    %796 = vmatprep.subr.mxu0 0.0
    %797 = vmatpush1.msra.mxu0 0.0
    %798 = vmatprep.subr.mxu0 0.0
    %799 = vmatpush1.msra.mxu0 0.0
    %800 = vmatprep.subr.mxu0 0.0
    %801 = vmatpush1.msra.mxu0 0.0
    %802 = vmatprep.mubr.f32.mxu0 0.0
    %803 = vmatmul.mubr.f32.gmra.mrb[0].mxu0 %v640
    %v804 = vpop.f32.mrb[0].mxu0
    %v805 = vadd.f32 %v629, %v804
    %v806 = vpop.f32.mrb[0].mxu0
    %807 = vdwg.mxu0
    %v808 = vadd.f32 %v488, %v805
    %v809 = vxor.u32 %v808, 2147483648
    %v810 = vmul.f32 %v809, 1.442695
    %v811 = vpow.pop %v810
    %v812 = vadd.f32 %v811, 1.0
    %v813 = vrcp.pop %v812
    %v814 = vmul.f32 1.0, %v813
    %816 = vrot.lane.b32.xlu0 %v805, 64
    %v817 = vpop.permute.xlu0 %816
    %v819 = vmul.f32 %v814, %v817
    %821 = vrot.lane.b32.xlu0 %v819, 64
    %v822 = vpop.permute.xlu0 %821
    %v824 = vadd.f32 %v488, %v822
    %v825 = vtanh.pop %v824
    %v826 = vsub.f32 1.0, %v814
    %828 = vrot.lane.b32.xlu0 %v825, 96
    %v829 = vpop.permute.xlu0 %828
    %v831 = vmul.f32 %v826, %v829
    %v832 = vmul.f32 %v814, 0.0
    %v833 = vadd.f32 %v831, %v832
    %vm834 = vcmp.gt.s32.totalorder %v229, 0
    %v835 = vsel %vm834, 1, 0
    %836 = vset.pattern.permute.xlu0 0
    %837 = vperm.xlu0 %836, %v835
    %v838 = vpop.permute.xlu0 %837
    %vm839 = vcmp.eq.s32.totalorder %v838, 1
    %v840 = vsel %vm839, %v737, 0.0
    %vm841 = vcmp.gt.s32.totalorder %v229, 7
    %v842 = vsel %vm841, 1, 0
    %843 = vset.pattern.permute.xlu0 0
    %844 = vperm.xlu0 %843, %v842
    %v845 = vpop.permute.xlu0 %844
    %vm846 = vcmp.eq.s32.totalorder %v845, 1
    %v847 = vsel %vm846, %v833, 0.0
    %849 = vrot.lane.b32.xlu0 %v840, 96
    %v850 = vpop.permute.xlu0 %849
    %v851 = vsel %vm638, %v850, 0
    %853 = vmatprep.subr.mxu0 0.0
    %854 = vmatpush1.msra.mxu0 %v605
    %855 = vmatprep.subr.mxu0 0.0
    %856 = vmatpush1.msra.mxu0 %v606
    %857 = vmatprep.subr.mxu0 0.0
    %858 = vmatpush1.msra.mxu0 %v607
    %859 = vmatprep.subr.mxu0 0.0
    %860 = vmatpush1.msra.mxu0 %v608
    %861 = vmatprep.subr.mxu0 0.0
    %862 = vmatpush1.msra.mxu0 0.0
    %863 = vmatprep.subr.mxu0 0.0
    %864 = vmatpush1.msra.mxu0 0.0
    %865 = vmatprep.subr.mxu0 0.0
    %866 = vmatpush1.msra.mxu0 0.0
    %867 = vmatprep.subr.mxu0 0.0
    %868 = vmatpush1.msra.mxu0 0.0
    %869 = vmatprep.subr.mxu0 0.0
    %870 = vmatpush1.msra.mxu0 0.0
    %871 = vmatprep.subr.mxu0 0.0
    %872 = vmatpush1.msra.mxu0 0.0
    %873 = vmatprep.subr.mxu0 0.0
    %874 = vmatpush1.msra.mxu0 0.0
    %875 = vmatprep.subr.mxu0 0.0
    %876 = vmatpush1.msra.mxu0 0.0
    %877 = vmatprep.subr.mxu0 0.0
    %878 = vmatpush1.msra.mxu0 0.0
    %879 = vmatprep.subr.mxu0 0.0
    %880 = vmatpush1.msra.mxu0 0.0
    %881 = vmatprep.subr.mxu0 0.0
    %882 = vmatpush1.msra.mxu0 0.0
    %883 = vmatprep.subr.mxu0 0.0
    %884 = vmatpush1.msra.mxu0 0.0
    %885 = vmatprep.subr.mxu0 0.0
    %886 = vmatpush1.msra.mxu0 0.0
    %887 = vmatprep.subr.mxu0 0.0
    %888 = vmatpush1.msra.mxu0 0.0
    %889 = vmatprep.subr.mxu0 0.0
    %890 = vmatpush1.msra.mxu0 0.0
    %891 = vmatprep.subr.mxu0 0.0
    %892 = vmatpush1.msra.mxu0 0.0
    %893 = vmatprep.subr.mxu0 0.0
    %894 = vmatpush1.msra.mxu0 0.0
    %895 = vmatprep.subr.mxu0 0.0
    %896 = vmatpush1.msra.mxu0 0.0
    %897 = vmatprep.subr.mxu0 0.0
    %898 = vmatpush1.msra.mxu0 0.0
    %899 = vmatprep.subr.mxu0 0.0
    %900 = vmatpush1.msra.mxu0 0.0
    %901 = vmatprep.subr.mxu0 0.0
    %902 = vmatpush1.msra.mxu0 0.0
    %903 = vmatprep.subr.mxu0 0.0
    %904 = vmatpush1.msra.mxu0 0.0
    %905 = vmatprep.subr.mxu0 0.0
    %906 = vmatpush1.msra.mxu0 0.0
    %907 = vmatprep.subr.mxu0 0.0
    %908 = vmatpush1.msra.mxu0 0.0
    %909 = vmatprep.subr.mxu0 0.0
    %910 = vmatpush1.msra.mxu0 0.0
    %911 = vmatprep.subr.mxu0 0.0
    %912 = vmatpush1.msra.mxu0 0.0
    %913 = vmatprep.subr.mxu0 0.0
    %914 = vmatpush1.msra.mxu0 0.0
    %915 = vmatprep.subr.mxu0 0.0
    %916 = vmatpush1.msra.mxu0 0.0
    %917 = vmatprep.mubr.f32.mxu0 0.0
    %918 = vmatmul.mubr.f32.gmra.mrb[0].mxu0 %v851
    %v919 = vpop.f32.mrb[0].mxu0
    %v920 = vadd.f32 %v622, %v919
    %v921 = vpop.f32.mrb[0].mxu0
    %922 = vdwg.mxu0
    %v923 = vadd.f32 %v344, %v920
    %v924 = vxor.u32 %v923, 2147483648
    %v925 = vmul.f32 %v924, 1.442695
    %v926 = vpow.pop %v925
    %v927 = vadd.f32 %v926, 1.0
    %v928 = vrcp.pop %v927
    %v929 = vmul.f32 1.0, %v928
    %931 = vrot.lane.b32.xlu0 %v920, 64
    %v932 = vpop.permute.xlu0 %931
    %v934 = vmul.f32 %v929, %v932
    %936 = vrot.lane.b32.xlu0 %v934, 64
    %v937 = vpop.permute.xlu0 %936
    %v939 = vadd.f32 %v344, %v937
    %v940 = vtanh.pop %v939
    %v941 = vsub.f32 1.0, %v929
    %943 = vrot.lane.b32.xlu0 %v940, 96
    %v944 = vpop.permute.xlu0 %943
    %v946 = vmul.f32 %v941, %v944
    %v947 = vmul.f32 %v929, %v840
    %v948 = vadd.f32 %v946, %v947
    %950 = vrot.lane.b32.xlu0 %v847, 96
    %v951 = vpop.permute.xlu0 %950
    %v952 = vsel %vm638, %v951, 0
    %954 = vmatprep.subr.mxu0 0.0
    %955 = vmatpush1.msra.mxu0 %v609
    %956 = vmatprep.subr.mxu0 0.0
    %957 = vmatpush1.msra.mxu0 %v610
    %958 = vmatprep.subr.mxu0 0.0
    %959 = vmatpush1.msra.mxu0 %v611
    %960 = vmatprep.subr.mxu0 0.0
    %961 = vmatpush1.msra.mxu0 %v612
    %962 = vmatprep.subr.mxu0 0.0
    %963 = vmatpush1.msra.mxu0 0.0
    %964 = vmatprep.subr.mxu0 0.0
    %965 = vmatpush1.msra.mxu0 0.0
    %966 = vmatprep.subr.mxu0 0.0
    %967 = vmatpush1.msra.mxu0 0.0
    %968 = vmatprep.subr.mxu0 0.0
    %969 = vmatpush1.msra.mxu0 0.0
    %970 = vmatprep.subr.mxu0 0.0
    %971 = vmatpush1.msra.mxu0 0.0
    %972 = vmatprep.subr.mxu0 0.0
    %973 = vmatpush1.msra.mxu0 0.0
    %974 = vmatprep.subr.mxu0 0.0
    %975 = vmatpush1.msra.mxu0 0.0
    %976 = vmatprep.subr.mxu0 0.0
    %977 = vmatpush1.msra.mxu0 0.0
    %978 = vmatprep.subr.mxu0 0.0
    %979 = vmatpush1.msra.mxu0 0.0
    %980 = vmatprep.subr.mxu0 0.0
    %981 = vmatpush1.msra.mxu0 0.0
    %982 = vmatprep.subr.mxu0 0.0
    %983 = vmatpush1.msra.mxu0 0.0
    %984 = vmatprep.subr.mxu0 0.0
    %985 = vmatpush1.msra.mxu0 0.0
    %986 = vmatprep.subr.mxu0 0.0
    %987 = vmatpush1.msra.mxu0 0.0
    %988 = vmatprep.subr.mxu0 0.0
    %989 = vmatpush1.msra.mxu0 0.0
    %990 = vmatprep.subr.mxu0 0.0
    %991 = vmatpush1.msra.mxu0 0.0
    %992 = vmatprep.subr.mxu0 0.0
    %993 = vmatpush1.msra.mxu0 0.0
    %994 = vmatprep.subr.mxu0 0.0
    %995 = vmatpush1.msra.mxu0 0.0
    %996 = vmatprep.subr.mxu0 0.0
    %997 = vmatpush1.msra.mxu0 0.0
    %998 = vmatprep.subr.mxu0 0.0
    %999 = vmatpush1.msra.mxu0 0.0
    %1000 = vmatprep.subr.mxu0 0.0
    %1001 = vmatpush1.msra.mxu0 0.0
    %1002 = vmatprep.subr.mxu0 0.0
    %1003 = vmatpush1.msra.mxu0 0.0
    %1004 = vmatprep.subr.mxu0 0.0
    %1005 = vmatpush1.msra.mxu0 0.0
    %1006 = vmatprep.subr.mxu0 0.0
    %1007 = vmatpush1.msra.mxu0 0.0
    %1008 = vmatprep.subr.mxu0 0.0
    %1009 = vmatpush1.msra.mxu0 0.0
    %1010 = vmatprep.subr.mxu0 0.0
    %1011 = vmatpush1.msra.mxu0 0.0
    %1012 = vmatprep.subr.mxu0 0.0
    %1013 = vmatpush1.msra.mxu0 0.0
    %1014 = vmatprep.subr.mxu0 0.0
    %1015 = vmatpush1.msra.mxu0 0.0
    %1016 = vmatprep.subr.mxu0 0.0
    %1017 = vmatpush1.msra.mxu0 0.0
    %1018 = vmatprep.mubr.f32.mxu0 0.0
    %1019 = vmatmul.mubr.f32.gmra.mrb[0].mxu0 %v952
    %v1020 = vpop.f32.mrb[0].mxu0
    %v1021 = vadd.f32 %v629, %v1020
    %v1022 = vpop.f32.mrb[0].mxu0
    %1023 = vdwg.mxu0
    %v1024 = vadd.f32 %v483, %v1021
    %v1025 = vxor.u32 %v1024, 2147483648
    %v1026 = vmul.f32 %v1025, 1.442695
    %v1027 = vpow.pop %v1026
    %v1028 = vadd.f32 %v1027, 1.0
    %v1029 = vrcp.pop %v1028
    %v1030 = vmul.f32 1.0, %v1029
    %1032 = vrot.lane.b32.xlu0 %v1021, 64
    %v1033 = vpop.permute.xlu0 %1032
    %v1035 = vmul.f32 %v1030, %v1033
    %1037 = vrot.lane.b32.xlu0 %v1035, 64
    %v1038 = vpop.permute.xlu0 %1037
    %v1040 = vadd.f32 %v483, %v1038
    %v1041 = vtanh.pop %v1040
    %v1042 = vsub.f32 1.0, %v1030
    %1044 = vrot.lane.b32.xlu0 %v1041, 96
    %v1045 = vpop.permute.xlu0 %1044
    %v1047 = vmul.f32 %v1042, %v1045
    %v1048 = vmul.f32 %v1030, %v847
    %v1049 = vadd.f32 %v1047, %v1048
    %vm1050 = vcmp.gt.s32.totalorder %v229, 1
    %v1051 = vsel %vm1050, 1, 0
    %1052 = vset.pattern.permute.xlu0 0
    %1053 = vperm.xlu0 %1052, %v1051
    %v1054 = vpop.permute.xlu0 %1053
    %vm1055 = vcmp.eq.s32.totalorder %v1054, 1
    %v1056 = vsel %vm1055, %v948, %v840
    %vm1057 = vcmp.gt.s32.totalorder %v229, 6
    %v1058 = vsel %vm1057, 1, 0
    %1059 = vset.pattern.permute.xlu0 0
    %1060 = vperm.xlu0 %1059, %v1058
    %v1061 = vpop.permute.xlu0 %1060
    %vm1062 = vcmp.eq.s32.totalorder %v1061, 1
    %v1063 = vsel %vm1062, %v1049, %v847
    %1065 = vrot.lane.b32.xlu0 %v1056, 96
    %v1066 = vpop.permute.xlu0 %1065
    %v1067 = vsel %vm638, %v1066, 0
    %1069 = vmatprep.subr.mxu0 0.0
    %1070 = vmatpush1.msra.mxu0 %v605
    %1071 = vmatprep.subr.mxu0 0.0
    %1072 = vmatpush1.msra.mxu0 %v606
    %1073 = vmatprep.subr.mxu0 0.0
    %1074 = vmatpush1.msra.mxu0 %v607
    %1075 = vmatprep.subr.mxu0 0.0
    %1076 = vmatpush1.msra.mxu0 %v608
    %1077 = vmatprep.subr.mxu0 0.0
    %1078 = vmatpush1.msra.mxu0 0.0
    %1079 = vmatprep.subr.mxu0 0.0
    %1080 = vmatpush1.msra.mxu0 0.0
    %1081 = vmatprep.subr.mxu0 0.0
    %1082 = vmatpush1.msra.mxu0 0.0
    %1083 = vmatprep.subr.mxu0 0.0
    %1084 = vmatpush1.msra.mxu0 0.0
    %1085 = vmatprep.subr.mxu0 0.0
    %1086 = vmatpush1.msra.mxu0 0.0
    %1087 = vmatprep.subr.mxu0 0.0
    %1088 = vmatpush1.msra.mxu0 0.0
    %1089 = vmatprep.subr.mxu0 0.0
    %1090 = vmatpush1.msra.mxu0 0.0
    %1091 = vmatprep.subr.mxu0 0.0
    %1092 = vmatpush1.msra.mxu0 0.0
    %1093 = vmatprep.subr.mxu0 0.0
    %1094 = vmatpush1.msra.mxu0 0.0
    %1095 = vmatprep.subr.mxu0 0.0
    %1096 = vmatpush1.msra.mxu0 0.0
    %1097 = vmatprep.subr.mxu0 0.0
    %1098 = vmatpush1.msra.mxu0 0.0
    %1099 = vmatprep.subr.mxu0 0.0
    %1100 = vmatpush1.msra.mxu0 0.0
    %1101 = vmatprep.subr.mxu0 0.0
    %1102 = vmatpush1.msra.mxu0 0.0
    %1103 = vmatprep.subr.mxu0 0.0
    %1104 = vmatpush1.msra.mxu0 0.0
    %1105 = vmatprep.subr.mxu0 0.0
    %1106 = vmatpush1.msra.mxu0 0.0
    %1107 = vmatprep.subr.mxu0 0.0
    %1108 = vmatpush1.msra.mxu0 0.0
    %1109 = vmatprep.subr.mxu0 0.0
    %1110 = vmatpush1.msra.mxu0 0.0
    %1111 = vmatprep.subr.mxu0 0.0
    %1112 = vmatpush1.msra.mxu0 0.0
    %1113 = vmatprep.subr.mxu0 0.0
    %1114 = vmatpush1.msra.mxu0 0.0
    %1115 = vmatprep.subr.mxu0 0.0
    %1116 = vmatpush1.msra.mxu0 0.0
    %1117 = vmatprep.subr.mxu0 0.0
    %1118 = vmatpush1.msra.mxu0 0.0
    %1119 = vmatprep.subr.mxu0 0.0
    %1120 = vmatpush1.msra.mxu0 0.0
    %1121 = vmatprep.subr.mxu0 0.0
    %1122 = vmatpush1.msra.mxu0 0.0
    %1123 = vmatprep.subr.mxu0 0.0
    %1124 = vmatpush1.msra.mxu0 0.0
    %1125 = vmatprep.subr.mxu0 0.0
    %1126 = vmatpush1.msra.mxu0 0.0
    %1127 = vmatprep.subr.mxu0 0.0
    %1128 = vmatpush1.msra.mxu0 0.0
    %1129 = vmatprep.subr.mxu0 0.0
    %1130 = vmatpush1.msra.mxu0 0.0
    %1131 = vmatprep.subr.mxu0 0.0
    %1132 = vmatpush1.msra.mxu0 0.0
    %1133 = vmatprep.mubr.f32.mxu0 0.0
    %1134 = vmatmul.mubr.f32.gmra.mrb[0].mxu0 %v1067
    %v1135 = vpop.f32.mrb[0].mxu0
    %v1136 = vadd.f32 %v622, %v1135
    %v1137 = vpop.f32.mrb[0].mxu0
    %1138 = vdwg.mxu0
    %v1139 = vadd.f32 %v349, %v1136
    %v1140 = vxor.u32 %v1139, 2147483648
    %v1141 = vmul.f32 %v1140, 1.442695
    %v1142 = vpow.pop %v1141
    %v1143 = vadd.f32 %v1142, 1.0
    %v1144 = vrcp.pop %v1143
    %v1145 = vmul.f32 1.0, %v1144
    %1147 = vrot.lane.b32.xlu0 %v1136, 64
    %v1148 = vpop.permute.xlu0 %1147
    %v1150 = vmul.f32 %v1145, %v1148
    %1152 = vrot.lane.b32.xlu0 %v1150, 64
    %v1153 = vpop.permute.xlu0 %1152
    %v1155 = vadd.f32 %v349, %v1153
    %v1156 = vtanh.pop %v1155
    %v1157 = vsub.f32 1.0, %v1145
    %1159 = vrot.lane.b32.xlu0 %v1156, 96
    %v1160 = vpop.permute.xlu0 %1159
    %v1162 = vmul.f32 %v1157, %v1160
    %v1163 = vmul.f32 %v1145, %v1056
    %v1164 = vadd.f32 %v1162, %v1163
    %1166 = vrot.lane.b32.xlu0 %v1063, 96
    %v1167 = vpop.permute.xlu0 %1166
    %v1168 = vsel %vm638, %v1167, 0
    %1170 = vmatprep.subr.mxu0 0.0
    %1171 = vmatpush1.msra.mxu0 %v609
    %1172 = vmatprep.subr.mxu0 0.0
    %1173 = vmatpush1.msra.mxu0 %v610
    %1174 = vmatprep.subr.mxu0 0.0
    %1175 = vmatpush1.msra.mxu0 %v611
    %1176 = vmatprep.subr.mxu0 0.0
    %1177 = vmatpush1.msra.mxu0 %v612
    %1178 = vmatprep.subr.mxu0 0.0
    %1179 = vmatpush1.msra.mxu0 0.0
    %1180 = vmatprep.subr.mxu0 0.0
    %1181 = vmatpush1.msra.mxu0 0.0
    %1182 = vmatprep.subr.mxu0 0.0
    %1183 = vmatpush1.msra.mxu0 0.0
    %1184 = vmatprep.subr.mxu0 0.0
    %1185 = vmatpush1.msra.mxu0 0.0
    %1186 = vmatprep.subr.mxu0 0.0
    %1187 = vmatpush1.msra.mxu0 0.0
    %1188 = vmatprep.subr.mxu0 0.0
    %1189 = vmatpush1.msra.mxu0 0.0
    %1190 = vmatprep.subr.mxu0 0.0
    %1191 = vmatpush1.msra.mxu0 0.0
    %1192 = vmatprep.subr.mxu0 0.0
    %1193 = vmatpush1.msra.mxu0 0.0
    %1194 = vmatprep.subr.mxu0 0.0
    %1195 = vmatpush1.msra.mxu0 0.0
    %1196 = vmatprep.subr.mxu0 0.0
    %1197 = vmatpush1.msra.mxu0 0.0
    %1198 = vmatprep.subr.mxu0 0.0
    %1199 = vmatpush1.msra.mxu0 0.0
    %1200 = vmatprep.subr.mxu0 0.0
    %1201 = vmatpush1.msra.mxu0 0.0
    %1202 = vmatprep.subr.mxu0 0.0
    %1203 = vmatpush1.msra.mxu0 0.0
    %1204 = vmatprep.subr.mxu0 0.0
    %1205 = vmatpush1.msra.mxu0 0.0
    %1206 = vmatprep.subr.mxu0 0.0
    %1207 = vmatpush1.msra.mxu0 0.0
    %1208 = vmatprep.subr.mxu0 0.0
    %1209 = vmatpush1.msra.mxu0 0.0
    %1210 = vmatprep.subr.mxu0 0.0
    %1211 = vmatpush1.msra.mxu0 0.0
    %1212 = vmatprep.subr.mxu0 0.0
    %1213 = vmatpush1.msra.mxu0 0.0
    %1214 = vmatprep.subr.mxu0 0.0
    %1215 = vmatpush1.msra.mxu0 0.0
    %1216 = vmatprep.subr.mxu0 0.0
    %1217 = vmatpush1.msra.mxu0 0.0
    %1218 = vmatprep.subr.mxu0 0.0
    %1219 = vmatpush1.msra.mxu0 0.0
    %1220 = vmatprep.subr.mxu0 0.0
    %1221 = vmatpush1.msra.mxu0 0.0
    %1222 = vmatprep.subr.mxu0 0.0
    %1223 = vmatpush1.msra.mxu0 0.0
    %1224 = vmatprep.subr.mxu0 0.0
    %1225 = vmatpush1.msra.mxu0 0.0
    %1226 = vmatprep.subr.mxu0 0.0
    %1227 = vmatpush1.msra.mxu0 0.0
    %1228 = vmatprep.subr.mxu0 0.0
    %1229 = vmatpush1.msra.mxu0 0.0
    %1230 = vmatprep.subr.mxu0 0.0
    %1231 = vmatpush1.msra.mxu0 0.0
    %1232 = vmatprep.subr.mxu0 0.0
    %1233 = vmatpush1.msra.mxu0 0.0
    %1234 = vmatprep.mubr.f32.mxu0 0.0
    %1235 = vmatmul.mubr.f32.gmra.mrb[0].mxu0 %v1168
    %v1236 = vpop.f32.mrb[0].mxu0
    %v1237 = vadd.f32 %v629, %v1236
    %v1238 = vpop.f32.mrb[0].mxu0
    %1239 = vdwg.mxu0
    %v1240 = vadd.f32 %v478, %v1237
    %v1241 = vxor.u32 %v1240, 2147483648
    %v1242 = vmul.f32 %v1241, 1.442695
    %v1243 = vpow.pop %v1242
    %v1244 = vadd.f32 %v1243, 1.0
    %v1245 = vrcp.pop %v1244
    %v1246 = vmul.f32 1.0, %v1245
    %1248 = vrot.lane.b32.xlu0 %v1237, 64
    %v1249 = vpop.permute.xlu0 %1248
    %v1251 = vmul.f32 %v1246, %v1249
    %1253 = vrot.lane.b32.xlu0 %v1251, 64
    %v1254 = vpop.permute.xlu0 %1253
    %v1256 = vadd.f32 %v478, %v1254
    %v1257 = vtanh.pop %v1256
    %v1258 = vsub.f32 1.0, %v1246
    %1260 = vrot.lane.b32.xlu0 %v1257, 96
    %v1261 = vpop.permute.xlu0 %1260
    %v1263 = vmul.f32 %v1258, %v1261
    %v1264 = vmul.f32 %v1246, %v1063
    %v1265 = vadd.f32 %v1263, %v1264
    %vm1266 = vcmp.gt.s32.totalorder %v229, 2
    %v1267 = vsel %vm1266, 1, 0
    %1268 = vset.pattern.permute.xlu0 0
    %1269 = vperm.xlu0 %1268, %v1267
    %v1270 = vpop.permute.xlu0 %1269
    %vm1271 = vcmp.eq.s32.totalorder %v1270, 1
    %v1272 = vsel %vm1271, %v1164, %v1056
    %vm1273 = vcmp.gt.s32.totalorder %v229, 5
    %v1274 = vsel %vm1273, 1, 0
    %1275 = vset.pattern.permute.xlu0 0
    %1276 = vperm.xlu0 %1275, %v1274
    %v1277 = vpop.permute.xlu0 %1276
    %vm1278 = vcmp.eq.s32.totalorder %v1277, 1
    %v1279 = vsel %vm1278, %v1265, %v1063
    %1281 = vrot.lane.b32.xlu0 %v1272, 96
    %v1282 = vpop.permute.xlu0 %1281
    %v1283 = vsel %vm638, %v1282, 0
    %1285 = vmatprep.subr.mxu0 0.0
    %1286 = vmatpush1.msra.mxu0 %v605
    %1287 = vmatprep.subr.mxu0 0.0
    %1288 = vmatpush1.msra.mxu0 %v606
    %1289 = vmatprep.subr.mxu0 0.0
    %1290 = vmatpush1.msra.mxu0 %v607
    %1291 = vmatprep.subr.mxu0 0.0
    %1292 = vmatpush1.msra.mxu0 %v608
    %1293 = vmatprep.subr.mxu0 0.0
    %1294 = vmatpush1.msra.mxu0 0.0
    %1295 = vmatprep.subr.mxu0 0.0
    %1296 = vmatpush1.msra.mxu0 0.0
    %1297 = vmatprep.subr.mxu0 0.0
    %1298 = vmatpush1.msra.mxu0 0.0
    %1299 = vmatprep.subr.mxu0 0.0
    %1300 = vmatpush1.msra.mxu0 0.0
    %1301 = vmatprep.subr.mxu0 0.0
    %1302 = vmatpush1.msra.mxu0 0.0
    %1303 = vmatprep.subr.mxu0 0.0
    %1304 = vmatpush1.msra.mxu0 0.0
    %1305 = vmatprep.subr.mxu0 0.0
    %1306 = vmatpush1.msra.mxu0 0.0
    %1307 = vmatprep.subr.mxu0 0.0
    %1308 = vmatpush1.msra.mxu0 0.0
    %1309 = vmatprep.subr.mxu0 0.0
    %1310 = vmatpush1.msra.mxu0 0.0
    %1311 = vmatprep.subr.mxu0 0.0
    %1312 = vmatpush1.msra.mxu0 0.0
    %1313 = vmatprep.subr.mxu0 0.0
    %1314 = vmatpush1.msra.mxu0 0.0
    %1315 = vmatprep.subr.mxu0 0.0
    %1316 = vmatpush1.msra.mxu0 0.0
    %1317 = vmatprep.subr.mxu0 0.0
    %1318 = vmatpush1.msra.mxu0 0.0
    %1319 = vmatprep.subr.mxu0 0.0
    %1320 = vmatpush1.msra.mxu0 0.0
    %1321 = vmatprep.subr.mxu0 0.0
    %1322 = vmatpush1.msra.mxu0 0.0
    %1323 = vmatprep.subr.mxu0 0.0
    %1324 = vmatpush1.msra.mxu0 0.0
    %1325 = vmatprep.subr.mxu0 0.0
    %1326 = vmatpush1.msra.mxu0 0.0
    %1327 = vmatprep.subr.mxu0 0.0
    %1328 = vmatpush1.msra.mxu0 0.0
    %1329 = vmatprep.subr.mxu0 0.0
    %1330 = vmatpush1.msra.mxu0 0.0
    %1331 = vmatprep.subr.mxu0 0.0
    %1332 = vmatpush1.msra.mxu0 0.0
    %1333 = vmatprep.subr.mxu0 0.0
    %1334 = vmatpush1.msra.mxu0 0.0
    %1335 = vmatprep.subr.mxu0 0.0
    %1336 = vmatpush1.msra.mxu0 0.0
    %1337 = vmatprep.subr.mxu0 0.0
    %1338 = vmatpush1.msra.mxu0 0.0
    %1339 = vmatprep.subr.mxu0 0.0
    %1340 = vmatpush1.msra.mxu0 0.0
    %1341 = vmatprep.subr.mxu0 0.0
    %1342 = vmatpush1.msra.mxu0 0.0
    %1343 = vmatprep.subr.mxu0 0.0
    %1344 = vmatpush1.msra.mxu0 0.0
    %1345 = vmatprep.subr.mxu0 0.0
    %1346 = vmatpush1.msra.mxu0 0.0
    %1347 = vmatprep.subr.mxu0 0.0
    %1348 = vmatpush1.msra.mxu0 0.0
    %1349 = vmatprep.mubr.f32.mxu0 0.0
    %1350 = vmatmul.mubr.f32.gmra.mrb[0].mxu0 %v1283
    %v1351 = vpop.f32.mrb[0].mxu0
    %v1352 = vadd.f32 %v622, %v1351
    %v1353 = vpop.f32.mrb[0].mxu0
    %1354 = vdwg.mxu0
    %v1355 = vadd.f32 %v354, %v1352
    %v1356 = vxor.u32 %v1355, 2147483648
    %v1357 = vmul.f32 %v1356, 1.442695
    %v1358 = vpow.pop %v1357
    %v1359 = vadd.f32 %v1358, 1.0
    %v1360 = vrcp.pop %v1359
    %v1361 = vmul.f32 1.0, %v1360
    %1363 = vrot.lane.b32.xlu0 %v1352, 64
    %v1364 = vpop.permute.xlu0 %1363
    %v1366 = vmul.f32 %v1361, %v1364
    %1368 = vrot.lane.b32.xlu0 %v1366, 64
    %v1369 = vpop.permute.xlu0 %1368
    %v1371 = vadd.f32 %v354, %v1369
    %v1372 = vtanh.pop %v1371
    %v1373 = vsub.f32 1.0, %v1361
    %1375 = vrot.lane.b32.xlu0 %v1372, 96
    %v1376 = vpop.permute.xlu0 %1375
    %v1378 = vmul.f32 %v1373, %v1376
    %v1379 = vmul.f32 %v1361, %v1272
    %v1380 = vadd.f32 %v1378, %v1379
    %1382 = vrot.lane.b32.xlu0 %v1279, 96
    %v1383 = vpop.permute.xlu0 %1382
    %v1384 = vsel %vm638, %v1383, 0
    %1386 = vmatprep.subr.mxu0 0.0
    %1387 = vmatpush1.msra.mxu0 %v609
    %1388 = vmatprep.subr.mxu0 0.0
    %1389 = vmatpush1.msra.mxu0 %v610
    %1390 = vmatprep.subr.mxu0 0.0
    %1391 = vmatpush1.msra.mxu0 %v611
    %1392 = vmatprep.subr.mxu0 0.0
    %1393 = vmatpush1.msra.mxu0 %v612
    %1394 = vmatprep.subr.mxu0 0.0
    %1395 = vmatpush1.msra.mxu0 0.0
    %1396 = vmatprep.subr.mxu0 0.0
    %1397 = vmatpush1.msra.mxu0 0.0
    %1398 = vmatprep.subr.mxu0 0.0
    %1399 = vmatpush1.msra.mxu0 0.0
    %1400 = vmatprep.subr.mxu0 0.0
    %1401 = vmatpush1.msra.mxu0 0.0
    %1402 = vmatprep.subr.mxu0 0.0
    %1403 = vmatpush1.msra.mxu0 0.0
    %1404 = vmatprep.subr.mxu0 0.0
    %1405 = vmatpush1.msra.mxu0 0.0
    %1406 = vmatprep.subr.mxu0 0.0
    %1407 = vmatpush1.msra.mxu0 0.0
    %1408 = vmatprep.subr.mxu0 0.0
    %1409 = vmatpush1.msra.mxu0 0.0
    %1410 = vmatprep.subr.mxu0 0.0
    %1411 = vmatpush1.msra.mxu0 0.0
    %1412 = vmatprep.subr.mxu0 0.0
    %1413 = vmatpush1.msra.mxu0 0.0
    %1414 = vmatprep.subr.mxu0 0.0
    %1415 = vmatpush1.msra.mxu0 0.0
    %1416 = vmatprep.subr.mxu0 0.0
    %1417 = vmatpush1.msra.mxu0 0.0
    %1418 = vmatprep.subr.mxu0 0.0
    %1419 = vmatpush1.msra.mxu0 0.0
    %1420 = vmatprep.subr.mxu0 0.0
    %1421 = vmatpush1.msra.mxu0 0.0
    %1422 = vmatprep.subr.mxu0 0.0
    %1423 = vmatpush1.msra.mxu0 0.0
    %1424 = vmatprep.subr.mxu0 0.0
    %1425 = vmatpush1.msra.mxu0 0.0
    %1426 = vmatprep.subr.mxu0 0.0
    %1427 = vmatpush1.msra.mxu0 0.0
    %1428 = vmatprep.subr.mxu0 0.0
    %1429 = vmatpush1.msra.mxu0 0.0
    %1430 = vmatprep.subr.mxu0 0.0
    %1431 = vmatpush1.msra.mxu0 0.0
    %1432 = vmatprep.subr.mxu0 0.0
    %1433 = vmatpush1.msra.mxu0 0.0
    %1434 = vmatprep.subr.mxu0 0.0
    %1435 = vmatpush1.msra.mxu0 0.0
    %1436 = vmatprep.subr.mxu0 0.0
    %1437 = vmatpush1.msra.mxu0 0.0
    %1438 = vmatprep.subr.mxu0 0.0
    %1439 = vmatpush1.msra.mxu0 0.0
    %1440 = vmatprep.subr.mxu0 0.0
    %1441 = vmatpush1.msra.mxu0 0.0
    %1442 = vmatprep.subr.mxu0 0.0
    %1443 = vmatpush1.msra.mxu0 0.0
    %1444 = vmatprep.subr.mxu0 0.0
    %1445 = vmatpush1.msra.mxu0 0.0
    %1446 = vmatprep.subr.mxu0 0.0
    %1447 = vmatpush1.msra.mxu0 0.0
    %1448 = vmatprep.subr.mxu0 0.0
    %1449 = vmatpush1.msra.mxu0 0.0
    %1450 = vmatprep.mubr.f32.mxu0 0.0
    %1451 = vmatmul.mubr.f32.gmra.mrb[0].mxu0 %v1384
    %v1452 = vpop.f32.mrb[0].mxu0
    %v1453 = vadd.f32 %v629, %v1452
    %v1454 = vpop.f32.mrb[0].mxu0
    %1455 = vdwg.mxu0
    %v1456 = vadd.f32 %v473, %v1453
    %v1457 = vxor.u32 %v1456, 2147483648
    %v1458 = vmul.f32 %v1457, 1.442695
    %v1459 = vpow.pop %v1458
    %v1460 = vadd.f32 %v1459, 1.0
    %v1461 = vrcp.pop %v1460
    %v1462 = vmul.f32 1.0, %v1461
    %1464 = vrot.lane.b32.xlu0 %v1453, 64
    %v1465 = vpop.permute.xlu0 %1464
    %v1467 = vmul.f32 %v1462, %v1465
    %1469 = vrot.lane.b32.xlu0 %v1467, 64
    %v1470 = vpop.permute.xlu0 %1469
    %v1472 = vadd.f32 %v473, %v1470
    %v1473 = vtanh.pop %v1472
    %v1474 = vsub.f32 1.0, %v1462
    %1476 = vrot.lane.b32.xlu0 %v1473, 96
    %v1477 = vpop.permute.xlu0 %1476
    %v1479 = vmul.f32 %v1474, %v1477
    %v1480 = vmul.f32 %v1462, %v1279
    %v1481 = vadd.f32 %v1479, %v1480
    %vm1482 = vcmp.gt.s32.totalorder %v229, 3
    %v1483 = vsel %vm1482, 1, 0
    %1484 = vset.pattern.permute.xlu0 0
    %1485 = vperm.xlu0 %1484, %v1483
    %v1486 = vpop.permute.xlu0 %1485
    %vm1487 = vcmp.eq.s32.totalorder %v1486, 1
    %v1488 = vsel %vm1487, %v1380, %v1272
    %vm1489 = vcmp.gt.s32.totalorder %v229, 4
    %v1490 = vsel %vm1489, 1, 0
    %1491 = vset.pattern.permute.xlu0 0
    %1492 = vperm.xlu0 %1491, %v1490
    %v1493 = vpop.permute.xlu0 %1492
    %vm1494 = vcmp.eq.s32.totalorder %v1493, 1
    %v1495 = vsel %vm1494, %v1481, %v1279
    %1497 = vrot.lane.b32.xlu0 %v1488, 96
    %v1498 = vpop.permute.xlu0 %1497
    %v1499 = vsel %vm638, %v1498, 0
    %1501 = vmatprep.subr.mxu0 0.0
    %1502 = vmatpush1.msra.mxu0 %v605
    %1503 = vmatprep.subr.mxu0 0.0
    %1504 = vmatpush1.msra.mxu0 %v606
    %1505 = vmatprep.subr.mxu0 0.0
    %1506 = vmatpush1.msra.mxu0 %v607
    %1507 = vmatprep.subr.mxu0 0.0
    %1508 = vmatpush1.msra.mxu0 %v608
    %1509 = vmatprep.subr.mxu0 0.0
    %1510 = vmatpush1.msra.mxu0 0.0
    %1511 = vmatprep.subr.mxu0 0.0
    %1512 = vmatpush1.msra.mxu0 0.0
    %1513 = vmatprep.subr.mxu0 0.0
    %1514 = vmatpush1.msra.mxu0 0.0
    %1515 = vmatprep.subr.mxu0 0.0
    %1516 = vmatpush1.msra.mxu0 0.0
    %1517 = vmatprep.subr.mxu0 0.0
    %1518 = vmatpush1.msra.mxu0 0.0
    %1519 = vmatprep.subr.mxu0 0.0
    %1520 = vmatpush1.msra.mxu0 0.0
    %1521 = vmatprep.subr.mxu0 0.0
    %1522 = vmatpush1.msra.mxu0 0.0
    %1523 = vmatprep.subr.mxu0 0.0
    %1524 = vmatpush1.msra.mxu0 0.0
    %1525 = vmatprep.subr.mxu0 0.0
    %1526 = vmatpush1.msra.mxu0 0.0
    %1527 = vmatprep.subr.mxu0 0.0
    %1528 = vmatpush1.msra.mxu0 0.0
    %1529 = vmatprep.subr.mxu0 0.0
    %1530 = vmatpush1.msra.mxu0 0.0
    %1531 = vmatprep.subr.mxu0 0.0
    %1532 = vmatpush1.msra.mxu0 0.0
    %1533 = vmatprep.subr.mxu0 0.0
    %1534 = vmatpush1.msra.mxu0 0.0
    %1535 = vmatprep.subr.mxu0 0.0
    %1536 = vmatpush1.msra.mxu0 0.0
    %1537 = vmatprep.subr.mxu0 0.0
    %1538 = vmatpush1.msra.mxu0 0.0
    %1539 = vmatprep.subr.mxu0 0.0
    %1540 = vmatpush1.msra.mxu0 0.0
    %1541 = vmatprep.subr.mxu0 0.0
    %1542 = vmatpush1.msra.mxu0 0.0
    %1543 = vmatprep.subr.mxu0 0.0
    %1544 = vmatpush1.msra.mxu0 0.0
    %1545 = vmatprep.subr.mxu0 0.0
    %1546 = vmatpush1.msra.mxu0 0.0
    %1547 = vmatprep.subr.mxu0 0.0
    %1548 = vmatpush1.msra.mxu0 0.0
    %1549 = vmatprep.subr.mxu0 0.0
    %1550 = vmatpush1.msra.mxu0 0.0
    %1551 = vmatprep.subr.mxu0 0.0
    %1552 = vmatpush1.msra.mxu0 0.0
    %1553 = vmatprep.subr.mxu0 0.0
    %1554 = vmatpush1.msra.mxu0 0.0
    %1555 = vmatprep.subr.mxu0 0.0
    %1556 = vmatpush1.msra.mxu0 0.0
    %1557 = vmatprep.subr.mxu0 0.0
    %1558 = vmatpush1.msra.mxu0 0.0
    %1559 = vmatprep.subr.mxu0 0.0
    %1560 = vmatpush1.msra.mxu0 0.0
    %1561 = vmatprep.subr.mxu0 0.0
    %1562 = vmatpush1.msra.mxu0 0.0
    %1563 = vmatprep.subr.mxu0 0.0
    %1564 = vmatpush1.msra.mxu0 0.0
    %1565 = vmatprep.mubr.f32.mxu0 0.0
    %1566 = vmatmul.mubr.f32.gmra.mrb[0].mxu0 %v1499
    %v1567 = vpop.f32.mrb[0].mxu0
    %v1568 = vadd.f32 %v622, %v1567
    %v1569 = vpop.f32.mrb[0].mxu0
    %1570 = vdwg.mxu0
    %v1571 = vadd.f32 %v359, %v1568
    %v1572 = vxor.u32 %v1571, 2147483648
    %v1573 = vmul.f32 %v1572, 1.442695
    %v1574 = vpow.pop %v1573
    %v1575 = vadd.f32 %v1574, 1.0
    %v1576 = vrcp.pop %v1575
    %v1577 = vmul.f32 1.0, %v1576
    %1579 = vrot.lane.b32.xlu0 %v1568, 64
    %v1580 = vpop.permute.xlu0 %1579
    %v1582 = vmul.f32 %v1577, %v1580
    %1584 = vrot.lane.b32.xlu0 %v1582, 64
    %v1585 = vpop.permute.xlu0 %1584
    %v1587 = vadd.f32 %v359, %v1585
    %v1588 = vtanh.pop %v1587
    %v1589 = vsub.f32 1.0, %v1577
    %1591 = vrot.lane.b32.xlu0 %v1588, 96
    %v1592 = vpop.permute.xlu0 %1591
    %v1594 = vmul.f32 %v1589, %v1592
    %v1595 = vmul.f32 %v1577, %v1488
    %v1596 = vadd.f32 %v1594, %v1595
    %1598 = vrot.lane.b32.xlu0 %v1495, 96
    %v1599 = vpop.permute.xlu0 %1598
    %v1600 = vsel %vm638, %v1599, 0
    %1602 = vmatprep.subr.mxu0 0.0
    %1603 = vmatpush1.msra.mxu0 %v609
    %1604 = vmatprep.subr.mxu0 0.0
    %1605 = vmatpush1.msra.mxu0 %v610
    %1606 = vmatprep.subr.mxu0 0.0
    %1607 = vmatpush1.msra.mxu0 %v611
    %1608 = vmatprep.subr.mxu0 0.0
    %1609 = vmatpush1.msra.mxu0 %v612
    %1610 = vmatprep.subr.mxu0 0.0
    %1611 = vmatpush1.msra.mxu0 0.0
    %1612 = vmatprep.subr.mxu0 0.0
    %1613 = vmatpush1.msra.mxu0 0.0
    %1614 = vmatprep.subr.mxu0 0.0
    %1615 = vmatpush1.msra.mxu0 0.0
    %1616 = vmatprep.subr.mxu0 0.0
    %1617 = vmatpush1.msra.mxu0 0.0
    %1618 = vmatprep.subr.mxu0 0.0
    %1619 = vmatpush1.msra.mxu0 0.0
    %1620 = vmatprep.subr.mxu0 0.0
    %1621 = vmatpush1.msra.mxu0 0.0
    %1622 = vmatprep.subr.mxu0 0.0
    %1623 = vmatpush1.msra.mxu0 0.0
    %1624 = vmatprep.subr.mxu0 0.0
    %1625 = vmatpush1.msra.mxu0 0.0
    %1626 = vmatprep.subr.mxu0 0.0
    %1627 = vmatpush1.msra.mxu0 0.0
    %1628 = vmatprep.subr.mxu0 0.0
    %1629 = vmatpush1.msra.mxu0 0.0
    %1630 = vmatprep.subr.mxu0 0.0
    %1631 = vmatpush1.msra.mxu0 0.0
    %1632 = vmatprep.subr.mxu0 0.0
    %1633 = vmatpush1.msra.mxu0 0.0
    %1634 = vmatprep.subr.mxu0 0.0
    %1635 = vmatpush1.msra.mxu0 0.0
    %1636 = vmatprep.subr.mxu0 0.0
    %1637 = vmatpush1.msra.mxu0 0.0
    %1638 = vmatprep.subr.mxu0 0.0
    %1639 = vmatpush1.msra.mxu0 0.0
    %1640 = vmatprep.subr.mxu0 0.0
    %1641 = vmatpush1.msra.mxu0 0.0
    %1642 = vmatprep.subr.mxu0 0.0
    %1643 = vmatpush1.msra.mxu0 0.0
    %1644 = vmatprep.subr.mxu0 0.0
    %1645 = vmatpush1.msra.mxu0 0.0
    %1646 = vmatprep.subr.mxu0 0.0
    %1647 = vmatpush1.msra.mxu0 0.0
    %1648 = vmatprep.subr.mxu0 0.0
    %1649 = vmatpush1.msra.mxu0 0.0
    %1650 = vmatprep.subr.mxu0 0.0
    %1651 = vmatpush1.msra.mxu0 0.0
    %1652 = vmatprep.subr.mxu0 0.0
    %1653 = vmatpush1.msra.mxu0 0.0
    %1654 = vmatprep.subr.mxu0 0.0
    %1655 = vmatpush1.msra.mxu0 0.0
    %1656 = vmatprep.subr.mxu0 0.0
    %1657 = vmatpush1.msra.mxu0 0.0
    %1658 = vmatprep.subr.mxu0 0.0
    %1659 = vmatpush1.msra.mxu0 0.0
    %1660 = vmatprep.subr.mxu0 0.0
    %1661 = vmatpush1.msra.mxu0 0.0
    %1662 = vmatprep.subr.mxu0 0.0
    %1663 = vmatpush1.msra.mxu0 0.0
    %1664 = vmatprep.subr.mxu0 0.0
    %1665 = vmatpush1.msra.mxu0 0.0
    %1666 = vmatprep.mubr.f32.mxu0 0.0
    %1667 = vmatmul.mubr.f32.gmra.mrb[0].mxu0 %v1600
    %v1668 = vpop.f32.mrb[0].mxu0
    %v1669 = vadd.f32 %v629, %v1668
    %v1670 = vpop.f32.mrb[0].mxu0
    %1671 = vdwg.mxu0
    %v1672 = vadd.f32 %v468, %v1669
    %v1673 = vxor.u32 %v1672, 2147483648
    %v1674 = vmul.f32 %v1673, 1.442695
    %v1675 = vpow.pop %v1674
    %v1676 = vadd.f32 %v1675, 1.0
    %v1677 = vrcp.pop %v1676
    %v1678 = vmul.f32 1.0, %v1677
    %1680 = vrot.lane.b32.xlu0 %v1669, 64
    %v1681 = vpop.permute.xlu0 %1680
    %v1683 = vmul.f32 %v1678, %v1681
    %1685 = vrot.lane.b32.xlu0 %v1683, 64
    %v1686 = vpop.permute.xlu0 %1685
    %v1688 = vadd.f32 %v468, %v1686
    %v1689 = vtanh.pop %v1688
    %v1690 = vsub.f32 1.0, %v1678
    %1692 = vrot.lane.b32.xlu0 %v1689, 96
    %v1693 = vpop.permute.xlu0 %1692
    %v1695 = vmul.f32 %v1690, %v1693
    %v1696 = vmul.f32 %v1678, %v1495
    %v1697 = vadd.f32 %v1695, %v1696
    %v1698 = vsel %vm1494, %v1596, %v1488
    %v1699 = vsel %vm1487, %v1697, %v1495
    %1701 = vrot.lane.b32.xlu0 %v1698, 96
    %v1702 = vpop.permute.xlu0 %1701
    %v1703 = vsel %vm638, %v1702, 0
    %1705 = vmatprep.subr.mxu0 0.0
    %1706 = vmatpush1.msra.mxu0 %v605
    %1707 = vmatprep.subr.mxu0 0.0
    %1708 = vmatpush1.msra.mxu0 %v606
    %1709 = vmatprep.subr.mxu0 0.0
    %1710 = vmatpush1.msra.mxu0 %v607
    %1711 = vmatprep.subr.mxu0 0.0
    %1712 = vmatpush1.msra.mxu0 %v608
    %1713 = vmatprep.subr.mxu0 0.0
    %1714 = vmatpush1.msra.mxu0 0.0
    %1715 = vmatprep.subr.mxu0 0.0
    %1716 = vmatpush1.msra.mxu0 0.0
    %1717 = vmatprep.subr.mxu0 0.0
    %1718 = vmatpush1.msra.mxu0 0.0
    %1719 = vmatprep.subr.mxu0 0.0
    %1720 = vmatpush1.msra.mxu0 0.0
    %1721 = vmatprep.subr.mxu0 0.0
    %1722 = vmatpush1.msra.mxu0 0.0
    %1723 = vmatprep.subr.mxu0 0.0
    %1724 = vmatpush1.msra.mxu0 0.0
    %1725 = vmatprep.subr.mxu0 0.0
    %1726 = vmatpush1.msra.mxu0 0.0
    %1727 = vmatprep.subr.mxu0 0.0
    %1728 = vmatpush1.msra.mxu0 0.0
    %1729 = vmatprep.subr.mxu0 0.0
    %1730 = vmatpush1.msra.mxu0 0.0
    %1731 = vmatprep.subr.mxu0 0.0
    %1732 = vmatpush1.msra.mxu0 0.0
    %1733 = vmatprep.subr.mxu0 0.0
    %1734 = vmatpush1.msra.mxu0 0.0
    %1735 = vmatprep.subr.mxu0 0.0
    %1736 = vmatpush1.msra.mxu0 0.0
    %1737 = vmatprep.subr.mxu0 0.0
    %1738 = vmatpush1.msra.mxu0 0.0
    %1739 = vmatprep.subr.mxu0 0.0
    %1740 = vmatpush1.msra.mxu0 0.0
    %1741 = vmatprep.subr.mxu0 0.0
    %1742 = vmatpush1.msra.mxu0 0.0
    %1743 = vmatprep.subr.mxu0 0.0
    %1744 = vmatpush1.msra.mxu0 0.0
    %1745 = vmatprep.subr.mxu0 0.0
    %1746 = vmatpush1.msra.mxu0 0.0
    %1747 = vmatprep.subr.mxu0 0.0
    %1748 = vmatpush1.msra.mxu0 0.0
    %1749 = vmatprep.subr.mxu0 0.0
    %1750 = vmatpush1.msra.mxu0 0.0
    %1751 = vmatprep.subr.mxu0 0.0
    %1752 = vmatpush1.msra.mxu0 0.0
    %1753 = vmatprep.subr.mxu0 0.0
    %1754 = vmatpush1.msra.mxu0 0.0
    %1755 = vmatprep.subr.mxu0 0.0
    %1756 = vmatpush1.msra.mxu0 0.0
    %1757 = vmatprep.subr.mxu0 0.0
    %1758 = vmatpush1.msra.mxu0 0.0
    %1759 = vmatprep.subr.mxu0 0.0
    %1760 = vmatpush1.msra.mxu0 0.0
    %1761 = vmatprep.subr.mxu0 0.0
    %1762 = vmatpush1.msra.mxu0 0.0
    %1763 = vmatprep.subr.mxu0 0.0
    %1764 = vmatpush1.msra.mxu0 0.0
    %1765 = vmatprep.subr.mxu0 0.0
    %1766 = vmatpush1.msra.mxu0 0.0
    %1767 = vmatprep.subr.mxu0 0.0
    %1768 = vmatpush1.msra.mxu0 0.0
    %1769 = vmatprep.mubr.f32.mxu0 0.0
    %1770 = vmatmul.mubr.f32.gmra.mrb[0].mxu0 %v1703
    %v1771 = vpop.f32.mrb[0].mxu0
    %v1772 = vadd.f32 %v622, %v1771
    %v1773 = vpop.f32.mrb[0].mxu0
    %1774 = vdwg.mxu0
    %v1775 = vadd.f32 %v364, %v1772
    %v1776 = vxor.u32 %v1775, 2147483648
    %v1777 = vmul.f32 %v1776, 1.442695
    %v1778 = vpow.pop %v1777
    %v1779 = vadd.f32 %v1778, 1.0
    %v1780 = vrcp.pop %v1779
    %v1781 = vmul.f32 1.0, %v1780
    %1783 = vrot.lane.b32.xlu0 %v1772, 64
    %v1784 = vpop.permute.xlu0 %1783
    %v1786 = vmul.f32 %v1781, %v1784
    %1788 = vrot.lane.b32.xlu0 %v1786, 64
    %v1789 = vpop.permute.xlu0 %1788
    %v1791 = vadd.f32 %v364, %v1789
    %v1792 = vtanh.pop %v1791
    %v1793 = vsub.f32 1.0, %v1781
    %1795 = vrot.lane.b32.xlu0 %v1792, 96
    %v1796 = vpop.permute.xlu0 %1795
    %v1798 = vmul.f32 %v1793, %v1796
    %v1799 = vmul.f32 %v1781, %v1698
    %v1800 = vadd.f32 %v1798, %v1799
    %1802 = vrot.lane.b32.xlu0 %v1699, 96
    %v1803 = vpop.permute.xlu0 %1802
    %v1804 = vsel %vm638, %v1803, 0
    %1806 = vmatprep.subr.mxu0 0.0
    %1807 = vmatpush1.msra.mxu0 %v609
    %1808 = vmatprep.subr.mxu0 0.0
    %1809 = vmatpush1.msra.mxu0 %v610
    %1810 = vmatprep.subr.mxu0 0.0
    %1811 = vmatpush1.msra.mxu0 %v611
    %1812 = vmatprep.subr.mxu0 0.0
    %1813 = vmatpush1.msra.mxu0 %v612
    %1814 = vmatprep.subr.mxu0 0.0
    %1815 = vmatpush1.msra.mxu0 0.0
    %1816 = vmatprep.subr.mxu0 0.0
    %1817 = vmatpush1.msra.mxu0 0.0
    %1818 = vmatprep.subr.mxu0 0.0
    %1819 = vmatpush1.msra.mxu0 0.0
    %1820 = vmatprep.subr.mxu0 0.0
    %1821 = vmatpush1.msra.mxu0 0.0
    %1822 = vmatprep.subr.mxu0 0.0
    %1823 = vmatpush1.msra.mxu0 0.0
    %1824 = vmatprep.subr.mxu0 0.0
    %1825 = vmatpush1.msra.mxu0 0.0
    %1826 = vmatprep.subr.mxu0 0.0
    %1827 = vmatpush1.msra.mxu0 0.0
    %1828 = vmatprep.subr.mxu0 0.0
    %1829 = vmatpush1.msra.mxu0 0.0
    %1830 = vmatprep.subr.mxu0 0.0
    %1831 = vmatpush1.msra.mxu0 0.0
    %1832 = vmatprep.subr.mxu0 0.0
    %1833 = vmatpush1.msra.mxu0 0.0
    %1834 = vmatprep.subr.mxu0 0.0
    %1835 = vmatpush1.msra.mxu0 0.0
    %1836 = vmatprep.subr.mxu0 0.0
    %1837 = vmatpush1.msra.mxu0 0.0
    %1838 = vmatprep.subr.mxu0 0.0
    %1839 = vmatpush1.msra.mxu0 0.0
    %1840 = vmatprep.subr.mxu0 0.0
    %1841 = vmatpush1.msra.mxu0 0.0
    %1842 = vmatprep.subr.mxu0 0.0
    %1843 = vmatpush1.msra.mxu0 0.0
    %1844 = vmatprep.subr.mxu0 0.0
    %1845 = vmatpush1.msra.mxu0 0.0
    %1846 = vmatprep.subr.mxu0 0.0
    %1847 = vmatpush1.msra.mxu0 0.0
    %1848 = vmatprep.subr.mxu0 0.0
    %1849 = vmatpush1.msra.mxu0 0.0
    %1850 = vmatprep.subr.mxu0 0.0
    %1851 = vmatpush1.msra.mxu0 0.0
    %1852 = vmatprep.subr.mxu0 0.0
    %1853 = vmatpush1.msra.mxu0 0.0
    %1854 = vmatprep.subr.mxu0 0.0
    %1855 = vmatpush1.msra.mxu0 0.0
    %1856 = vmatprep.subr.mxu0 0.0
    %1857 = vmatpush1.msra.mxu0 0.0
    %1858 = vmatprep.subr.mxu0 0.0
    %1859 = vmatpush1.msra.mxu0 0.0
    %1860 = vmatprep.subr.mxu0 0.0
    %1861 = vmatpush1.msra.mxu0 0.0
    %1862 = vmatprep.subr.mxu0 0.0
    %1863 = vmatpush1.msra.mxu0 0.0
    %1864 = vmatprep.subr.mxu0 0.0
    %1865 = vmatpush1.msra.mxu0 0.0
    %1866 = vmatprep.subr.mxu0 0.0
    %1867 = vmatpush1.msra.mxu0 0.0
    %1868 = vmatprep.subr.mxu0 0.0
    %1869 = vmatpush1.msra.mxu0 0.0
    %1870 = vmatprep.mubr.f32.mxu0 0.0
    %1871 = vmatmul.mubr.f32.gmra.mrb[0].mxu0 %v1804
    %v1872 = vpop.f32.mrb[0].mxu0
    %v1873 = vadd.f32 %v629, %v1872
    %v1874 = vpop.f32.mrb[0].mxu0
    %1875 = vdwg.mxu0
    %v1876 = vadd.f32 %v463, %v1873
    %v1877 = vxor.u32 %v1876, 2147483648
    %v1878 = vmul.f32 %v1877, 1.442695
    %v1879 = vpow.pop %v1878
    %v1880 = vadd.f32 %v1879, 1.0
    %v1881 = vrcp.pop %v1880
    %v1882 = vmul.f32 1.0, %v1881
    %1884 = vrot.lane.b32.xlu0 %v1873, 64
    %v1885 = vpop.permute.xlu0 %1884
    %v1887 = vmul.f32 %v1882, %v1885
    %1889 = vrot.lane.b32.xlu0 %v1887, 64
    %v1890 = vpop.permute.xlu0 %1889
    %v1892 = vadd.f32 %v463, %v1890
    %v1893 = vtanh.pop %v1892
    %v1894 = vsub.f32 1.0, %v1882
    %1896 = vrot.lane.b32.xlu0 %v1893, 96
    %v1897 = vpop.permute.xlu0 %1896
    %v1899 = vmul.f32 %v1894, %v1897
    %v1900 = vmul.f32 %v1882, %v1699
    %v1901 = vadd.f32 %v1899, %v1900
    %v1902 = vsel %vm1278, %v1800, %v1698
    %v1903 = vsel %vm1271, %v1901, %v1699
    %1905 = vrot.lane.b32.xlu0 %v1902, 96
    %v1906 = vpop.permute.xlu0 %1905
    %v1907 = vsel %vm638, %v1906, 0
    %1909 = vmatprep.subr.mxu0 0.0
    %1910 = vmatpush1.msra.mxu0 %v605
    %1911 = vmatprep.subr.mxu0 0.0
    %1912 = vmatpush1.msra.mxu0 %v606
    %1913 = vmatprep.subr.mxu0 0.0
    %1914 = vmatpush1.msra.mxu0 %v607
    %1915 = vmatprep.subr.mxu0 0.0
    %1916 = vmatpush1.msra.mxu0 %v608
    %1917 = vmatprep.subr.mxu0 0.0
    %1918 = vmatpush1.msra.mxu0 0.0
    %1919 = vmatprep.subr.mxu0 0.0
    %1920 = vmatpush1.msra.mxu0 0.0
    %1921 = vmatprep.subr.mxu0 0.0
    %1922 = vmatpush1.msra.mxu0 0.0
    %1923 = vmatprep.subr.mxu0 0.0
    %1924 = vmatpush1.msra.mxu0 0.0
    %1925 = vmatprep.subr.mxu0 0.0
    %1926 = vmatpush1.msra.mxu0 0.0
    %1927 = vmatprep.subr.mxu0 0.0
    %1928 = vmatpush1.msra.mxu0 0.0
    %1929 = vmatprep.subr.mxu0 0.0
    %1930 = vmatpush1.msra.mxu0 0.0
    %1931 = vmatprep.subr.mxu0 0.0
    %1932 = vmatpush1.msra.mxu0 0.0
    %1933 = vmatprep.subr.mxu0 0.0
    %1934 = vmatpush1.msra.mxu0 0.0
    %1935 = vmatprep.subr.mxu0 0.0
    %1936 = vmatpush1.msra.mxu0 0.0
    %1937 = vmatprep.subr.mxu0 0.0
    %1938 = vmatpush1.msra.mxu0 0.0
    %1939 = vmatprep.subr.mxu0 0.0
    %1940 = vmatpush1.msra.mxu0 0.0
    %1941 = vmatprep.subr.mxu0 0.0
    %1942 = vmatpush1.msra.mxu0 0.0
    %1943 = vmatprep.subr.mxu0 0.0
    %1944 = vmatpush1.msra.mxu0 0.0
    %1945 = vmatprep.subr.mxu0 0.0
    %1946 = vmatpush1.msra.mxu0 0.0
    %1947 = vmatprep.subr.mxu0 0.0
    %1948 = vmatpush1.msra.mxu0 0.0
    %1949 = vmatprep.subr.mxu0 0.0
    %1950 = vmatpush1.msra.mxu0 0.0
    %1951 = vmatprep.subr.mxu0 0.0
    %1952 = vmatpush1.msra.mxu0 0.0
    %1953 = vmatprep.subr.mxu0 0.0
    %1954 = vmatpush1.msra.mxu0 0.0
    %1955 = vmatprep.subr.mxu0 0.0
    %1956 = vmatpush1.msra.mxu0 0.0
    %1957 = vmatprep.subr.mxu0 0.0
    %1958 = vmatpush1.msra.mxu0 0.0
    %1959 = vmatprep.subr.mxu0 0.0
    %1960 = vmatpush1.msra.mxu0 0.0
    %1961 = vmatprep.subr.mxu0 0.0
    %1962 = vmatpush1.msra.mxu0 0.0
    %1963 = vmatprep.subr.mxu0 0.0
    %1964 = vmatpush1.msra.mxu0 0.0
    %1965 = vmatprep.subr.mxu0 0.0
    %1966 = vmatpush1.msra.mxu0 0.0
    %1967 = vmatprep.subr.mxu0 0.0
    %1968 = vmatpush1.msra.mxu0 0.0
    %1969 = vmatprep.subr.mxu0 0.0
    %1970 = vmatpush1.msra.mxu0 0.0
    %1971 = vmatprep.subr.mxu0 0.0
    %1972 = vmatpush1.msra.mxu0 0.0
    %1973 = vmatprep.mubr.f32.mxu0 0.0
    %1974 = vmatmul.mubr.f32.gmra.mrb[0].mxu0 %v1907
    %v1975 = vpop.f32.mrb[0].mxu0
    %v1976 = vadd.f32 %v622, %v1975
    %v1977 = vpop.f32.mrb[0].mxu0
    %1978 = vdwg.mxu0
    %v1979 = vadd.f32 %v369, %v1976
    %v1980 = vxor.u32 %v1979, 2147483648
    %v1981 = vmul.f32 %v1980, 1.442695
    %v1982 = vpow.pop %v1981
    %v1983 = vadd.f32 %v1982, 1.0
    %v1984 = vrcp.pop %v1983
    %v1985 = vmul.f32 1.0, %v1984
    %1987 = vrot.lane.b32.xlu0 %v1976, 64
    %v1988 = vpop.permute.xlu0 %1987
    %v1990 = vmul.f32 %v1985, %v1988
    %1992 = vrot.lane.b32.xlu0 %v1990, 64
    %v1993 = vpop.permute.xlu0 %1992
    %v1995 = vadd.f32 %v369, %v1993
    %v1996 = vtanh.pop %v1995
    %v1997 = vsub.f32 1.0, %v1985
    %1999 = vrot.lane.b32.xlu0 %v1996, 96
    %v2000 = vpop.permute.xlu0 %1999
    %v2002 = vmul.f32 %v1997, %v2000
    %v2003 = vmul.f32 %v1985, %v1902
    %v2004 = vadd.f32 %v2002, %v2003
    %2006 = vrot.lane.b32.xlu0 %v1903, 96
    %v2007 = vpop.permute.xlu0 %2006
    %v2008 = vsel %vm638, %v2007, 0
    %2010 = vmatprep.subr.mxu0 0.0
    %2011 = vmatpush1.msra.mxu0 %v609
    %2012 = vmatprep.subr.mxu0 0.0
    %2013 = vmatpush1.msra.mxu0 %v610
    %2014 = vmatprep.subr.mxu0 0.0
    %2015 = vmatpush1.msra.mxu0 %v611
    %2016 = vmatprep.subr.mxu0 0.0
    %2017 = vmatpush1.msra.mxu0 %v612
    %2018 = vmatprep.subr.mxu0 0.0
    %2019 = vmatpush1.msra.mxu0 0.0
    %2020 = vmatprep.subr.mxu0 0.0
    %2021 = vmatpush1.msra.mxu0 0.0
    %2022 = vmatprep.subr.mxu0 0.0
    %2023 = vmatpush1.msra.mxu0 0.0
    %2024 = vmatprep.subr.mxu0 0.0
    %2025 = vmatpush1.msra.mxu0 0.0
    %2026 = vmatprep.subr.mxu0 0.0
    %2027 = vmatpush1.msra.mxu0 0.0
    %2028 = vmatprep.subr.mxu0 0.0
    %2029 = vmatpush1.msra.mxu0 0.0
    %2030 = vmatprep.subr.mxu0 0.0
    %2031 = vmatpush1.msra.mxu0 0.0
    %2032 = vmatprep.subr.mxu0 0.0
    %2033 = vmatpush1.msra.mxu0 0.0
    %2034 = vmatprep.subr.mxu0 0.0
    %2035 = vmatpush1.msra.mxu0 0.0
    %2036 = vmatprep.subr.mxu0 0.0
    %2037 = vmatpush1.msra.mxu0 0.0
    %2038 = vmatprep.subr.mxu0 0.0
    %2039 = vmatpush1.msra.mxu0 0.0
    %2040 = vmatprep.subr.mxu0 0.0
    %2041 = vmatpush1.msra.mxu0 0.0
    %2042 = vmatprep.subr.mxu0 0.0
    %2043 = vmatpush1.msra.mxu0 0.0
    %2044 = vmatprep.subr.mxu0 0.0
    %2045 = vmatpush1.msra.mxu0 0.0
    %2046 = vmatprep.subr.mxu0 0.0
    %2047 = vmatpush1.msra.mxu0 0.0
    %2048 = vmatprep.subr.mxu0 0.0
    %2049 = vmatpush1.msra.mxu0 0.0
    %2050 = vmatprep.subr.mxu0 0.0
    %2051 = vmatpush1.msra.mxu0 0.0
    %2052 = vmatprep.subr.mxu0 0.0
    %2053 = vmatpush1.msra.mxu0 0.0
    %2054 = vmatprep.subr.mxu0 0.0
    %2055 = vmatpush1.msra.mxu0 0.0
    %2056 = vmatprep.subr.mxu0 0.0
    %2057 = vmatpush1.msra.mxu0 0.0
    %2058 = vmatprep.subr.mxu0 0.0
    %2059 = vmatpush1.msra.mxu0 0.0
    %2060 = vmatprep.subr.mxu0 0.0
    %2061 = vmatpush1.msra.mxu0 0.0
    %2062 = vmatprep.subr.mxu0 0.0
    %2063 = vmatpush1.msra.mxu0 0.0
    %2064 = vmatprep.subr.mxu0 0.0
    %2065 = vmatpush1.msra.mxu0 0.0
    %2066 = vmatprep.subr.mxu0 0.0
    %2067 = vmatpush1.msra.mxu0 0.0
    %2068 = vmatprep.subr.mxu0 0.0
    %2069 = vmatpush1.msra.mxu0 0.0
    %2070 = vmatprep.subr.mxu0 0.0
    %2071 = vmatpush1.msra.mxu0 0.0
    %2072 = vmatprep.subr.mxu0 0.0
    %2073 = vmatpush1.msra.mxu0 0.0
    %2074 = vmatprep.mubr.f32.mxu0 0.0
    %2075 = vmatmul.mubr.f32.gmra.mrb[0].mxu0 %v2008
    %v2076 = vpop.f32.mrb[0].mxu0
    %v2077 = vadd.f32 %v629, %v2076
    %v2078 = vpop.f32.mrb[0].mxu0
    %2079 = vdwg.mxu0
    %v2080 = vadd.f32 %v458, %v2077
    %v2081 = vxor.u32 %v2080, 2147483648
    %v2082 = vmul.f32 %v2081, 1.442695
    %v2083 = vpow.pop %v2082
    %v2084 = vadd.f32 %v2083, 1.0
    %v2085 = vrcp.pop %v2084
    %v2086 = vmul.f32 1.0, %v2085
    %2088 = vrot.lane.b32.xlu0 %v2077, 64
    %v2089 = vpop.permute.xlu0 %2088
    %v2091 = vmul.f32 %v2086, %v2089
    %2093 = vrot.lane.b32.xlu0 %v2091, 64
    %v2094 = vpop.permute.xlu0 %2093
    %v2096 = vadd.f32 %v458, %v2094
    %v2097 = vtanh.pop %v2096
    %v2098 = vsub.f32 1.0, %v2086
    %2100 = vrot.lane.b32.xlu0 %v2097, 96
    %v2101 = vpop.permute.xlu0 %2100
    %v2103 = vmul.f32 %v2098, %v2101
    %v2104 = vmul.f32 %v2086, %v1903
    %v2105 = vadd.f32 %v2103, %v2104
    %v2106 = vsel %vm1062, %v2004, %v1902
    %v2107 = vsel %vm1055, %v2105, %v1903
    %2109 = vrot.lane.b32.xlu0 %v2106, 96
    %v2110 = vpop.permute.xlu0 %2109
    %v2111 = vsel %vm638, %v2110, 0
    %2113 = vmatprep.subr.mxu0 0.0
    %2114 = vmatpush1.msra.mxu0 %v605
    %2115 = vmatprep.subr.mxu0 0.0
    %2116 = vmatpush1.msra.mxu0 %v606
    %2117 = vmatprep.subr.mxu0 0.0
    %2118 = vmatpush1.msra.mxu0 %v607
    %2119 = vmatprep.subr.mxu0 0.0
    %2120 = vmatpush1.msra.mxu0 %v608
    %2121 = vmatprep.subr.mxu0 0.0
    %2122 = vmatpush1.msra.mxu0 0.0
    %2123 = vmatprep.subr.mxu0 0.0
    %2124 = vmatpush1.msra.mxu0 0.0
    %2125 = vmatprep.subr.mxu0 0.0
    %2126 = vmatpush1.msra.mxu0 0.0
    %2127 = vmatprep.subr.mxu0 0.0
    %2128 = vmatpush1.msra.mxu0 0.0
    %2129 = vmatprep.subr.mxu0 0.0
    %2130 = vmatpush1.msra.mxu0 0.0
    %2131 = vmatprep.subr.mxu0 0.0
    %2132 = vmatpush1.msra.mxu0 0.0
    %2133 = vmatprep.subr.mxu0 0.0
    %2134 = vmatpush1.msra.mxu0 0.0
    %2135 = vmatprep.subr.mxu0 0.0
    %2136 = vmatpush1.msra.mxu0 0.0
    %2137 = vmatprep.subr.mxu0 0.0
    %2138 = vmatpush1.msra.mxu0 0.0
    %2139 = vmatprep.subr.mxu0 0.0
    %2140 = vmatpush1.msra.mxu0 0.0
    %2141 = vmatprep.subr.mxu0 0.0
    %2142 = vmatpush1.msra.mxu0 0.0
    %2143 = vmatprep.subr.mxu0 0.0
    %2144 = vmatpush1.msra.mxu0 0.0
    %2145 = vmatprep.subr.mxu0 0.0
    %2146 = vmatpush1.msra.mxu0 0.0
    %2147 = vmatprep.subr.mxu0 0.0
    %2148 = vmatpush1.msra.mxu0 0.0
    %2149 = vmatprep.subr.mxu0 0.0
    %2150 = vmatpush1.msra.mxu0 0.0
    %2151 = vmatprep.subr.mxu0 0.0
    %2152 = vmatpush1.msra.mxu0 0.0
    %2153 = vmatprep.subr.mxu0 0.0
    %2154 = vmatpush1.msra.mxu0 0.0
    %2155 = vmatprep.subr.mxu0 0.0
    %2156 = vmatpush1.msra.mxu0 0.0
    %2157 = vmatprep.subr.mxu0 0.0
    %2158 = vmatpush1.msra.mxu0 0.0
    %2159 = vmatprep.subr.mxu0 0.0
    %2160 = vmatpush1.msra.mxu0 0.0
    %2161 = vmatprep.subr.mxu0 0.0
    %2162 = vmatpush1.msra.mxu0 0.0
    %2163 = vmatprep.subr.mxu0 0.0
    %2164 = vmatpush1.msra.mxu0 0.0
    %2165 = vmatprep.subr.mxu0 0.0
    %2166 = vmatpush1.msra.mxu0 0.0
    %2167 = vmatprep.subr.mxu0 0.0
    %2168 = vmatpush1.msra.mxu0 0.0
    %2169 = vmatprep.subr.mxu0 0.0
    %2170 = vmatpush1.msra.mxu0 0.0
    %2171 = vmatprep.subr.mxu0 0.0
    %2172 = vmatpush1.msra.mxu0 0.0
    %2173 = vmatprep.subr.mxu0 0.0
    %2174 = vmatpush1.msra.mxu0 0.0
    %2175 = vmatprep.subr.mxu0 0.0
    %2176 = vmatpush1.msra.mxu0 0.0
    %2177 = vmatprep.mubr.f32.mxu0 0.0
    %2178 = vmatmul.mubr.f32.gmra.mrb[0].mxu0 %v2111
    %v2179 = vpop.f32.mrb[0].mxu0
    %v2180 = vadd.f32 %v622, %v2179
    %v2181 = vpop.f32.mrb[0].mxu0
    %2182 = vdwg.mxu0
    %v2183 = vadd.f32 %v374, %v2180
    %v2184 = vxor.u32 %v2183, 2147483648
    %v2185 = vmul.f32 %v2184, 1.442695
    %v2186 = vpow.pop %v2185
    %v2187 = vadd.f32 %v2186, 1.0
    %v2188 = vrcp.pop %v2187
    %v2189 = vmul.f32 1.0, %v2188
    %2191 = vrot.lane.b32.xlu0 %v2180, 64
    %v2192 = vpop.permute.xlu0 %2191
    %v2194 = vmul.f32 %v2189, %v2192
    %2196 = vrot.lane.b32.xlu0 %v2194, 64
    %v2197 = vpop.permute.xlu0 %2196
    %v2199 = vadd.f32 %v374, %v2197
    %v2200 = vtanh.pop %v2199
    %v2201 = vsub.f32 1.0, %v2189
    %2203 = vrot.lane.b32.xlu0 %v2200, 96
    %v2204 = vpop.permute.xlu0 %2203
    %v2206 = vmul.f32 %v2201, %v2204
    %v2207 = vmul.f32 %v2189, %v2106
    %v2208 = vadd.f32 %v2206, %v2207
    %2210 = vrot.lane.b32.xlu0 %v2107, 96
    %v2211 = vpop.permute.xlu0 %2210
    %v2212 = vsel %vm638, %v2211, 0
    %2214 = vmatprep.subr.mxu0 0.0
    %2215 = vmatpush1.msra.mxu0 %v609
    %2216 = vmatprep.subr.mxu0 0.0
    %2217 = vmatpush1.msra.mxu0 %v610
    %2218 = vmatprep.subr.mxu0 0.0
    %2219 = vmatpush1.msra.mxu0 %v611
    %2220 = vmatprep.subr.mxu0 0.0
    %2221 = vmatpush1.msra.mxu0 %v612
    %2222 = vmatprep.subr.mxu0 0.0
    %2223 = vmatpush1.msra.mxu0 0.0
    %2224 = vmatprep.subr.mxu0 0.0
    %2225 = vmatpush1.msra.mxu0 0.0
    %2226 = vmatprep.subr.mxu0 0.0
    %2227 = vmatpush1.msra.mxu0 0.0
    %2228 = vmatprep.subr.mxu0 0.0
    %2229 = vmatpush1.msra.mxu0 0.0
    %2230 = vmatprep.subr.mxu0 0.0
    %2231 = vmatpush1.msra.mxu0 0.0
    %2232 = vmatprep.subr.mxu0 0.0
    %2233 = vmatpush1.msra.mxu0 0.0
    %2234 = vmatprep.subr.mxu0 0.0
    %2235 = vmatpush1.msra.mxu0 0.0
    %2236 = vmatprep.subr.mxu0 0.0
    %2237 = vmatpush1.msra.mxu0 0.0
    %2238 = vmatprep.subr.mxu0 0.0
    %2239 = vmatpush1.msra.mxu0 0.0
    %2240 = vmatprep.subr.mxu0 0.0
    %2241 = vmatpush1.msra.mxu0 0.0
    %2242 = vmatprep.subr.mxu0 0.0
    %2243 = vmatpush1.msra.mxu0 0.0
    %2244 = vmatprep.subr.mxu0 0.0
    %2245 = vmatpush1.msra.mxu0 0.0
    %2246 = vmatprep.subr.mxu0 0.0
    %2247 = vmatpush1.msra.mxu0 0.0
    %2248 = vmatprep.subr.mxu0 0.0
    %2249 = vmatpush1.msra.mxu0 0.0
    %2250 = vmatprep.subr.mxu0 0.0
    %2251 = vmatpush1.msra.mxu0 0.0
    %2252 = vmatprep.subr.mxu0 0.0
    %2253 = vmatpush1.msra.mxu0 0.0
    %2254 = vmatprep.subr.mxu0 0.0
    %2255 = vmatpush1.msra.mxu0 0.0
    %2256 = vmatprep.subr.mxu0 0.0
    %2257 = vmatpush1.msra.mxu0 0.0
    %2258 = vmatprep.subr.mxu0 0.0
    %2259 = vmatpush1.msra.mxu0 0.0
    %2260 = vmatprep.subr.mxu0 0.0
    %2261 = vmatpush1.msra.mxu0 0.0
    %2262 = vmatprep.subr.mxu0 0.0
    %2263 = vmatpush1.msra.mxu0 0.0
    %2264 = vmatprep.subr.mxu0 0.0
    %2265 = vmatpush1.msra.mxu0 0.0
    %2266 = vmatprep.subr.mxu0 0.0
    %2267 = vmatpush1.msra.mxu0 0.0
    %2268 = vmatprep.subr.mxu0 0.0
    %2269 = vmatpush1.msra.mxu0 0.0
    %2270 = vmatprep.subr.mxu0 0.0
    %2271 = vmatpush1.msra.mxu0 0.0
    %2272 = vmatprep.subr.mxu0 0.0
    %2273 = vmatpush1.msra.mxu0 0.0
    %2274 = vmatprep.subr.mxu0 0.0
    %2275 = vmatpush1.msra.mxu0 0.0
    %2276 = vmatprep.subr.mxu0 0.0
    %2277 = vmatpush1.msra.mxu0 0.0
    %2278 = vmatprep.mubr.f32.mxu0 0.0
    %2279 = vmatmul.mubr.f32.gmra.mrb[0].mxu0 %v2212
    %v2280 = vpop.f32.mrb[0].mxu0
    %v2281 = vadd.f32 %v629, %v2280
    %v2282 = vpop.f32.mrb[0].mxu0
    %2283 = vdwg.mxu0
    %v2284 = vadd.f32 %v453, %v2281
    %v2285 = vxor.u32 %v2284, 2147483648
    %v2286 = vmul.f32 %v2285, 1.442695
    %v2287 = vpow.pop %v2286
    %v2288 = vadd.f32 %v2287, 1.0
    %v2289 = vrcp.pop %v2288
    %v2290 = vmul.f32 1.0, %v2289
    %2292 = vrot.lane.b32.xlu0 %v2281, 64
    %v2293 = vpop.permute.xlu0 %2292
    %v2295 = vmul.f32 %v2290, %v2293
    %2297 = vrot.lane.b32.xlu0 %v2295, 64
    %v2298 = vpop.permute.xlu0 %2297
    %v2300 = vadd.f32 %v453, %v2298
    %v2301 = vtanh.pop %v2300
    %v2302 = vsub.f32 1.0, %v2290
    %2304 = vrot.lane.b32.xlu0 %v2301, 96
    %v2305 = vpop.permute.xlu0 %2304
    %v2307 = vmul.f32 %v2302, %v2305
    %v2308 = vmul.f32 %v2290, %v2107
    %v2309 = vadd.f32 %v2307, %v2308
    %v2310 = vsel %vm846, %v2208, %v2106
    %v2311 = vsel %vm839, %v2309, %v2107
    %v2312 = vld [vmem:[#allocation10] sm:$0xff]
    %v2313 = vld [vmem:[#allocation10 + $0x8] sm:$0xff]
    %v2314 = vld [vmem:[#allocation10 + $0x10] sm:$0xff]
    %v2315 = vld [vmem:[#allocation10 + $0x18] sm:$0xff]
    %v2316 = vld [vmem:[#allocation11] sm:$0xff]
    %v2317 = vld [vmem:[#allocation11 + $0x8] sm:$0xff]
    %v2318 = vld [vmem:[#allocation11 + $0x10] sm:$0xff]
    %v2319 = vld [vmem:[#allocation11 + $0x18] sm:$0xff]
    %2321 = vrot.lane.b32.xlu0 %v2311, 96
    %v2322 = vpop.permute.xlu0 %2321
    %v2323 = vsel %vm638, %v2322, 0
    %2325 = vmatprep.subr.mxu0 0.0
    %2326 = vmatpush1.msra.mxu0 %v2316
    %2327 = vmatprep.subr.mxu0 0.0
    %2328 = vmatpush1.msra.mxu0 %v2317
    %2329 = vmatprep.subr.mxu0 0.0
    %2330 = vmatpush1.msra.mxu0 %v2318
    %2331 = vmatprep.subr.mxu0 0.0
    %2332 = vmatpush1.msra.mxu0 %v2319
    %2333 = vmatprep.subr.mxu0 0.0
    %2334 = vmatpush1.msra.mxu0 0.0
    %2335 = vmatprep.subr.mxu0 0.0
    %2336 = vmatpush1.msra.mxu0 0.0
    %2337 = vmatprep.subr.mxu0 0.0
    %2338 = vmatpush1.msra.mxu0 0.0
    %2339 = vmatprep.subr.mxu0 0.0
    %2340 = vmatpush1.msra.mxu0 0.0
    %2341 = vmatprep.subr.mxu0 0.0
    %2342 = vmatpush1.msra.mxu0 0.0
    %2343 = vmatprep.subr.mxu0 0.0
    %2344 = vmatpush1.msra.mxu0 0.0
    %2345 = vmatprep.subr.mxu0 0.0
    %2346 = vmatpush1.msra.mxu0 0.0
    %2347 = vmatprep.subr.mxu0 0.0
    %2348 = vmatpush1.msra.mxu0 0.0
    %2349 = vmatprep.subr.mxu0 0.0
    %2350 = vmatpush1.msra.mxu0 0.0
    %2351 = vmatprep.subr.mxu0 0.0
    %2352 = vmatpush1.msra.mxu0 0.0
    %2353 = vmatprep.subr.mxu0 0.0
    %2354 = vmatpush1.msra.mxu0 0.0
    %2355 = vmatprep.subr.mxu0 0.0
    %2356 = vmatpush1.msra.mxu0 0.0
    %2357 = vmatprep.subr.mxu0 0.0
    %2358 = vmatpush1.msra.mxu0 0.0
    %2359 = vmatprep.subr.mxu0 0.0
    %2360 = vmatpush1.msra.mxu0 0.0
    %2361 = vmatprep.subr.mxu0 0.0
    %2362 = vmatpush1.msra.mxu0 0.0
    %2363 = vmatprep.subr.mxu0 0.0
    %2364 = vmatpush1.msra.mxu0 0.0
    %2365 = vmatprep.subr.mxu0 0.0
    %2366 = vmatpush1.msra.mxu0 0.0
    %2367 = vmatprep.subr.mxu0 0.0
    %2368 = vmatpush1.msra.mxu0 0.0
    %2369 = vmatprep.subr.mxu0 0.0
    %2370 = vmatpush1.msra.mxu0 0.0
    %2371 = vmatprep.subr.mxu0 0.0
    %2372 = vmatpush1.msra.mxu0 0.0
    %2373 = vmatprep.subr.mxu0 0.0
    %2374 = vmatpush1.msra.mxu0 0.0
    %2375 = vmatprep.subr.mxu0 0.0
    %2376 = vmatpush1.msra.mxu0 0.0
    %2377 = vmatprep.subr.mxu0 0.0
    %2378 = vmatpush1.msra.mxu0 0.0
    %2379 = vmatprep.subr.mxu0 0.0
    %2380 = vmatpush1.msra.mxu0 0.0
    %2381 = vmatprep.subr.mxu0 0.0
    %2382 = vmatpush1.msra.mxu0 0.0
    %2383 = vmatprep.subr.mxu0 0.0
    %2384 = vmatpush1.msra.mxu0 0.0
    %2385 = vmatprep.subr.mxu0 0.0
    %2386 = vmatpush1.msra.mxu0 0.0
    %2387 = vmatprep.subr.mxu0 0.0
    %2388 = vmatpush1.msra.mxu0 0.0
    %2389 = vmatprep.mubr.f32.mxu0 0.0
    %2390 = vmatmul.mubr.f32.gmra.mrb[0].mxu0 %v2323
    %v2391 = vpop.f32.mrb[0].mxu0
    %v2392 = vadd.f32 0.0, %v2391
    %v2393 = vpop.f32.mrb[0].mxu0
    %2394 = vdwg.mxu0
    %2396 = vrot.lane.b32.xlu0 %v2310, 96
    %v2397 = vpop.permute.xlu0 %2396
    %v2398 = vsel %vm638, %v2397, 0
    %2400 = vmatprep.subr.mxu0 0.0
    %2401 = vmatpush1.msra.mxu0 %v2312
    %2402 = vmatprep.subr.mxu0 0.0
    %2403 = vmatpush1.msra.mxu0 %v2313
    %2404 = vmatprep.subr.mxu0 0.0
    %2405 = vmatpush1.msra.mxu0 %v2314
    %2406 = vmatprep.subr.mxu0 0.0
    %2407 = vmatpush1.msra.mxu0 %v2315
    %2408 = vmatprep.subr.mxu0 0.0
    %2409 = vmatpush1.msra.mxu0 0.0
    %2410 = vmatprep.subr.mxu0 0.0
    %2411 = vmatpush1.msra.mxu0 0.0
    %2412 = vmatprep.subr.mxu0 0.0
    %2413 = vmatpush1.msra.mxu0 0.0
    %2414 = vmatprep.subr.mxu0 0.0
    %2415 = vmatpush1.msra.mxu0 0.0
    %2416 = vmatprep.subr.mxu0 0.0
    %2417 = vmatpush1.msra.mxu0 0.0
    %2418 = vmatprep.subr.mxu0 0.0
    %2419 = vmatpush1.msra.mxu0 0.0
    %2420 = vmatprep.subr.mxu0 0.0
    %2421 = vmatpush1.msra.mxu0 0.0
    %2422 = vmatprep.subr.mxu0 0.0
    %2423 = vmatpush1.msra.mxu0 0.0
    %2424 = vmatprep.subr.mxu0 0.0
    %2425 = vmatpush1.msra.mxu0 0.0
    %2426 = vmatprep.subr.mxu0 0.0
    %2427 = vmatpush1.msra.mxu0 0.0
    %2428 = vmatprep.subr.mxu0 0.0
    %2429 = vmatpush1.msra.mxu0 0.0
    %2430 = vmatprep.subr.mxu0 0.0
    %2431 = vmatpush1.msra.mxu0 0.0
    %2432 = vmatprep.subr.mxu0 0.0
    %2433 = vmatpush1.msra.mxu0 0.0
    %2434 = vmatprep.subr.mxu0 0.0
    %2435 = vmatpush1.msra.mxu0 0.0
    %2436 = vmatprep.subr.mxu0 0.0
    %2437 = vmatpush1.msra.mxu0 0.0
    %2438 = vmatprep.subr.mxu0 0.0
    %2439 = vmatpush1.msra.mxu0 0.0
    %2440 = vmatprep.subr.mxu0 0.0
    %2441 = vmatpush1.msra.mxu0 0.0
    %2442 = vmatprep.subr.mxu0 0.0
    %2443 = vmatpush1.msra.mxu0 0.0
    %2444 = vmatprep.subr.mxu0 0.0
    %2445 = vmatpush1.msra.mxu0 0.0
    %2446 = vmatprep.subr.mxu0 0.0
    %2447 = vmatpush1.msra.mxu0 0.0
    %2448 = vmatprep.subr.mxu0 0.0
    %2449 = vmatpush1.msra.mxu0 0.0
    %2450 = vmatprep.subr.mxu0 0.0
    %2451 = vmatpush1.msra.mxu0 0.0
    %2452 = vmatprep.subr.mxu0 0.0
    %2453 = vmatpush1.msra.mxu0 0.0
    %2454 = vmatprep.subr.mxu0 0.0
    %2455 = vmatpush1.msra.mxu0 0.0
    %2456 = vmatprep.subr.mxu0 0.0
    %2457 = vmatpush1.msra.mxu0 0.0
    %2458 = vmatprep.subr.mxu0 0.0
    %2459 = vmatpush1.msra.mxu0 0.0
    %2460 = vmatprep.subr.mxu0 0.0
    %2461 = vmatpush1.msra.mxu0 0.0
    %2462 = vmatprep.subr.mxu0 0.0
    %2463 = vmatpush1.msra.mxu0 0.0
    %2464 = vmatprep.mubr.f32.mxu0 0.0
    %2465 = vmatmul.mubr.f32.gmra.mrb[0].mxu0 %v2398
    %v2466 = vpop.f32.mrb[0].mxu0
    %v2467 = vadd.f32 %v2392, %v2466
    %v2468 = vpop.f32.mrb[0].mxu0
    %2469 = vdwg.mxu0
    %v2470 = vld [vmem:[%s13] sm:$0x1]
    %v2472 = vlaneseq
    %v2473 = vshrl.u32 %v2472, 7
    %v2474 = vsub.s32 0, %v2473
    %v2475 = vrot.slane %v2470, %v2474
    %v2477 = vadd.f32 %v2467, %v2475
    %v2478 = vmax.f32 %v2477, 0.0
    %v2479 = vand.u32 2147483647, %v2477
    %v2480 = vsub.f32 0.0, %v2479
    %v2481 = vmul.f32 %v2480, 1.442695
    %v2482 = vpow.pop %v2481
    %v2483 = vadd.f32 %v2482, 1.0
    %v2484 = vlog2.pop %v2483
    %v2485 = vmul.f32 %v2484, 0.6931472
    %v2486 = vmul.f32 -0.5, %v2482
    %v2487 = vadd.f32 %v2486, 1.0
    %v2488 = vmul.f32 %v2487, %v2482
    %v2489 = vand.u32 2147483647, %v2482
    %vm2490 = vcmp.lt.f32.partialorder %v2489, 0.0004427343
    %v2491 = vsel %vm2490, %v2488, %v2485
    %v2492 = vadd.f32 %v2478, %v2491
    %v2493 = vld [vmem:[%s2] sm:$0xff]
    %2495 = vrot.lane.b32.xlu0 %v2493, 32
    %v2496 = vpop.permute.xlu0 %2495
    %v2498 = vmul.f32 %v2492, %v2496
    %2500 = vrot.lane.b32.xlu0 %v2498, 96
    %v2501 = vpop.permute.xlu0 %2500
    %v2503 = vadd.f32 %v2477, %v2501
    %v2504 = vlog2.pop %v2492
    %v2505 = vmul.f32 %v2504, 0.6931472
    %v2506 = vsub.f32 0.0, %v2505
    %v2507 = vmul.f32 %v2492, %v2492
    %v2508 = vmul.f32 %v2477, %v2477
    %2510 = vrot.lane.b32.xlu0 %v2508, 32
    %v2511 = vpop.permute.xlu0 %2510
    %v2513 = vadd.f32 %v2507, %v2511
    %v2514 = vsub.f32 %v2513, 1.0
    %v2515 = vmul.f32 %v2514, 0.5
    %v2516 = vadd.f32 %v2506, %v2515
    %vm2517 = vcmask 523520
    %v2518 = vsel %vm2517, %v2516, 0.0
    %v2519 = vrot.slane %v2518, 4
    %v2520 = vadd.f32 %v2518, %v2519
    %v2521 = vrot.slane %v2520, 2
    %v2522 = vadd.f32 %v2520, %v2521
    %v2523 = vrot.slane %v2522, 1
    %v2524 = vadd.f32 %v2522, %v2523
    %v2525 = vmul.f32 %v2524, 0.125
    %2527 = vrot.lane.b32.xlu0 %v2525, 96
    %v2528 = vpop.permute.xlu0 %2527
    %v2530 = vsel %vm638, %v2528, 0.0
    %2531 = vadd.xlane.f32.xlu0 %v2530
    %v2532 = vpop.xlane.xlu0 %2531
    %vm2533 = vcmask 0
    %2534 = vst.msk [vmem:[#allocation23] sm:$0x1] %vm2533, %v2532
    %v2535 = vsub.f32 0.5, %v2525
    %v2536 = vmax.f32 %v2535, 0.0
    %2538 = vrot.lane.b32.xlu0 %v2536, 96
    %v2539 = vpop.permute.xlu0 %2538
    %v2541 = vsel %vm638, %v2539, 0.0
    %2542 = vadd.xlane.f32.xlu0 %v2541
    %v2543 = vpop.xlane.xlu0 %2542
    %2544 = vst.msk [vmem:[#allocation25] sm:$0x1] %vm2533, %v2543
    %v2545 = vsel %vm638, %v2508, 0.0
    %v2546 = vrot.slane %v2545, 4
    %v2547 = vadd.f32 %v2545, %v2546
    %v2548 = vrot.slane %v2547, 2
    %v2549 = vadd.f32 %v2547, %v2548
    %v2550 = vrot.slane %v2549, 1
    %v2551 = vadd.f32 %v2549, %v2550
    %v2552 = vsel %vm638, %v2551, 0.0
    %2553 = vadd.xlane.f32.xlu0 %v2552
    %v2554 = vpop.xlane.xlu0 %2553
    %v2555 = vmul.f32 %v2554, 0.0625
    %v2556 = vsub.f32 3.0, %v2555
    %v2557 = vmax.f32 %v2556, 0.0
    %2558 = vst.msk [vmem:[#allocation26] sm:$0x1] %vm2533, %v2557
    %v2560 = vsel %vm638, %v2503, 0
    %2562 = vmatprep.subr.mxu0 0.0
    %2563 = vmatpush1.msra.mxu0 %v613
    %2564 = vmatprep.subr.mxu0 0.0
    %2565 = vmatpush1.msra.mxu0 %v614
    %2566 = vmatprep.subr.mxu0 0.0
    %2567 = vmatpush1.msra.mxu0 %v615
    %2568 = vmatprep.subr.mxu0 0.0
    %2569 = vmatpush1.msra.mxu0 %v616
    %2570 = vmatprep.subr.mxu0 0.0
    %2571 = vmatpush1.msra.mxu0 0.0
    %2572 = vmatprep.subr.mxu0 0.0
    %2573 = vmatpush1.msra.mxu0 0.0
    %2574 = vmatprep.subr.mxu0 0.0
    %2575 = vmatpush1.msra.mxu0 0.0
    %2576 = vmatprep.subr.mxu0 0.0
    %2577 = vmatpush1.msra.mxu0 0.0
    %2578 = vmatprep.subr.mxu0 0.0
    %2579 = vmatpush1.msra.mxu0 0.0
    %2580 = vmatprep.subr.mxu0 0.0
    %2581 = vmatpush1.msra.mxu0 0.0
    %2582 = vmatprep.subr.mxu0 0.0
    %2583 = vmatpush1.msra.mxu0 0.0
    %2584 = vmatprep.subr.mxu0 0.0
    %2585 = vmatpush1.msra.mxu0 0.0
    %2586 = vmatprep.subr.mxu0 0.0
    %2587 = vmatpush1.msra.mxu0 0.0
    %2588 = vmatprep.subr.mxu0 0.0
    %2589 = vmatpush1.msra.mxu0 0.0
    %2590 = vmatprep.subr.mxu0 0.0
    %2591 = vmatpush1.msra.mxu0 0.0
    %2592 = vmatprep.subr.mxu0 0.0
    %2593 = vmatpush1.msra.mxu0 0.0
    %2594 = vmatprep.subr.mxu0 0.0
    %2595 = vmatpush1.msra.mxu0 0.0
    %2596 = vmatprep.subr.mxu0 0.0
    %2597 = vmatpush1.msra.mxu0 0.0
    %2598 = vmatprep.subr.mxu0 0.0
    %2599 = vmatpush1.msra.mxu0 0.0
    %2600 = vmatprep.subr.mxu0 0.0
    %2601 = vmatpush1.msra.mxu0 0.0
    %2602 = vmatprep.subr.mxu0 0.0
    %2603 = vmatpush1.msra.mxu0 0.0
    %2604 = vmatprep.subr.mxu0 0.0
    %2605 = vmatpush1.msra.mxu0 0.0
    %2606 = vmatprep.subr.mxu0 0.0
    %2607 = vmatpush1.msra.mxu0 0.0
    %2608 = vmatprep.subr.mxu0 0.0
    %2609 = vmatpush1.msra.mxu0 0.0
    %2610 = vmatprep.subr.mxu0 0.0
    %2611 = vmatpush1.msra.mxu0 0.0
    %2612 = vmatprep.subr.mxu0 0.0
    %2613 = vmatpush1.msra.mxu0 0.0
    %2614 = vmatprep.subr.mxu0 0.0
    %2615 = vmatpush1.msra.mxu0 0.0
    %2616 = vmatprep.subr.mxu0 0.0
    %2617 = vmatpush1.msra.mxu0 0.0
    %2618 = vmatprep.subr.mxu0 0.0
    %2619 = vmatpush1.msra.mxu0 0.0
    %2620 = vmatprep.subr.mxu0 0.0
    %2621 = vmatpush1.msra.mxu0 0.0
    %2622 = vmatprep.subr.mxu0 0.0
    %2623 = vmatpush1.msra.mxu0 0.0
    %2624 = vmatprep.subr.mxu0 0.0
    %2625 = vmatpush1.msra.mxu0 0.0
    %2626 = vmatprep.mubr.f32.mxu0 0.0
    %2627 = vmatmul.mubr.f32.gmra.mrb[0].mxu0 %v2560
    %v2628 = vpop.f32.mrb[0].mxu0
    %v2629 = vadd.f32 %v636, %v2628
    %v2630 = vpop.f32.mrb[0].mxu0
    %2631 = vdwg.mxu0
    %v2632 = vadd.f32 %v567, %v2629
    %v2633 = vxor.u32 %v2632, 2147483648
    %v2634 = vmul.f32 %v2633, 1.442695
    %v2635 = vpow.pop %v2634
    %v2636 = vadd.f32 %v2635, 1.0
    %v2637 = vrcp.pop %v2636
    %v2638 = vmul.f32 1.0, %v2637
    %2640 = vrot.lane.b32.xlu0 %v2629, 64
    %v2641 = vpop.permute.xlu0 %2640
    %v2643 = vmul.f32 %v2638, %v2641
    %2645 = vrot.lane.b32.xlu0 %v2643, 64
    %v2646 = vpop.permute.xlu0 %2645
    %v2648 = vadd.f32 %v567, %v2646
    %v2649 = vtanh.pop %v2648
    %v2650 = vsub.f32 1.0, %v2638
    %2652 = vrot.lane.b32.xlu0 %v2649, 96
    %v2653 = vpop.permute.xlu0 %2652
    %v2655 = vmul.f32 %v2650, %v2653
    %2656 = vrot.lane.b32.xlu0 %v2503, 32
    %v2657 = vpop.permute.xlu0 %2656
    %v2659 = vmul.f32 %v2638, %v2657
    %v2660 = vadd.f32 %v2655, %v2659
    %v2661 = vsel %vm839, %v2660, 0.0
    %v2662 = vsel %vm839, %v2660, %v2657
    %2664 = vrot.lane.b32.xlu0 %v2662, 96
    %v2665 = vpop.permute.xlu0 %2664
    %v2666 = vsel %vm638, %v2665, 0
    %2668 = vmatprep.subr.mxu0 0.0
    %2669 = vmatpush1.msra.mxu0 %v613
    %2670 = vmatprep.subr.mxu0 0.0
    %2671 = vmatpush1.msra.mxu0 %v614
    %2672 = vmatprep.subr.mxu0 0.0
    %2673 = vmatpush1.msra.mxu0 %v615
    %2674 = vmatprep.subr.mxu0 0.0
    %2675 = vmatpush1.msra.mxu0 %v616
    %2676 = vmatprep.subr.mxu0 0.0
    %2677 = vmatpush1.msra.mxu0 0.0
    %2678 = vmatprep.subr.mxu0 0.0
    %2679 = vmatpush1.msra.mxu0 0.0
    %2680 = vmatprep.subr.mxu0 0.0
    %2681 = vmatpush1.msra.mxu0 0.0
    %2682 = vmatprep.subr.mxu0 0.0
    %2683 = vmatpush1.msra.mxu0 0.0
    %2684 = vmatprep.subr.mxu0 0.0
    %2685 = vmatpush1.msra.mxu0 0.0
    %2686 = vmatprep.subr.mxu0 0.0
    %2687 = vmatpush1.msra.mxu0 0.0
    %2688 = vmatprep.subr.mxu0 0.0
    %2689 = vmatpush1.msra.mxu0 0.0
    %2690 = vmatprep.subr.mxu0 0.0
    %2691 = vmatpush1.msra.mxu0 0.0
    %2692 = vmatprep.subr.mxu0 0.0
    %2693 = vmatpush1.msra.mxu0 0.0
    %2694 = vmatprep.subr.mxu0 0.0
    %2695 = vmatpush1.msra.mxu0 0.0
    %2696 = vmatprep.subr.mxu0 0.0
    %2697 = vmatpush1.msra.mxu0 0.0
    %2698 = vmatprep.subr.mxu0 0.0
    %2699 = vmatpush1.msra.mxu0 0.0
    %2700 = vmatprep.subr.mxu0 0.0
    %2701 = vmatpush1.msra.mxu0 0.0
    %2702 = vmatprep.subr.mxu0 0.0
    %2703 = vmatpush1.msra.mxu0 0.0
    %2704 = vmatprep.subr.mxu0 0.0
    %2705 = vmatpush1.msra.mxu0 0.0
    %2706 = vmatprep.subr.mxu0 0.0
    %2707 = vmatpush1.msra.mxu0 0.0
    %2708 = vmatprep.subr.mxu0 0.0
    %2709 = vmatpush1.msra.mxu0 0.0
    %2710 = vmatprep.subr.mxu0 0.0
    %2711 = vmatpush1.msra.mxu0 0.0
    %2712 = vmatprep.subr.mxu0 0.0
    %2713 = vmatpush1.msra.mxu0 0.0
    %2714 = vmatprep.subr.mxu0 0.0
    %2715 = vmatpush1.msra.mxu0 0.0
    %2716 = vmatprep.subr.mxu0 0.0
    %2717 = vmatpush1.msra.mxu0 0.0
    %2718 = vmatprep.subr.mxu0 0.0
    %2719 = vmatpush1.msra.mxu0 0.0
    %2720 = vmatprep.subr.mxu0 0.0
    %2721 = vmatpush1.msra.mxu0 0.0
    %2722 = vmatprep.subr.mxu0 0.0
    %2723 = vmatpush1.msra.mxu0 0.0
    %2724 = vmatprep.subr.mxu0 0.0
    %2725 = vmatpush1.msra.mxu0 0.0
    %2726 = vmatprep.subr.mxu0 0.0
    %2727 = vmatpush1.msra.mxu0 0.0
    %2728 = vmatprep.subr.mxu0 0.0
    %2729 = vmatpush1.msra.mxu0 0.0
    %2730 = vmatprep.subr.mxu0 0.0
    %2731 = vmatpush1.msra.mxu0 0.0
    %2732 = vmatprep.mubr.f32.mxu0 0.0
    %2733 = vmatmul.mubr.f32.gmra.mrb[0].mxu0 %v2666
    %v2734 = vpop.f32.mrb[0].mxu0
    %v2735 = vadd.f32 %v636, %v2734
    %v2736 = vpop.f32.mrb[0].mxu0
    %2737 = vdwg.mxu0
    %v2738 = vadd.f32 %v572, %v2735
    %v2739 = vxor.u32 %v2738, 2147483648
    %v2740 = vmul.f32 %v2739, 1.442695
    %v2741 = vpow.pop %v2740
    %v2742 = vadd.f32 %v2741, 1.0
    %v2743 = vrcp.pop %v2742
    %v2744 = vmul.f32 1.0, %v2743
    %2746 = vrot.lane.b32.xlu0 %v2735, 64
    %v2747 = vpop.permute.xlu0 %2746
    %v2749 = vmul.f32 %v2744, %v2747
    %2751 = vrot.lane.b32.xlu0 %v2749, 64
    %v2752 = vpop.permute.xlu0 %2751
    %v2754 = vadd.f32 %v572, %v2752
    %v2755 = vtanh.pop %v2754
    %v2756 = vsub.f32 1.0, %v2744
    %2758 = vrot.lane.b32.xlu0 %v2755, 96
    %v2759 = vpop.permute.xlu0 %2758
    %v2761 = vmul.f32 %v2756, %v2759
    %v2762 = vmul.f32 %v2744, %v2662
    %v2763 = vadd.f32 %v2761, %v2762
    %v2764 = vsel %vm1055, %v2763, 0.0
    %v2765 = vsel %vm1055, %v2763, %v2662
    %2767 = vrot.lane.b32.xlu0 %v2765, 96
    %v2768 = vpop.permute.xlu0 %2767
    %v2769 = vsel %vm638, %v2768, 0
    %2771 = vmatprep.subr.mxu0 0.0
    %2772 = vmatpush1.msra.mxu0 %v613
    %2773 = vmatprep.subr.mxu0 0.0
    %2774 = vmatpush1.msra.mxu0 %v614
    %2775 = vmatprep.subr.mxu0 0.0
    %2776 = vmatpush1.msra.mxu0 %v615
    %2777 = vmatprep.subr.mxu0 0.0
    %2778 = vmatpush1.msra.mxu0 %v616
    %2779 = vmatprep.subr.mxu0 0.0
    %2780 = vmatpush1.msra.mxu0 0.0
    %2781 = vmatprep.subr.mxu0 0.0
    %2782 = vmatpush1.msra.mxu0 0.0
    %2783 = vmatprep.subr.mxu0 0.0
    %2784 = vmatpush1.msra.mxu0 0.0
    %2785 = vmatprep.subr.mxu0 0.0
    %2786 = vmatpush1.msra.mxu0 0.0
    %2787 = vmatprep.subr.mxu0 0.0
    %2788 = vmatpush1.msra.mxu0 0.0
    %2789 = vmatprep.subr.mxu0 0.0
    %2790 = vmatpush1.msra.mxu0 0.0
    %2791 = vmatprep.subr.mxu0 0.0
    %2792 = vmatpush1.msra.mxu0 0.0
    %2793 = vmatprep.subr.mxu0 0.0
    %2794 = vmatpush1.msra.mxu0 0.0
    %2795 = vmatprep.subr.mxu0 0.0
    %2796 = vmatpush1.msra.mxu0 0.0
    %2797 = vmatprep.subr.mxu0 0.0
    %2798 = vmatpush1.msra.mxu0 0.0
    %2799 = vmatprep.subr.mxu0 0.0
    %2800 = vmatpush1.msra.mxu0 0.0
    %2801 = vmatprep.subr.mxu0 0.0
    %2802 = vmatpush1.msra.mxu0 0.0
    %2803 = vmatprep.subr.mxu0 0.0
    %2804 = vmatpush1.msra.mxu0 0.0
    %2805 = vmatprep.subr.mxu0 0.0
    %2806 = vmatpush1.msra.mxu0 0.0
    %2807 = vmatprep.subr.mxu0 0.0
    %2808 = vmatpush1.msra.mxu0 0.0
    %2809 = vmatprep.subr.mxu0 0.0
    %2810 = vmatpush1.msra.mxu0 0.0
    %2811 = vmatprep.subr.mxu0 0.0
    %2812 = vmatpush1.msra.mxu0 0.0
    %2813 = vmatprep.subr.mxu0 0.0
    %2814 = vmatpush1.msra.mxu0 0.0
    %2815 = vmatprep.subr.mxu0 0.0
    %2816 = vmatpush1.msra.mxu0 0.0
    %2817 = vmatprep.subr.mxu0 0.0
    %2818 = vmatpush1.msra.mxu0 0.0
    %2819 = vmatprep.subr.mxu0 0.0
    %2820 = vmatpush1.msra.mxu0 0.0
    %2821 = vmatprep.subr.mxu0 0.0
    %2822 = vmatpush1.msra.mxu0 0.0
    %2823 = vmatprep.subr.mxu0 0.0
    %2824 = vmatpush1.msra.mxu0 0.0
    %2825 = vmatprep.subr.mxu0 0.0
    %2826 = vmatpush1.msra.mxu0 0.0
    %2827 = vmatprep.subr.mxu0 0.0
    %2828 = vmatpush1.msra.mxu0 0.0
    %2829 = vmatprep.subr.mxu0 0.0
    %2830 = vmatpush1.msra.mxu0 0.0
    %2831 = vmatprep.subr.mxu0 0.0
    %2832 = vmatpush1.msra.mxu0 0.0
    %2833 = vmatprep.subr.mxu0 0.0
    %2834 = vmatpush1.msra.mxu0 0.0
    %2835 = vmatprep.mubr.f32.mxu0 0.0
    %2836 = vmatmul.mubr.f32.gmra.mrb[0].mxu0 %v2769
    %v2837 = vpop.f32.mrb[0].mxu0
    %v2838 = vadd.f32 %v636, %v2837
    %v2839 = vpop.f32.mrb[0].mxu0
    %2840 = vdwg.mxu0
    %v2841 = vadd.f32 %v577, %v2838
    %v2842 = vxor.u32 %v2841, 2147483648
    %v2843 = vmul.f32 %v2842, 1.442695
    %v2844 = vpow.pop %v2843
    %v2845 = vadd.f32 %v2844, 1.0
    %v2846 = vrcp.pop %v2845
    %v2847 = vmul.f32 1.0, %v2846
    %2849 = vrot.lane.b32.xlu0 %v2838, 64
    %v2850 = vpop.permute.xlu0 %2849
    %v2852 = vmul.f32 %v2847, %v2850
    %2854 = vrot.lane.b32.xlu0 %v2852, 64
    %v2855 = vpop.permute.xlu0 %2854
    %v2857 = vadd.f32 %v577, %v2855
    %v2858 = vtanh.pop %v2857
    %v2859 = vsub.f32 1.0, %v2847
    %2861 = vrot.lane.b32.xlu0 %v2858, 96
    %v2862 = vpop.permute.xlu0 %2861
    %v2864 = vmul.f32 %v2859, %v2862
    %v2865 = vmul.f32 %v2847, %v2765
    %v2866 = vadd.f32 %v2864, %v2865
    %v2867 = vsel %vm1271, %v2866, 0.0
    %v2868 = vsel %vm1271, %v2866, %v2765
    %2870 = vrot.lane.b32.xlu0 %v2868, 96
    %v2871 = vpop.permute.xlu0 %2870
    %v2872 = vsel %vm638, %v2871, 0
    %2874 = vmatprep.subr.mxu0 0.0
    %2875 = vmatpush1.msra.mxu0 %v613
    %2876 = vmatprep.subr.mxu0 0.0
    %2877 = vmatpush1.msra.mxu0 %v614
    %2878 = vmatprep.subr.mxu0 0.0
    %2879 = vmatpush1.msra.mxu0 %v615
    %2880 = vmatprep.subr.mxu0 0.0
    %2881 = vmatpush1.msra.mxu0 %v616
    %2882 = vmatprep.subr.mxu0 0.0
    %2883 = vmatpush1.msra.mxu0 0.0
    %2884 = vmatprep.subr.mxu0 0.0
    %2885 = vmatpush1.msra.mxu0 0.0
    %2886 = vmatprep.subr.mxu0 0.0
    %2887 = vmatpush1.msra.mxu0 0.0
    %2888 = vmatprep.subr.mxu0 0.0
    %2889 = vmatpush1.msra.mxu0 0.0
    %2890 = vmatprep.subr.mxu0 0.0
    %2891 = vmatpush1.msra.mxu0 0.0
    %2892 = vmatprep.subr.mxu0 0.0
    %2893 = vmatpush1.msra.mxu0 0.0
    %2894 = vmatprep.subr.mxu0 0.0
    %2895 = vmatpush1.msra.mxu0 0.0
    %2896 = vmatprep.subr.mxu0 0.0
    %2897 = vmatpush1.msra.mxu0 0.0
    %2898 = vmatprep.subr.mxu0 0.0
    %2899 = vmatpush1.msra.mxu0 0.0
    %2900 = vmatprep.subr.mxu0 0.0
    %2901 = vmatpush1.msra.mxu0 0.0
    %2902 = vmatprep.subr.mxu0 0.0
    %2903 = vmatpush1.msra.mxu0 0.0
    %2904 = vmatprep.subr.mxu0 0.0
    %2905 = vmatpush1.msra.mxu0 0.0
    %2906 = vmatprep.subr.mxu0 0.0
    %2907 = vmatpush1.msra.mxu0 0.0
    %2908 = vmatprep.subr.mxu0 0.0
    %2909 = vmatpush1.msra.mxu0 0.0
    %2910 = vmatprep.subr.mxu0 0.0
    %2911 = vmatpush1.msra.mxu0 0.0
    %2912 = vmatprep.subr.mxu0 0.0
    %2913 = vmatpush1.msra.mxu0 0.0
    %2914 = vmatprep.subr.mxu0 0.0
    %2915 = vmatpush1.msra.mxu0 0.0
    %2916 = vmatprep.subr.mxu0 0.0
    %2917 = vmatpush1.msra.mxu0 0.0
    %2918 = vmatprep.subr.mxu0 0.0
    %2919 = vmatpush1.msra.mxu0 0.0
    %2920 = vmatprep.subr.mxu0 0.0
    %2921 = vmatpush1.msra.mxu0 0.0
    %2922 = vmatprep.subr.mxu0 0.0
    %2923 = vmatpush1.msra.mxu0 0.0
    %2924 = vmatprep.subr.mxu0 0.0
    %2925 = vmatpush1.msra.mxu0 0.0
    %2926 = vmatprep.subr.mxu0 0.0
    %2927 = vmatpush1.msra.mxu0 0.0
    %2928 = vmatprep.subr.mxu0 0.0
    %2929 = vmatpush1.msra.mxu0 0.0
    %2930 = vmatprep.subr.mxu0 0.0
    %2931 = vmatpush1.msra.mxu0 0.0
    %2932 = vmatprep.subr.mxu0 0.0
    %2933 = vmatpush1.msra.mxu0 0.0
    %2934 = vmatprep.subr.mxu0 0.0
    %2935 = vmatpush1.msra.mxu0 0.0
    %2936 = vmatprep.subr.mxu0 0.0
    %2937 = vmatpush1.msra.mxu0 0.0
    %2938 = vmatprep.mubr.f32.mxu0 0.0
    %2939 = vmatmul.mubr.f32.gmra.mrb[0].mxu0 %v2872
    %v2940 = vpop.f32.mrb[0].mxu0
    %v2941 = vadd.f32 %v636, %v2940
    %v2942 = vpop.f32.mrb[0].mxu0
    %2943 = vdwg.mxu0
    %v2944 = vadd.f32 %v582, %v2941
    %v2945 = vxor.u32 %v2944, 2147483648
    %v2946 = vmul.f32 %v2945, 1.442695
    %v2947 = vpow.pop %v2946
    %v2948 = vadd.f32 %v2947, 1.0
    %v2949 = vrcp.pop %v2948
    %v2950 = vmul.f32 1.0, %v2949
    %2952 = vrot.lane.b32.xlu0 %v2941, 64
    %v2953 = vpop.permute.xlu0 %2952
    %v2955 = vmul.f32 %v2950, %v2953
    %2957 = vrot.lane.b32.xlu0 %v2955, 64
    %v2958 = vpop.permute.xlu0 %2957
    %v2960 = vadd.f32 %v582, %v2958
    %v2961 = vtanh.pop %v2960
    %v2962 = vsub.f32 1.0, %v2950
    %2964 = vrot.lane.b32.xlu0 %v2961, 96
    %v2965 = vpop.permute.xlu0 %2964
    %v2967 = vmul.f32 %v2962, %v2965
    %v2968 = vmul.f32 %v2950, %v2868
    %v2969 = vadd.f32 %v2967, %v2968
    %v2970 = vsel %vm1487, %v2969, 0.0
    %v2971 = vsel %vm1487, %v2969, %v2868
    %2973 = vrot.lane.b32.xlu0 %v2971, 96
    %v2974 = vpop.permute.xlu0 %2973
    %v2975 = vsel %vm638, %v2974, 0
    %2977 = vmatprep.subr.mxu0 0.0
    %2978 = vmatpush1.msra.mxu0 %v613
    %2979 = vmatprep.subr.mxu0 0.0
    %2980 = vmatpush1.msra.mxu0 %v614
    %2981 = vmatprep.subr.mxu0 0.0
    %2982 = vmatpush1.msra.mxu0 %v615
    %2983 = vmatprep.subr.mxu0 0.0
    %2984 = vmatpush1.msra.mxu0 %v616
    %2985 = vmatprep.subr.mxu0 0.0
    %2986 = vmatpush1.msra.mxu0 0.0
    %2987 = vmatprep.subr.mxu0 0.0
    %2988 = vmatpush1.msra.mxu0 0.0
    %2989 = vmatprep.subr.mxu0 0.0
    %2990 = vmatpush1.msra.mxu0 0.0
    %2991 = vmatprep.subr.mxu0 0.0
    %2992 = vmatpush1.msra.mxu0 0.0
    %2993 = vmatprep.subr.mxu0 0.0
    %2994 = vmatpush1.msra.mxu0 0.0
    %2995 = vmatprep.subr.mxu0 0.0
    %2996 = vmatpush1.msra.mxu0 0.0
    %2997 = vmatprep.subr.mxu0 0.0
    %2998 = vmatpush1.msra.mxu0 0.0
    %2999 = vmatprep.subr.mxu0 0.0
    %3000 = vmatpush1.msra.mxu0 0.0
    %3001 = vmatprep.subr.mxu0 0.0
    %3002 = vmatpush1.msra.mxu0 0.0
    %3003 = vmatprep.subr.mxu0 0.0
    %3004 = vmatpush1.msra.mxu0 0.0
    %3005 = vmatprep.subr.mxu0 0.0
    %3006 = vmatpush1.msra.mxu0 0.0
    %3007 = vmatprep.subr.mxu0 0.0
    %3008 = vmatpush1.msra.mxu0 0.0
    %3009 = vmatprep.subr.mxu0 0.0
    %3010 = vmatpush1.msra.mxu0 0.0
    %3011 = vmatprep.subr.mxu0 0.0
    %3012 = vmatpush1.msra.mxu0 0.0
    %3013 = vmatprep.subr.mxu0 0.0
    %3014 = vmatpush1.msra.mxu0 0.0
    %3015 = vmatprep.subr.mxu0 0.0
    %3016 = vmatpush1.msra.mxu0 0.0
    %3017 = vmatprep.subr.mxu0 0.0
    %3018 = vmatpush1.msra.mxu0 0.0
    %3019 = vmatprep.subr.mxu0 0.0
    %3020 = vmatpush1.msra.mxu0 0.0
    %3021 = vmatprep.subr.mxu0 0.0
    %3022 = vmatpush1.msra.mxu0 0.0
    %3023 = vmatprep.subr.mxu0 0.0
    %3024 = vmatpush1.msra.mxu0 0.0
    %3025 = vmatprep.subr.mxu0 0.0
    %3026 = vmatpush1.msra.mxu0 0.0
    %3027 = vmatprep.subr.mxu0 0.0
    %3028 = vmatpush1.msra.mxu0 0.0
    %3029 = vmatprep.subr.mxu0 0.0
    %3030 = vmatpush1.msra.mxu0 0.0
    %3031 = vmatprep.subr.mxu0 0.0
    %3032 = vmatpush1.msra.mxu0 0.0
    %3033 = vmatprep.subr.mxu0 0.0
    %3034 = vmatpush1.msra.mxu0 0.0
    %3035 = vmatprep.subr.mxu0 0.0
    %3036 = vmatpush1.msra.mxu0 0.0
    %3037 = vmatprep.subr.mxu0 0.0
    %3038 = vmatpush1.msra.mxu0 0.0
    %3039 = vmatprep.subr.mxu0 0.0
    %3040 = vmatpush1.msra.mxu0 0.0
    %3041 = vmatprep.mubr.f32.mxu0 0.0
    %3042 = vmatmul.mubr.f32.gmra.mrb[0].mxu0 %v2975
    %v3043 = vpop.f32.mrb[0].mxu0
    %v3044 = vadd.f32 %v636, %v3043
    %v3045 = vpop.f32.mrb[0].mxu0
    %3046 = vdwg.mxu0
    %v3047 = vadd.f32 %v587, %v3044
    %v3048 = vxor.u32 %v3047, 2147483648
    %v3049 = vmul.f32 %v3048, 1.442695
    %v3050 = vpow.pop %v3049
    %v3051 = vadd.f32 %v3050, 1.0
    %v3052 = vrcp.pop %v3051
    %v3053 = vmul.f32 1.0, %v3052
    %3055 = vrot.lane.b32.xlu0 %v3044, 64
    %v3056 = vpop.permute.xlu0 %3055
    %v3058 = vmul.f32 %v3053, %v3056
    %3060 = vrot.lane.b32.xlu0 %v3058, 64
    %v3061 = vpop.permute.xlu0 %3060
    %v3063 = vadd.f32 %v587, %v3061
    %v3064 = vtanh.pop %v3063
    %v3065 = vsub.f32 1.0, %v3053
    %3067 = vrot.lane.b32.xlu0 %v3064, 96
    %v3068 = vpop.permute.xlu0 %3067
    %v3070 = vmul.f32 %v3065, %v3068
    %v3071 = vmul.f32 %v3053, %v2971
    %v3072 = vadd.f32 %v3070, %v3071
    %v3073 = vsel %vm1494, %v3072, 0.0
    %v3074 = vsel %vm1494, %v3072, %v2971
    %3076 = vrot.lane.b32.xlu0 %v3074, 96
    %v3077 = vpop.permute.xlu0 %3076
    %v3078 = vsel %vm638, %v3077, 0
    %3080 = vmatprep.subr.mxu0 0.0
    %3081 = vmatpush1.msra.mxu0 %v613
    %3082 = vmatprep.subr.mxu0 0.0
    %3083 = vmatpush1.msra.mxu0 %v614
    %3084 = vmatprep.subr.mxu0 0.0
    %3085 = vmatpush1.msra.mxu0 %v615
    %3086 = vmatprep.subr.mxu0 0.0
    %3087 = vmatpush1.msra.mxu0 %v616
    %3088 = vmatprep.subr.mxu0 0.0
    %3089 = vmatpush1.msra.mxu0 0.0
    %3090 = vmatprep.subr.mxu0 0.0
    %3091 = vmatpush1.msra.mxu0 0.0
    %3092 = vmatprep.subr.mxu0 0.0
    %3093 = vmatpush1.msra.mxu0 0.0
    %3094 = vmatprep.subr.mxu0 0.0
    %3095 = vmatpush1.msra.mxu0 0.0
    %3096 = vmatprep.subr.mxu0 0.0
    %3097 = vmatpush1.msra.mxu0 0.0
    %3098 = vmatprep.subr.mxu0 0.0
    %3099 = vmatpush1.msra.mxu0 0.0
    %3100 = vmatprep.subr.mxu0 0.0
    %3101 = vmatpush1.msra.mxu0 0.0
    %3102 = vmatprep.subr.mxu0 0.0
    %3103 = vmatpush1.msra.mxu0 0.0
    %3104 = vmatprep.subr.mxu0 0.0
    %3105 = vmatpush1.msra.mxu0 0.0
    %3106 = vmatprep.subr.mxu0 0.0
    %3107 = vmatpush1.msra.mxu0 0.0
    %3108 = vmatprep.subr.mxu0 0.0
    %3109 = vmatpush1.msra.mxu0 0.0
    %3110 = vmatprep.subr.mxu0 0.0
    %3111 = vmatpush1.msra.mxu0 0.0
    %3112 = vmatprep.subr.mxu0 0.0
    %3113 = vmatpush1.msra.mxu0 0.0
    %3114 = vmatprep.subr.mxu0 0.0
    %3115 = vmatpush1.msra.mxu0 0.0
    %3116 = vmatprep.subr.mxu0 0.0
    %3117 = vmatpush1.msra.mxu0 0.0
    %3118 = vmatprep.subr.mxu0 0.0
    %3119 = vmatpush1.msra.mxu0 0.0
    %3120 = vmatprep.subr.mxu0 0.0
    %3121 = vmatpush1.msra.mxu0 0.0
    %3122 = vmatprep.subr.mxu0 0.0
    %3123 = vmatpush1.msra.mxu0 0.0
    %3124 = vmatprep.subr.mxu0 0.0
    %3125 = vmatpush1.msra.mxu0 0.0
    %3126 = vmatprep.subr.mxu0 0.0
    %3127 = vmatpush1.msra.mxu0 0.0
    %3128 = vmatprep.subr.mxu0 0.0
    %3129 = vmatpush1.msra.mxu0 0.0
    %3130 = vmatprep.subr.mxu0 0.0
    %3131 = vmatpush1.msra.mxu0 0.0
    %3132 = vmatprep.subr.mxu0 0.0
    %3133 = vmatpush1.msra.mxu0 0.0
    %3134 = vmatprep.subr.mxu0 0.0
    %3135 = vmatpush1.msra.mxu0 0.0
    %3136 = vmatprep.subr.mxu0 0.0
    %3137 = vmatpush1.msra.mxu0 0.0
    %3138 = vmatprep.subr.mxu0 0.0
    %3139 = vmatpush1.msra.mxu0 0.0
    %3140 = vmatprep.subr.mxu0 0.0
    %3141 = vmatpush1.msra.mxu0 0.0
    %3142 = vmatprep.subr.mxu0 0.0
    %3143 = vmatpush1.msra.mxu0 0.0
    %3144 = vmatprep.mubr.f32.mxu0 0.0
    %3145 = vmatmul.mubr.f32.gmra.mrb[0].mxu0 %v3078
    %v3146 = vpop.f32.mrb[0].mxu0
    %v3147 = vadd.f32 %v636, %v3146
    %v3148 = vpop.f32.mrb[0].mxu0
    %3149 = vdwg.mxu0
    %v3150 = vadd.f32 %v592, %v3147
    %v3151 = vxor.u32 %v3150, 2147483648
    %v3152 = vmul.f32 %v3151, 1.442695
    %v3153 = vpow.pop %v3152
    %v3154 = vadd.f32 %v3153, 1.0
    %v3155 = vrcp.pop %v3154
    %v3156 = vmul.f32 1.0, %v3155
    %3158 = vrot.lane.b32.xlu0 %v3147, 64
    %v3159 = vpop.permute.xlu0 %3158
    %v3161 = vmul.f32 %v3156, %v3159
    %3163 = vrot.lane.b32.xlu0 %v3161, 64
    %v3164 = vpop.permute.xlu0 %3163
    %v3166 = vadd.f32 %v592, %v3164
    %v3167 = vtanh.pop %v3166
    %v3168 = vsub.f32 1.0, %v3156
    %3170 = vrot.lane.b32.xlu0 %v3167, 96
    %v3171 = vpop.permute.xlu0 %3170
    %v3173 = vmul.f32 %v3168, %v3171
    %v3174 = vmul.f32 %v3156, %v3074
    %v3175 = vadd.f32 %v3173, %v3174
    %v3176 = vsel %vm1278, %v3175, 0.0
    %v3177 = vsel %vm1278, %v3175, %v3074
    %3179 = vrot.lane.b32.xlu0 %v3177, 96
    %v3180 = vpop.permute.xlu0 %3179
    %v3181 = vsel %vm638, %v3180, 0
    %3183 = vmatprep.subr.mxu0 0.0
    %3184 = vmatpush1.msra.mxu0 %v613
    %3185 = vmatprep.subr.mxu0 0.0
    %3186 = vmatpush1.msra.mxu0 %v614
    %3187 = vmatprep.subr.mxu0 0.0
    %3188 = vmatpush1.msra.mxu0 %v615
    %3189 = vmatprep.subr.mxu0 0.0
    %3190 = vmatpush1.msra.mxu0 %v616
    %3191 = vmatprep.subr.mxu0 0.0
    %3192 = vmatpush1.msra.mxu0 0.0
    %3193 = vmatprep.subr.mxu0 0.0
    %3194 = vmatpush1.msra.mxu0 0.0
    %3195 = vmatprep.subr.mxu0 0.0
    %3196 = vmatpush1.msra.mxu0 0.0
    %3197 = vmatprep.subr.mxu0 0.0
    %3198 = vmatpush1.msra.mxu0 0.0
    %3199 = vmatprep.subr.mxu0 0.0
    %3200 = vmatpush1.msra.mxu0 0.0
    %3201 = vmatprep.subr.mxu0 0.0
    %3202 = vmatpush1.msra.mxu0 0.0
    %3203 = vmatprep.subr.mxu0 0.0
    %3204 = vmatpush1.msra.mxu0 0.0
    %3205 = vmatprep.subr.mxu0 0.0
    %3206 = vmatpush1.msra.mxu0 0.0
    %3207 = vmatprep.subr.mxu0 0.0
    %3208 = vmatpush1.msra.mxu0 0.0
    %3209 = vmatprep.subr.mxu0 0.0
    %3210 = vmatpush1.msra.mxu0 0.0
    %3211 = vmatprep.subr.mxu0 0.0
    %3212 = vmatpush1.msra.mxu0 0.0
    %3213 = vmatprep.subr.mxu0 0.0
    %3214 = vmatpush1.msra.mxu0 0.0
    %3215 = vmatprep.subr.mxu0 0.0
    %3216 = vmatpush1.msra.mxu0 0.0
    %3217 = vmatprep.subr.mxu0 0.0
    %3218 = vmatpush1.msra.mxu0 0.0
    %3219 = vmatprep.subr.mxu0 0.0
    %3220 = vmatpush1.msra.mxu0 0.0
    %3221 = vmatprep.subr.mxu0 0.0
    %3222 = vmatpush1.msra.mxu0 0.0
    %3223 = vmatprep.subr.mxu0 0.0
    %3224 = vmatpush1.msra.mxu0 0.0
    %3225 = vmatprep.subr.mxu0 0.0
    %3226 = vmatpush1.msra.mxu0 0.0
    %3227 = vmatprep.subr.mxu0 0.0
    %3228 = vmatpush1.msra.mxu0 0.0
    %3229 = vmatprep.subr.mxu0 0.0
    %3230 = vmatpush1.msra.mxu0 0.0
    %3231 = vmatprep.subr.mxu0 0.0
    %3232 = vmatpush1.msra.mxu0 0.0
    %3233 = vmatprep.subr.mxu0 0.0
    %3234 = vmatpush1.msra.mxu0 0.0
    %3235 = vmatprep.subr.mxu0 0.0
    %3236 = vmatpush1.msra.mxu0 0.0
    %3237 = vmatprep.subr.mxu0 0.0
    %3238 = vmatpush1.msra.mxu0 0.0
    %3239 = vmatprep.subr.mxu0 0.0
    %3240 = vmatpush1.msra.mxu0 0.0
    %3241 = vmatprep.subr.mxu0 0.0
    %3242 = vmatpush1.msra.mxu0 0.0
    %3243 = vmatprep.subr.mxu0 0.0
    %3244 = vmatpush1.msra.mxu0 0.0
    %3245 = vmatprep.subr.mxu0 0.0
    %3246 = vmatpush1.msra.mxu0 0.0
    %3247 = vmatprep.mubr.f32.mxu0 0.0
    %3248 = vmatmul.mubr.f32.gmra.mrb[0].mxu0 %v3181
    %v3249 = vpop.f32.mrb[0].mxu0
    %v3250 = vadd.f32 %v636, %v3249
    %v3251 = vpop.f32.mrb[0].mxu0
    %3252 = vdwg.mxu0
    %v3253 = vadd.f32 %v597, %v3250
    %v3254 = vxor.u32 %v3253, 2147483648
    %v3255 = vmul.f32 %v3254, 1.442695
    %v3256 = vpow.pop %v3255
    %v3257 = vadd.f32 %v3256, 1.0
    %v3258 = vrcp.pop %v3257
    %v3259 = vmul.f32 1.0, %v3258
    %3261 = vrot.lane.b32.xlu0 %v3250, 64
    %v3262 = vpop.permute.xlu0 %3261
    %v3264 = vmul.f32 %v3259, %v3262
    %3266 = vrot.lane.b32.xlu0 %v3264, 64
    %v3267 = vpop.permute.xlu0 %3266
    %v3269 = vadd.f32 %v597, %v3267
    %v3270 = vtanh.pop %v3269
    %v3271 = vsub.f32 1.0, %v3259
    %3273 = vrot.lane.b32.xlu0 %v3270, 96
    %v3274 = vpop.permute.xlu0 %3273
    %v3276 = vmul.f32 %v3271, %v3274
    %v3277 = vmul.f32 %v3259, %v3177
    %v3278 = vadd.f32 %v3276, %v3277
    %v3279 = vsel %vm1062, %v3278, 0.0
    %v3280 = vsel %vm1062, %v3278, %v3177
    %3282 = vrot.lane.b32.xlu0 %v3280, 96
    %v3283 = vpop.permute.xlu0 %3282
    %v3284 = vsel %vm638, %v3283, 0
    %3286 = vmatprep.subr.mxu0 0.0
    %3287 = vmatpush1.msra.mxu0 %v613
    %3288 = vmatprep.subr.mxu0 0.0
    %3289 = vmatpush1.msra.mxu0 %v614
    %3290 = vmatprep.subr.mxu0 0.0
    %3291 = vmatpush1.msra.mxu0 %v615
    %3292 = vmatprep.subr.mxu0 0.0
    %3293 = vmatpush1.msra.mxu0 %v616
    %3294 = vmatprep.subr.mxu0 0.0
    %3295 = vmatpush1.msra.mxu0 0.0
    %3296 = vmatprep.subr.mxu0 0.0
    %3297 = vmatpush1.msra.mxu0 0.0
    %3298 = vmatprep.subr.mxu0 0.0
    %3299 = vmatpush1.msra.mxu0 0.0
    %3300 = vmatprep.subr.mxu0 0.0
    %3301 = vmatpush1.msra.mxu0 0.0
    %3302 = vmatprep.subr.mxu0 0.0
    %3303 = vmatpush1.msra.mxu0 0.0
    %3304 = vmatprep.subr.mxu0 0.0
    %3305 = vmatpush1.msra.mxu0 0.0
    %3306 = vmatprep.subr.mxu0 0.0
    %3307 = vmatpush1.msra.mxu0 0.0
    %3308 = vmatprep.subr.mxu0 0.0
    %3309 = vmatpush1.msra.mxu0 0.0
    %3310 = vmatprep.subr.mxu0 0.0
    %3311 = vmatpush1.msra.mxu0 0.0
    %3312 = vmatprep.subr.mxu0 0.0
    %3313 = vmatpush1.msra.mxu0 0.0
    %3314 = vmatprep.subr.mxu0 0.0
    %3315 = vmatpush1.msra.mxu0 0.0
    %3316 = vmatprep.subr.mxu0 0.0
    %3317 = vmatpush1.msra.mxu0 0.0
    %3318 = vmatprep.subr.mxu0 0.0
    %3319 = vmatpush1.msra.mxu0 0.0
    %3320 = vmatprep.subr.mxu0 0.0
    %3321 = vmatpush1.msra.mxu0 0.0
    %3322 = vmatprep.subr.mxu0 0.0
    %3323 = vmatpush1.msra.mxu0 0.0
    %3324 = vmatprep.subr.mxu0 0.0
    %3325 = vmatpush1.msra.mxu0 0.0
    %3326 = vmatprep.subr.mxu0 0.0
    %3327 = vmatpush1.msra.mxu0 0.0
    %3328 = vmatprep.subr.mxu0 0.0
    %3329 = vmatpush1.msra.mxu0 0.0
    %3330 = vmatprep.subr.mxu0 0.0
    %3331 = vmatpush1.msra.mxu0 0.0
    %3332 = vmatprep.subr.mxu0 0.0
    %3333 = vmatpush1.msra.mxu0 0.0
    %3334 = vmatprep.subr.mxu0 0.0
    %3335 = vmatpush1.msra.mxu0 0.0
    %3336 = vmatprep.subr.mxu0 0.0
    %3337 = vmatpush1.msra.mxu0 0.0
    %3338 = vmatprep.subr.mxu0 0.0
    %3339 = vmatpush1.msra.mxu0 0.0
    %3340 = vmatprep.subr.mxu0 0.0
    %3341 = vmatpush1.msra.mxu0 0.0
    %3342 = vmatprep.subr.mxu0 0.0
    %3343 = vmatpush1.msra.mxu0 0.0
    %3344 = vmatprep.subr.mxu0 0.0
    %3345 = vmatpush1.msra.mxu0 0.0
    %3346 = vmatprep.subr.mxu0 0.0
    %3347 = vmatpush1.msra.mxu0 0.0
    %3348 = vmatprep.subr.mxu0 0.0
    %3349 = vmatpush1.msra.mxu0 0.0
    %3350 = vmatprep.mubr.f32.mxu0 0.0
    %3351 = vmatmul.mubr.f32.gmra.mrb[0].mxu0 %v3284
    %v3352 = vpop.f32.mrb[0].mxu0
    %v3353 = vadd.f32 %v636, %v3352
    %v3354 = vpop.f32.mrb[0].mxu0
    %3355 = vdwg.mxu0
    %v3356 = vadd.f32 %v602, %v3353
    %v3357 = vxor.u32 %v3356, 2147483648
    %v3358 = vmul.f32 %v3357, 1.442695
    %v3359 = vpow.pop %v3358
    %v3360 = vadd.f32 %v3359, 1.0
    %v3361 = vrcp.pop %v3360
    %v3362 = vmul.f32 1.0, %v3361
    %3364 = vrot.lane.b32.xlu0 %v3353, 64
    %v3365 = vpop.permute.xlu0 %3364
    %v3367 = vmul.f32 %v3362, %v3365
    %3369 = vrot.lane.b32.xlu0 %v3367, 64
    %v3370 = vpop.permute.xlu0 %3369
    %v3372 = vadd.f32 %v602, %v3370
    %v3373 = vtanh.pop %v3372
    %v3374 = vsub.f32 1.0, %v3362
    %3376 = vrot.lane.b32.xlu0 %v3373, 96
    %v3377 = vpop.permute.xlu0 %3376
    %v3379 = vmul.f32 %v3374, %v3377
    %v3380 = vmul.f32 %v3362, %v3280
    %v3381 = vadd.f32 %v3379, %v3380
    %v3382 = vsel %vm846, %v3381, 0.0
    %v3383 = vld [vmem:[#allocation19] sm:$0xff]
    %v3384 = vld [vmem:[#allocation19 + $0x8] sm:$0xff]
    %v3385 = vld [vmem:[#allocation19 + $0x10] sm:$0xff]
    %v3386 = vld [vmem:[#allocation19 + $0x18] sm:$0xff]
    %v3387 = vld [vmem:[#allocation20] sm:$0x1]
    %v3389 = vlaneseq
    %v3390 = vshrl.u32 %v3389, 7
    %v3391 = vsub.s32 0, %v3390
    %v3392 = vrot.slane %v3387, %v3391
    %3402 = vrot.lane.b32.xlu0 %v2661, 96
    %v3403 = vpop.permute.xlu0 %3402
    %3404 = vrot.lane.b32.xlu0 %v2764, 96
    %v3405 = vpop.permute.xlu0 %3404
    %3406 = vrot.lane.b32.xlu0 %v2867, 96
    %v3407 = vpop.permute.xlu0 %3406
    %3408 = vrot.lane.b32.xlu0 %v2970, 96
    %v3409 = vpop.permute.xlu0 %3408
    %3410 = vrot.lane.b32.xlu0 %v3073, 96
    %v3411 = vpop.permute.xlu0 %3410
    %3412 = vrot.lane.b32.xlu0 %v3176, 96
    %v3413 = vpop.permute.xlu0 %3412
    %3414 = vrot.lane.b32.xlu0 %v3279, 96
    %v3415 = vpop.permute.xlu0 %3414
    %3416 = vrot.lane.b32.xlu0 %v3382, 96
    %v3417 = vpop.permute.xlu0 %3416
    %v3418 = vsel %vm638, %v3403, 0
    %v3420 = vsel %vm638, %v3405, 0
    %v3422 = vsel %vm638, %v3407, 0
    %v3424 = vsel %vm638, %v3409, 0
    %v3426 = vsel %vm638, %v3411, 0
    %v3428 = vsel %vm638, %v3413, 0
    %v3430 = vsel %vm638, %v3415, 0
    %v3432 = vsel %vm638, %v3417, 0
    %3434 = vmatprep.subr.mxu0 0.0
    %3435 = vmatpush1.msra.mxu0 %v3383
    %3436 = vmatprep.subr.mxu0 0.0
    %3437 = vmatpush1.msra.mxu0 %v3384
    %3438 = vmatprep.subr.mxu0 0.0
    %3439 = vmatpush1.msra.mxu0 %v3385
    %3440 = vmatprep.subr.mxu0 0.0
    %3441 = vmatpush1.msra.mxu0 %v3386
    %3442 = vmatprep.subr.mxu0 0.0
    %3443 = vmatpush1.msra.mxu0 0.0
    %3444 = vmatprep.subr.mxu0 0.0
    %3445 = vmatpush1.msra.mxu0 0.0
    %3446 = vmatprep.subr.mxu0 0.0
    %3447 = vmatpush1.msra.mxu0 0.0
    %3448 = vmatprep.subr.mxu0 0.0
    %3449 = vmatpush1.msra.mxu0 0.0
    %3450 = vmatprep.subr.mxu0 0.0
    %3451 = vmatpush1.msra.mxu0 0.0
    %3452 = vmatprep.subr.mxu0 0.0
    %3453 = vmatpush1.msra.mxu0 0.0
    %3454 = vmatprep.subr.mxu0 0.0
    %3455 = vmatpush1.msra.mxu0 0.0
    %3456 = vmatprep.subr.mxu0 0.0
    %3457 = vmatpush1.msra.mxu0 0.0
    %3458 = vmatprep.subr.mxu0 0.0
    %3459 = vmatpush1.msra.mxu0 0.0
    %3460 = vmatprep.subr.mxu0 0.0
    %3461 = vmatpush1.msra.mxu0 0.0
    %3462 = vmatprep.subr.mxu0 0.0
    %3463 = vmatpush1.msra.mxu0 0.0
    %3464 = vmatprep.subr.mxu0 0.0
    %3465 = vmatpush1.msra.mxu0 0.0
    %3466 = vmatprep.subr.mxu0 0.0
    %3467 = vmatpush1.msra.mxu0 0.0
    %3468 = vmatprep.subr.mxu0 0.0
    %3469 = vmatpush1.msra.mxu0 0.0
    %3470 = vmatprep.subr.mxu0 0.0
    %3471 = vmatpush1.msra.mxu0 0.0
    %3472 = vmatprep.subr.mxu0 0.0
    %3473 = vmatpush1.msra.mxu0 0.0
    %3474 = vmatprep.subr.mxu0 0.0
    %3475 = vmatpush1.msra.mxu0 0.0
    %3476 = vmatprep.subr.mxu0 0.0
    %3477 = vmatpush1.msra.mxu0 0.0
    %3478 = vmatprep.subr.mxu0 0.0
    %3479 = vmatpush1.msra.mxu0 0.0
    %3480 = vmatprep.subr.mxu0 0.0
    %3481 = vmatpush1.msra.mxu0 0.0
    %3482 = vmatprep.subr.mxu0 0.0
    %3483 = vmatpush1.msra.mxu0 0.0
    %3484 = vmatprep.subr.mxu0 0.0
    %3485 = vmatpush1.msra.mxu0 0.0
    %3486 = vmatprep.subr.mxu0 0.0
    %3487 = vmatpush1.msra.mxu0 0.0
    %3488 = vmatprep.subr.mxu0 0.0
    %3489 = vmatpush1.msra.mxu0 0.0
    %3490 = vmatprep.subr.mxu0 0.0
    %3491 = vmatpush1.msra.mxu0 0.0
    %3492 = vmatprep.subr.mxu0 0.0
    %3493 = vmatpush1.msra.mxu0 0.0
    %3494 = vmatprep.subr.mxu0 0.0
    %3495 = vmatpush1.msra.mxu0 0.0
    %3496 = vmatprep.subr.mxu0 0.0
    %3497 = vmatpush1.msra.mxu0 0.0
    %3498 = vmatprep.mubr.f32.mxu0 0.0
    %3499 = vmatmul.mubr.f32.gmra.mrb[0].mxu0 %v3418
    %v3500 = vpop.f32.mrb[0].mxu0
    %v3501 = vadd.f32 %v3392, %v3500
    %v3502 = vpop.f32.mrb[0].mxu0
    %3503 = vmatprep.mubr.f32.mxu0 0.0
    %3504 = vmatmul.mubr.f32.gmra.mrb[0].mxu0 %v3420
    %v3505 = vpop.f32.mrb[0].mxu0
    %v3506 = vadd.f32 %v3392, %v3505
    %v3507 = vpop.f32.mrb[0].mxu0
    %3508 = vmatprep.mubr.f32.mxu0 0.0
    %3509 = vmatmul.mubr.f32.gmra.mrb[0].mxu0 %v3422
    %v3510 = vpop.f32.mrb[0].mxu0
    %v3511 = vadd.f32 %v3392, %v3510
    %v3512 = vpop.f32.mrb[0].mxu0
    %3513 = vmatprep.mubr.f32.mxu0 0.0
    %3514 = vmatmul.mubr.f32.gmra.mrb[0].mxu0 %v3424
    %v3515 = vpop.f32.mrb[0].mxu0
    %v3516 = vadd.f32 %v3392, %v3515
    %v3517 = vpop.f32.mrb[0].mxu0
    %3518 = vmatprep.mubr.f32.mxu0 0.0
    %3519 = vmatmul.mubr.f32.gmra.mrb[0].mxu0 %v3426
    %v3520 = vpop.f32.mrb[0].mxu0
    %v3521 = vadd.f32 %v3392, %v3520
    %v3522 = vpop.f32.mrb[0].mxu0
    %3523 = vmatprep.mubr.f32.mxu0 0.0
    %3524 = vmatmul.mubr.f32.gmra.mrb[0].mxu0 %v3428
    %v3525 = vpop.f32.mrb[0].mxu0
    %v3526 = vadd.f32 %v3392, %v3525
    %v3527 = vpop.f32.mrb[0].mxu0
    %3528 = vmatprep.mubr.f32.mxu0 0.0
    %3529 = vmatmul.mubr.f32.gmra.mrb[0].mxu0 %v3430
    %v3530 = vpop.f32.mrb[0].mxu0
    %v3531 = vadd.f32 %v3392, %v3530
    %v3532 = vpop.f32.mrb[0].mxu0
    %3533 = vmatprep.mubr.f32.mxu0 0.0
    %3534 = vmatmul.mubr.f32.gmra.mrb[0].mxu0 %v3432
    %v3535 = vpop.f32.mrb[0].mxu0
    %v3536 = vadd.f32 %v3392, %v3535
    %v3537 = vpop.f32.mrb[0].mxu0
    %3538 = vdwg.mxu0
    %3539 = vmax.xlane.f32.xlu0 %v3501
    %v3540 = vpop.xlane.xlu0 %3539
    %3541 = vmax.xlane.f32.xlu0 %v3506
    %v3542 = vpop.xlane.xlu0 %3541
    %3543 = vmax.xlane.f32.xlu0 %v3511
    %v3544 = vpop.xlane.xlu0 %3543
    %3545 = vmax.xlane.f32.xlu0 %v3516
    %v3546 = vpop.xlane.xlu0 %3545
    %3547 = vmax.xlane.f32.xlu0 %v3521
    %v3548 = vpop.xlane.xlu0 %3547
    %3549 = vmax.xlane.f32.xlu0 %v3526
    %v3550 = vpop.xlane.xlu0 %3549
    %3551 = vmax.xlane.f32.xlu0 %v3531
    %v3552 = vpop.xlane.xlu0 %3551
    %3553 = vmax.xlane.f32.xlu0 %v3536
    %v3554 = vpop.xlane.xlu0 %3553
    %v3555 = vsub.f32 %v3501, %v3540
    %v3556 = vsub.f32 %v3506, %v3542
    %v3557 = vsub.f32 %v3511, %v3544
    %v3558 = vsub.f32 %v3516, %v3546
    %v3559 = vsub.f32 %v3521, %v3548
    %v3560 = vsub.f32 %v3526, %v3550
    %v3561 = vsub.f32 %v3531, %v3552
    %v3562 = vsub.f32 %v3536, %v3554
    %v3563 = vmul.f32 %v3555, 1.442695
    %v3564 = vpow.pop %v3563
    %v3565 = vmul.f32 %v3556, 1.442695
    %v3566 = vpow.pop %v3565
    %v3567 = vmul.f32 %v3557, 1.442695
    %v3568 = vpow.pop %v3567
    %v3569 = vmul.f32 %v3558, 1.442695
    %v3570 = vpow.pop %v3569
    %v3571 = vmul.f32 %v3559, 1.442695
    %v3572 = vpow.pop %v3571
    %v3573 = vmul.f32 %v3560, 1.442695
    %v3574 = vpow.pop %v3573
    %v3575 = vmul.f32 %v3561, 1.442695
    %v3576 = vpow.pop %v3575
    %v3577 = vmul.f32 %v3562, 1.442695
    %v3578 = vpow.pop %v3577
    %3579 = vadd.xlane.f32.xlu0 %v3564
    %v3580 = vpop.xlane.xlu0 %3579
    %3581 = vadd.xlane.f32.xlu0 %v3566
    %v3582 = vpop.xlane.xlu0 %3581
    %3583 = vadd.xlane.f32.xlu0 %v3568
    %v3584 = vpop.xlane.xlu0 %3583
    %3585 = vadd.xlane.f32.xlu0 %v3570
    %v3586 = vpop.xlane.xlu0 %3585
    %3587 = vadd.xlane.f32.xlu0 %v3572
    %v3588 = vpop.xlane.xlu0 %3587
    %3589 = vadd.xlane.f32.xlu0 %v3574
    %v3590 = vpop.xlane.xlu0 %3589
    %3591 = vadd.xlane.f32.xlu0 %v3576
    %v3592 = vpop.xlane.xlu0 %3591
    %3593 = vadd.xlane.f32.xlu0 %v3578
    %v3594 = vpop.xlane.xlu0 %3593
    %v3595 = vlog2.pop %v3580
    %v3596 = vmul.f32 %v3595, 0.6931472
    %v3597 = vlog2.pop %v3582
    %v3598 = vmul.f32 %v3597, 0.6931472
    %v3599 = vlog2.pop %v3584
    %v3600 = vmul.f32 %v3599, 0.6931472
    %v3601 = vlog2.pop %v3586
    %v3602 = vmul.f32 %v3601, 0.6931472
    %v3603 = vlog2.pop %v3588
    %v3604 = vmul.f32 %v3603, 0.6931472
    %v3605 = vlog2.pop %v3590
    %v3606 = vmul.f32 %v3605, 0.6931472
    %v3607 = vlog2.pop %v3592
    %v3608 = vmul.f32 %v3607, 0.6931472
    %v3609 = vlog2.pop %v3594
    %v3610 = vmul.f32 %v3609, 0.6931472
    %v3611 = vsub.f32 %v3555, %v3596
    %v3612 = vsub.f32 %v3556, %v3598
    %v3613 = vsub.f32 %v3557, %v3600
    %v3614 = vsub.f32 %v3558, %v3602
    %v3615 = vsub.f32 %v3559, %v3604
    %v3616 = vsub.f32 %v3560, %v3606
    %v3617 = vsub.f32 %v3561, %v3608
    %v3618 = vsub.f32 %v3562, %v3610
    %3619 = vst [vmem:[#allocation22] sm:$0xff] %v3611
    %3620 = vst [vmem:[#allocation22 + $0x8] sm:$0xff] %v3612
    %3621 = vst [vmem:[#allocation22 + $0x10] sm:$0xff] %v3613
    %3622 = vst [vmem:[#allocation22 + $0x18] sm:$0xff] %v3614
    %3623 = vst [vmem:[#allocation22 + $0x20] sm:$0xff] %v3615
    %3624 = vst [vmem:[#allocation22 + $0x28] sm:$0xff] %v3616
    %3625 = vst [vmem:[#allocation22 + $0x30] sm:$0xff] %v3617
    %3626 = vst [vmem:[#allocation22 + $0x38] sm:$0xff] %v3618
    // Predicated region
    $region130: #{sentence_vae_forward.1} parent=1 // pred_check
      _
    $region131: #{sentence_vae_forward.1} parent=1 // pred_check_branch
      %3628 = sbr.rel (0) target = $region133
    $region132: #{sentence_vae_forward.1} parent=1 // pred_region
      %s3630 = ssub.s32 1024, 1024
      %3631 = vsyncadd [#allocation4], %s3630
      %s3632 = sshll.u32 [#allocation22], 4
      %s3633 = int_to_ptr.vmem [resolvable:$true] %s3632
      %3638 = dma.vmem_to_hbm [thread:$0]  %s3633, 1024, %s20, [#allocation4], 128, 128, 8
    $region133: #{sentence_vae_forward.1} parent=1 // pred_fallthru
      _
    // Predicated region
    $region134: #{sentence_vae_forward.1} parent=1 // pred_check
      _
    $region135: #{sentence_vae_forward.1} parent=1 // pred_check_branch
      %3640 = sbr.rel (0) target = $region137
    $region136: #{sentence_vae_forward.1} parent=1 // pred_region
      %s3642 = ssub.s32 16, 16
      %3643 = vsyncadd [#allocation24], %s3642
      %s3645 = sshll.u32 [#allocation23], 4
      %s3646 = int_to_ptr.vmem [resolvable:$true] %s3645
      %3648 = dma.vmem_to_hbm [thread:$0]  %s3646, 16, %s21, [#allocation24]
    $region137: #{sentence_vae_forward.1} parent=1 // pred_fallthru
      _
    // Predicated region
    $region138: #{sentence_vae_forward.1} parent=1 // pred_check
      _
    $region139: #{sentence_vae_forward.1} parent=1 // pred_check_branch
      %3650 = sbr.rel (0) target = $region141
    $region140: #{sentence_vae_forward.1} parent=1 // pred_region
      %s3652 = ssub.s32 16, 16
      %3653 = vsyncadd [#allocation24], %s3652
      %s3655 = sshll.u32 [#allocation25], 4
      %s3656 = int_to_ptr.vmem [resolvable:$true] %s3655
      %3658 = dma.vmem_to_hbm [thread:$0]  %s3656, 16, %s22, [#allocation24]
    $region141: #{sentence_vae_forward.1} parent=1 // pred_fallthru
      _
    // Predicated region
    $region142: #{sentence_vae_forward.1} parent=1 // pred_check
      _
    $region143: #{sentence_vae_forward.1} parent=1 // pred_check_branch
      %3660 = sbr.rel (0) target = $region145
    $region144: #{sentence_vae_forward.1} parent=1 // pred_region
      %s3662 = ssub.s32 16, 16
      %3663 = vsyncadd [#allocation27], %s3662
      %s3665 = sshll.u32 [#allocation26], 4
      %s3666 = int_to_ptr.vmem [resolvable:$true] %s3665
      %3668 = dma.vmem_to_hbm [thread:$0]  %s3666, 16, %s23, [#allocation27]
    $region145: #{sentence_vae_forward.1} parent=1 // pred_fallthru
      _
    // Predicated region
    $region146: #{sentence_vae_forward.1} parent=1 // pred_check
      _
    $region147: #{sentence_vae_forward.1} parent=1 // pred_check_branch
      %3670 = sbr.rel (0) target = $region149
    $region148: #{sentence_vae_forward.1} parent=1 // pred_region
      %3671 = dma.done [#allocation4], 1024
    $region149: #{sentence_vae_forward.1} parent=1 // pred_fallthru
      _
    // Predicated region
    $region150: #{sentence_vae_forward.1} parent=1 // pred_check
      _
    $region151: #{sentence_vae_forward.1} parent=1 // pred_check_branch
      %3673 = sbr.rel (0) target = $region153
    $region152: #{sentence_vae_forward.1} parent=1 // pred_region
      %3674 = dma.done [#allocation24], 16
    $region153: #{sentence_vae_forward.1} parent=1 // pred_fallthru
      _
    // Predicated region
    $region154: #{sentence_vae_forward.1} parent=1 // pred_check
      _
    $region155: #{sentence_vae_forward.1} parent=1 // pred_check_branch
      %3676 = sbr.rel (0) target = $region157
    $region156: #{sentence_vae_forward.1} parent=1 // pred_region
      %3677 = dma.done [#allocation24], 16
    $region157: #{sentence_vae_forward.1} parent=1 // pred_fallthru
      _
    // Predicated region
    $region158: #{sentence_vae_forward.1} parent=1 // pred_check
      _
    $region159: #{sentence_vae_forward.1} parent=1 // pred_check_branch
      %3679 = sbr.rel (0) target = $region161
    $region160: #{sentence_vae_forward.1} parent=1 // pred_region
      %3680 = dma.done [#allocation27], 16
    $region161: #{sentence_vae_forward.1} parent=1 // pred_fallthru
      _
    %3681 = vsyncpa [#allocation3], 1
    %3682 = vsyncpa [#allocation6], 1
    %3683 = vsyncpa [#allocation9], 1
    %3684 = vsyncpa [#allocation12], 1
    %3685 = vsyncpa [#allocation15], 1
    %3686 = vsyncpa [#allocation18], 1
    %3687 = vsyncpa [#allocation21], 1
    %3688 = vsyncpa [#allocation4], 1
    %3689 = vsyncpa [#allocation24], 1
    %3690 = vsyncpa [#allocation27], 1

</llo_original>
